<compile_context>
chip_gen: v5e
topology: v5e:2x2
jax: 0.10.0
libtpu: 0.0.40
codegen_flags: <defaults>
</compile_context>

<pallas_src>
import functools
import numpy as np
import jax
import jax.numpy as jnp
from jax import lax
from jax.experimental import pallas as pl
from jax.experimental.pallas import tpu as pltpu

D = 128                              # embed_dim (hard-coded 128 in reference)
NODE_ORDER = ('P', 'V', 'C', 'A')    # concat order of final_ent_emb (reference)


# --------------------------- in-kernel helpers -------------------------------

def _logsigmoid(x):
    # Numerically safe form: log sigmoid(x) = min(x, 0) - log1p(exp(-|x|)).
    return jnp.minimum(x, 0.0) - jnp.log1p(jnp.exp(-jnp.abs(x)))


def _gru_cell(x, h, g):
    """PyTorch nn.GRUCell, packed gate order [r | z | n]."""
    f32 = jnp.float32
    gi = jnp.dot(x, g['wi'][...], preferred_element_type=f32) + g['bi'][...]
    gh = jnp.dot(h, g['wh'][...], preferred_element_type=f32) + g['bh'][...]
    rg = jax.nn.sigmoid(gi[:, 0:D] + gh[:, 0:D])
    zg = jax.nn.sigmoid(gi[:, D:2 * D] + gh[:, D:2 * D])
    ng = jnp.tanh(gi[:, 2 * D:3 * D] + rg * gh[:, 2 * D:3 * D])
    return (1.0 - zg) * ng + zg * h


def _tcp_step(h_hat, label, adj, wl, bl):
    """softmax -> soft-target CE -> tcp-weighted adjacency propagation.
    logits / pred / tcp never leave vregs."""
    f32 = jnp.float32
    n = h_hat.shape[0]
    logits = jnp.dot(h_hat, wl, preferred_element_type=f32) + bl       # [n,cls]
    m = jnp.max(logits, axis=1, keepdims=True)
    e = jnp.exp(logits - m)
    pred = e / jnp.sum(e, axis=1, keepdims=True)
    # Reference quirk (kept on purpose): CrossEntropyLoss is applied to the
    # *already softmaxed* pred with soft targets, i.e.
    #   -sum(label * log_softmax(pred)) / n.
    # pred is in (0, 1], so this second pass needs no max subtraction.
    lse = jnp.log(jnp.sum(jnp.exp(pred), axis=1, keepdims=True))
    ce = -jnp.sum(label * (pred - lse)) / float(n)
    tcp = jnp.sum(pred * label, axis=1, keepdims=True)                 # [n,1]
    h_next = jnp.dot(adj, tcp * h_hat, preferred_element_type=f32)
    return h_next, ce


def _attend(e0, e1, w2, b2, w3, b3):
    """Two-view attention; reference uses F.leaky_relu(x, 0) == relu."""
    # D->1 projections as VPU multiply + lane reduction (MXU stays free).
    s0 = jnp.maximum(jnp.sum(e0 * w2, axis=1, keepdims=True) + b2, 0.0)  # [n,1]
    s1 = jnp.maximum(jnp.sum(e1 * w3, axis=1, keepdims=True) + b3, 0.0)
    a0 = jnp.exp(s0 - jnp.max(s0, axis=0, keepdims=True))
    a0 = a0 / jnp.sum(a0, axis=0, keepdims=True)      # softmax over node axis
    a1 = jnp.exp(s1 - jnp.max(s1, axis=0, keepdims=True))
    a1 = a1 / jnp.sum(a1, axis=0, keepdims=True)
    return jnp.maximum(a0 * e0 + a1 * e1, 0.0)        # F.relu


# --------------------------- fused forward kernel ----------------------------

def build_fused_kernel(in_names, hts, node_order, node_counts, lambda1):
    """Build the single fused forward kernel.  `in_names` fixes the positional
    order of the input refs; hts / node_order / node_counts / lambda1 are
    trace-time constants."""

    def kernel(*refs):
        assert len(refs) == len(in_names) + 2
        R = dict(zip(in_names, refs[:-2]))
        ent_ref, loss_ref = refs[-2], refs[-1]
        f32 = jnp.float32
        n_total = ent_ref.shape[0]

        feats = {nt: R[f'feat_{nt}'][...] for nt in node_order}

        # ---- linear1: view-0 embedding for every node type ------------------
        w1 = R['w1'][...]
        b1 = R['b1'][...]
        self_emb = {nt: jnp.dot(feats[nt], w1, preferred_element_type=f32) + b1
                    for nt in node_order}

        # ---- metapath chains: (cls-linear + CE + tcp-adj) interleaved w/ GRU -
        loss_tcp = jnp.float32(0.0)
        second_emb = {}            # node type -> first appended GRU state
        for i, htsi in enumerate(hts):
            gru_refs = {k: R[f'gru{i}_{k}'] for k in ('wi', 'bi', 'wh', 'bh')}
            h_prev = None
            for a, nti in enumerate(htsi):
                last = (a == len(htsi) - 1)
                if a == 0:
                    h_hat_a = feats[nti]
                else:
                    if last and nti in second_emb:
                        # Reference computes this GRU state but never reads it
                        # (attention only uses embs[0]/embs[1]) -> skip.
                        break
                    h_hat_a = _gru_cell(feats[nti], h_prev, gru_refs)
                    second_emb.setdefault(nti, h_hat_a)
                    if last:
                        break
                h_prev, ce = _tcp_step(
                    h_hat_a, R[f'label_{nti}'][...], R[f'adj_{i}_{a}'][...],
                    R[f'wl_{i}_{a}'][...], R[f'bl_{i}_{a}'][...])
                loss_tcp = loss_tcp + ce

        assert all(nt in second_emb for nt in node_order)

        # ---- per-node-type attention over the two views ---------------------
        w2 = R['w2'][...]
        b2 = R['b2'][...]
        w3 = R['w3'][...]
        b3 = R['b3'][...]
        final = {nt: _attend(self_emb[nt], second_emb[nt], w2, b2, w3, b3)
                 for nt in node_order}

        # ---- assemble final_ent_emb = concat([P, V, C, A]) ------------------
        # Built as a sum of one-hot "placement" matmuls so the [41,128] output
        # is produced as one value and written with a single lane-dense store
        # (avoids unaligned sublane writes / in-kernel concatenates).
        ent = jnp.zeros((n_total, D), f32)
        off = 0
        for nt in node_order:
            n = node_counts[nt]
            place = (lax.broadcasted_iota(jnp.int32, (n_total, n), 0)
                     == lax.broadcasted_iota(jnp.int32, (n_total, n), 1) + off
                     ).astype(f32)
            ent = ent + jnp.dot(place, final[nt], preferred_element_type=f32)
            off += n
        ent_ref[...] = ent

        # ---- edge scores + losses (gathers as one-hot MXU matmuls) ----------
        n_edges = R['u_i_d'].shape[0]
        ent_iota = lax.broadcasted_iota(jnp.int32, (n_edges, n_total), 1)

        def gather(idx_ref):
            oh = (ent_iota == idx_ref[...]).astype(f32)        # [E, n_total]
            return jnp.dot(oh, ent, preferred_element_type=f32)

        # Destination pair: only e_i + e_j is needed, so fuse the two gathers
        # into ONE matmul by summing the one-hot selectors (a repeated index
        # yields a 2.0 entry, which is still the correct row sum).
        oh_d = ((ent_iota == R['u_i_d'][...]).astype(f32)
                + (ent_iota == R['u_j_d'][...]).astype(f32))
        esum_d = jnp.dot(oh_d, ent, preferred_element_type=f32)   # e_i_d+e_j_d
        ei_s = gather(R['u_i_s'])
        ej_s = gather(R['u_j_s'])

        rel = R['rel'][...]
        rel_iota = lax.broadcasted_iota(jnp.int32, (n_edges, rel.shape[0]), 1)
        m_r = jnp.dot((rel_iota == R['r'][...]).astype(f32), rel,
                      preferred_element_type=f32)              # [E, 128]

        ip_d = jnp.sum(m_r * jnp.tanh(esum_d), axis=1, keepdims=True)
        ip_s = jnp.sum(ei_s * ej_s, axis=1, keepdims=True)
        base_loss = (-jnp.sum(_logsigmoid(R['label_d'][...] * ip_d))
                     - jnp.sum(_logsigmoid(R['label_s'][...] * ip_s)))

        # Reference: loss_emb = base + l2_loss_emb(=0) * l2 + lambda1 * loss_tcp
        loss_ref[0, 0] = base_loss + lambda1 * loss_tcp

    return kernel


# --------------------------- wrapper ------------------------------------------

def kge_forward(features, HTS, adjs_norm, cls_adjs, params, u_si, u_di,
                lambda1=0.5):
    """KGE.forward as a single fused pallas_call."""
    node_order = NODE_ORDER
    node_counts = {nt: int(features[nt].shape[0]) for nt in node_order}
    n_total = sum(node_counts.values())

    u_s = jnp.asarray(u_si, jnp.int32)
    u_d = jnp.asarray(u_di, jnp.int32)

    inputs = {}
    for nt in node_order:
        inputs[f'feat_{nt}'] = features[nt]
    inputs['w1'], inputs['b1'] = params['linear1']
    w2, b2 = params['linear2']
    w3, b3 = params['linear3']
    inputs['w2'], inputs['b2'] = w2.T, b2            # row vector [1,128], [1,1]
    inputs['w3'], inputs['b3'] = w3.T, b3
    for i in range(len(HTS)):
        wi, bi, wh, bh = params['grus'][i]
        inputs[f'gru{i}_wi'] = wi
        inputs[f'gru{i}_bi'] = bi
        inputs[f'gru{i}_wh'] = wh
        inputs[f'gru{i}_bh'] = bh
    for i, htsi in enumerate(HTS):
        for a in range(len(htsi) - 1):               # steps that run a tcp step
            wl, bl = params['linears'][i][a]
            inputs[f'wl_{i}_{a}'] = wl
            inputs[f'bl_{i}_{a}'] = bl
            inputs[f'adj_{i}_{a}'] = adjs_norm[i][a]
            inputs.setdefault(f'label_{htsi[a]}', cls_adjs[htsi[a]])
    inputs['rel'] = params['final_rel_emb']
    inputs['u_i_d'] = u_d[:, 0:1]
    inputs['u_j_d'] = u_d[:, 1:2]
    inputs['label_d'] = u_d[:, 2:3].astype(jnp.float32)
    inputs['r'] = u_d[:, 3:4]
    inputs['u_i_s'] = u_s[:, 0:1]
    inputs['u_j_s'] = u_s[:, 1:2]
    inputs['label_s'] = u_s[:, 2:3].astype(jnp.float32)

    in_names = tuple(inputs.keys())
    args = tuple(inputs[k] for k in in_names)

    kernel = build_fused_kernel(in_names, tuple(tuple(h) for h in HTS),
                                node_order, node_counts, float(lambda1))

    vmem = functools.partial(pl.BlockSpec, memory_space=pltpu.MemorySpace.VMEM)
    smem = functools.partial(pl.BlockSpec, memory_space=pltpu.MemorySpace.SMEM)

    ent_emb, loss = pl.pallas_call(
        kernel,
        out_shape=(jax.ShapeDtypeStruct((n_total, D), jnp.float32),
                   jax.ShapeDtypeStruct((1, 1), jnp.float32)),
        in_specs=[vmem() for _ in args],
        out_specs=(vmem(), smem()),
        compiler_params=pltpu.CompilerParams(
            # real footprint is < 2.5 MiB (GRU weights dominate); leave ample
            # headroom for compiler temporaries while staying far below the
            # 64 MiB (v7x) / 128 MiB (v5e, v6e) physical VMEM.
            vmem_limit_bytes=32 * 1024 * 1024),
    )(*args)

    # NOTE: reference also computes self.l2_loss but never adds it to the
    # returned loss (it uses l2_loss_emb == 0), so it is omitted here.
    return loss[0, 0], ent_emb, params['final_rel_emb']


# --------------------------- data / parameter setup ---------------------------

def cal_matrix(a):
    a = np.asarray(a, dtype=np.float32)
    d = a.sum(axis=1)
    mask = d > 0
    d_masked = np.where(mask, d, 1.0)
    return np.where(mask[:, None], a / d_masked[:, None], a).astype(np.float32)


def build_synthetic_data(key):
    counts = {'P': 16, 'V': 8, 'C': 5, 'A': 12}
    keys = jax.random.split(key, 12)
    features = {
        'P': jax.random.normal(keys[0], (counts['P'], D), jnp.float32),
        'V': jax.random.normal(keys[1], (counts['V'], D), jnp.float32),
        'C': jax.random.normal(keys[2], (counts['C'], D), jnp.float32),
        'A': jax.random.normal(keys[3], (counts['A'], D), jnp.float32),
    }
    HTS = [['P', 'A', 'C'], ['A', 'P', 'V', 'C']]

    def rand_adj(k, rows, cols):
        return np.asarray(jax.random.uniform(k, (rows, cols)) < 0.4,
                          dtype=np.float32)

    raw_adjs = [
        [rand_adj(keys[4], counts['A'], counts['P']),     # [A, P]
         rand_adj(keys[5], counts['C'], counts['A'])],    # [C, A]
        [rand_adj(keys[6], counts['P'], counts['A']),     # [P, A]
         rand_adj(keys[7], counts['V'], counts['P']),     # [V, P]
         rand_adj(keys[8], counts['C'], counts['V'])],    # [C, V]
    ]
    adjs_norm = [[jnp.asarray(cal_matrix(adj)) for adj in si] for si in raw_adjs]

    # cls_adjs built as in KGE.__init__: compose adjacencies along HTS[1] up to
    # the class node type 'C', row-normalize the transpose.  The reference
    # breaks at a == 3 before storing (its a == 3 label is discarded), so we
    # break before indexing to avoid needing a 4th adjacency.
    cls_adjs = {}
    htsi = HTS[1]
    for a, nti in enumerate(htsi):
        if a == 3:
            break
        adjsi = raw_adjs[1][a]
        for i in range(1, len(htsi) - a - 1):
            adjsi = np.matmul(raw_adjs[1][a + i], adjsi)
        cls_adjs[nti] = jnp.asarray(cal_matrix(adjsi.T))
    return features, HTS, adjs_norm, cls_adjs, counts


def init_params(key, cls, n_hts0, n_hts1):
    keys = iter(jax.random.split(key, 64))

    def nk():
        return next(keys)

    def lin(in_dim, out_dim, xavier=False):
        if xavier:          # xavier_normal_ weight, zero bias
            std = float(np.sqrt(2.0 / (in_dim + out_dim)))
            w = std * jax.random.normal(nk(), (out_dim, in_dim), jnp.float32)
            b = jnp.zeros((1, out_dim), jnp.float32)
        else:               # PyTorch default Linear init (uniform)
            bound = float(1.0 / np.sqrt(in_dim))
            w = jax.random.uniform(nk(), (out_dim, in_dim), jnp.float32,
                                   -bound, bound)
            b = jax.random.uniform(nk(), (1, out_dim), jnp.float32,
                                   -bound, bound)
        return w.T, b       # stored as [in, out]

    def gru():
        bound = float(1.0 / np.sqrt(D))
        w_ih = jax.random.uniform(nk(), (3 * D, D), jnp.float32, -bound, bound)
        w_hh = jax.random.uniform(nk(), (3 * D, D), jnp.float32, -bound, bound)
        b_ih = jax.random.uniform(nk(), (1, 3 * D), jnp.float32, -bound, bound)
        b_hh = jax.random.uniform(nk(), (1, 3 * D), jnp.float32, -bound, bound)
        return w_ih.T, b_ih, w_hh.T, b_hh   # gate order [r | z | n]

    # TCPConfidenceLayer exists in the reference __init__ but is never used in
    # forward, so it is not materialized here.
    params = {
        'linear1': lin(D, D),
        'linear2': lin(D, 1),
        'linear3': lin(D, 1),
        'linears': [[lin(D, cls, xavier=True) for _ in range(n_hts0)],
                    [lin(D, cls, xavier=True) for _ in range(n_hts1)]],
        'grus': [gru(), gru()],
        'final_rel_emb': jax.random.normal(nk(), (12, D), jnp.float32),
    }
    return params


# ------------------------------ main ------------------------------------------

if __name__ == "__main__":
    key = jax.random.PRNGKey(0)
    k_data, k_params, k_edges = jax.random.split(key, 3)

    features, HTS, adjs_norm, cls_adjs, counts = build_synthetic_data(k_data)
    cls = counts['C']                 # reference: cls = #C nodes
    params = init_params(k_params, cls, len(HTS[0]), len(HTS[1]))

    total_nodes = sum(counts.values())          # 41
    ks = jax.random.split(k_edges, 8)
    E = 10
    u_di = np.stack([
        np.array(jax.random.randint(ks[0], (E,), 0, total_nodes)),
        np.array(jax.random.randint(ks[1], (E,), 0, total_nodes)),
        np.array(2 * jax.random.randint(ks[2], (E,), 0, 2) - 1),
        np.array(jax.random.randint(ks[3], (E,), 0, 12)),
    ], axis=1).astype(np.int32)
    u_si = np.stack([
        np.array(jax.random.randint(ks[4], (E,), 0, total_nodes)),
        np.array(jax.random.randint(ks[5], (E,), 0, total_nodes)),
        np.array(2 * jax.random.randint(ks[6], (E,), 0, 2) - 1),
    ], axis=1).astype(np.int32)

    loss_emb, final_ent_emb, final_rel_emb = kge_forward(
        features, HTS, adjs_norm, cls_adjs, params, u_si, u_di, lambda1=0.5)
    jax.block_until_ready((loss_emb, final_ent_emb, final_rel_emb))

    assert final_ent_emb.shape == (total_nodes, D)
    assert final_rel_emb.shape == (12, D)
    assert np.isfinite(float(loss_emb))
    print("KERNEL_OK")
</pallas_src>

<mosaic_0001>
module attributes {stable_mosaic.version = 11 : i64} {
  func.func @kernel(%arg0: memref<16x128xf32, #tpu.memory_space<vmem>>, %arg1: memref<8x128xf32, #tpu.memory_space<vmem>>, %arg2: memref<5x128xf32, #tpu.memory_space<vmem>>, %arg3: memref<12x128xf32, #tpu.memory_space<vmem>>, %arg4: memref<128x128xf32, #tpu.memory_space<vmem>>, %arg5: memref<1x128xf32, #tpu.memory_space<vmem>>, %arg6: memref<1x128xf32, #tpu.memory_space<vmem>>, %arg7: memref<1x1xf32, #tpu.memory_space<vmem>>, %arg8: memref<1x128xf32, #tpu.memory_space<vmem>>, %arg9: memref<1x1xf32, #tpu.memory_space<vmem>>, %arg10: memref<128x384xf32, #tpu.memory_space<vmem>>, %arg11: memref<1x384xf32, #tpu.memory_space<vmem>>, %arg12: memref<128x384xf32, #tpu.memory_space<vmem>>, %arg13: memref<1x384xf32, #tpu.memory_space<vmem>>, %arg14: memref<128x384xf32, #tpu.memory_space<vmem>>, %arg15: memref<1x384xf32, #tpu.memory_space<vmem>>, %arg16: memref<128x384xf32, #tpu.memory_space<vmem>>, %arg17: memref<1x384xf32, #tpu.memory_space<vmem>>, %arg18: memref<128x5xf32, #tpu.memory_space<vmem>>, %arg19: memref<1x5xf32, #tpu.memory_space<vmem>>, %arg20: memref<12x16xf32, #tpu.memory_space<vmem>>, %arg21: memref<16x5xf32, #tpu.memory_space<vmem>>, %arg22: memref<128x5xf32, #tpu.memory_space<vmem>>, %arg23: memref<1x5xf32, #tpu.memory_space<vmem>>, %arg24: memref<5x12xf32, #tpu.memory_space<vmem>>, %arg25: memref<12x5xf32, #tpu.memory_space<vmem>>, %arg26: memref<128x5xf32, #tpu.memory_space<vmem>>, %arg27: memref<1x5xf32, #tpu.memory_space<vmem>>, %arg28: memref<16x12xf32, #tpu.memory_space<vmem>>, %arg29: memref<128x5xf32, #tpu.memory_space<vmem>>, %arg30: memref<1x5xf32, #tpu.memory_space<vmem>>, %arg31: memref<8x16xf32, #tpu.memory_space<vmem>>, %arg32: memref<128x5xf32, #tpu.memory_space<vmem>>, %arg33: memref<1x5xf32, #tpu.memory_space<vmem>>, %arg34: memref<5x8xf32, #tpu.memory_space<vmem>>, %arg35: memref<8x5xf32, #tpu.memory_space<vmem>>, %arg36: memref<12x128xf32, #tpu.memory_space<vmem>>, %arg37: memref<10x1xi32, #tpu.memory_space<vmem>>, %arg38: memref<10x1xi32, #tpu.memory_space<vmem>>, %arg39: memref<10x1xf32, #tpu.memory_space<vmem>>, %arg40: memref<10x1xi32, #tpu.memory_space<vmem>>, %arg41: memref<10x1xi32, #tpu.memory_space<vmem>>, %arg42: memref<10x1xi32, #tpu.memory_space<vmem>>, %arg43: memref<10x1xf32, #tpu.memory_space<vmem>>, %arg44: memref<41x128xf32, #tpu.memory_space<vmem>>, %arg45: memref<1x1xf32, #tpu.memory_space<smem>>) attributes {dimension_semantics = [], scalar_prefetch = 0 : i64, scratch_operands = 0 : i64, tpu.core_type = #tpu.core_type<tc>} {
    %c0 = arith.constant 0 : index
    %c0_0 = arith.constant 0 : index
    %0 = vector.load %arg0[%c0, %c0_0] : memref<16x128xf32, #tpu.memory_space<vmem>>, vector<16x128xf32>
    %c0_1 = arith.constant 0 : index
    %c0_2 = arith.constant 0 : index
    %1 = vector.load %arg1[%c0_1, %c0_2] : memref<8x128xf32, #tpu.memory_space<vmem>>, vector<8x128xf32>
    %c0_3 = arith.constant 0 : index
    %c0_4 = arith.constant 0 : index
    %2 = vector.load %arg2[%c0_3, %c0_4] : memref<5x128xf32, #tpu.memory_space<vmem>>, vector<5x128xf32>
    %c0_5 = arith.constant 0 : index
    %c0_6 = arith.constant 0 : index
    %3 = vector.load %arg3[%c0_5, %c0_6] : memref<12x128xf32, #tpu.memory_space<vmem>>, vector<12x128xf32>
    %c0_7 = arith.constant 0 : index
    %c0_8 = arith.constant 0 : index
    %4 = vector.load %arg4[%c0_7, %c0_8] : memref<128x128xf32, #tpu.memory_space<vmem>>, vector<128x128xf32>
    %c0_9 = arith.constant 0 : index
    %c0_10 = arith.constant 0 : index
    %5 = vector.load %arg5[%c0_9, %c0_10] : memref<1x128xf32, #tpu.memory_space<vmem>>, vector<1x128xf32>
    %cst = arith.constant dense<0.000000e+00> : vector<16x128xf32>
    %6 = tpu.matmul %0, %4, %cst {dimension_numbers = #tpu.dot_dimension_numbers<[1], [0], [0], [1], [0, 0, 1, 1], [], []>} : vector<16x128xf32>, vector<128x128xf32>, vector<16x128xf32> -> vector<16x128xf32>
    %7 = vector.broadcast %5 : vector<1x128xf32> to vector<16x128xf32>
    %8 = arith.addf %6, %7 : vector<16x128xf32>
    %cst_11 = arith.constant dense<0.000000e+00> : vector<8x128xf32>
    %9 = tpu.matmul %1, %4, %cst_11 {dimension_numbers = #tpu.dot_dimension_numbers<[1], [0], [0], [1], [0, 0, 1, 1], [], []>} : vector<8x128xf32>, vector<128x128xf32>, vector<8x128xf32> -> vector<8x128xf32>
    %10 = vector.broadcast %5 : vector<1x128xf32> to vector<8x128xf32>
    %11 = arith.addf %9, %10 : vector<8x128xf32>
    %cst_12 = arith.constant dense<0.000000e+00> : vector<5x128xf32>
    %12 = tpu.matmul %2, %4, %cst_12 {dimension_numbers = #tpu.dot_dimension_numbers<[1], [0], [0], [1], [0, 0, 1, 1], [], []>} : vector<5x128xf32>, vector<128x128xf32>, vector<5x128xf32> -> vector<5x128xf32>
    %13 = vector.broadcast %5 : vector<1x128xf32> to vector<5x128xf32>
    %14 = arith.addf %12, %13 : vector<5x128xf32>
    %cst_13 = arith.constant dense<0.000000e+00> : vector<12x128xf32>
    %15 = tpu.matmul %3, %4, %cst_13 {dimension_numbers = #tpu.dot_dimension_numbers<[1], [0], [0], [1], [0, 0, 1, 1], [], []>} : vector<12x128xf32>, vector<128x128xf32>, vector<12x128xf32> -> vector<12x128xf32>
    %16 = vector.broadcast %5 : vector<1x128xf32> to vector<12x128xf32>
    %17 = arith.addf %15, %16 : vector<12x128xf32>
    %c0_14 = arith.constant 0 : index
    %c0_15 = arith.constant 0 : index
    %18 = vector.load %arg21[%c0_14, %c0_15] : memref<16x5xf32, #tpu.memory_space<vmem>>, vector<16x5xf32>
    %c0_16 = arith.constant 0 : index
    %c0_17 = arith.constant 0 : index
    %19 = vector.load %arg20[%c0_16, %c0_17] : memref<12x16xf32, #tpu.memory_space<vmem>>, vector<12x16xf32>
    %c0_18 = arith.constant 0 : index
    %c0_19 = arith.constant 0 : index
    %20 = vector.load %arg18[%c0_18, %c0_19] : memref<128x5xf32, #tpu.memory_space<vmem>>, vector<128x5xf32>
    %c0_20 = arith.constant 0 : index
    %c0_21 = arith.constant 0 : index
    %21 = vector.load %arg19[%c0_20, %c0_21] : memref<1x5xf32, #tpu.memory_space<vmem>>, vector<1x5xf32>
    %cst_22 = arith.constant dense<0.000000e+00> : vector<16x5xf32>
    %22 = tpu.matmul %0, %20, %cst_22 {dimension_numbers = #tpu.dot_dimension_numbers<[1], [0], [0], [1], [0, 0, 1, 1], [], []>} : vector<16x128xf32>, vector<128x5xf32>, vector<16x5xf32> -> vector<16x5xf32>
    %23 = vector.broadcast %21 : vector<1x5xf32> to vector<16x5xf32>
    %24 = arith.addf %22, %23 : vector<16x5xf32>
    %cst_23 = arith.constant dense<0xFF800000> : vector<16xf32>
    %25 = vector.multi_reduction <maximumf>, %24, %cst_23 [1] : vector<16x5xf32> to vector<16xf32>
    %26 = vector.shape_cast %25 : vector<16xf32> to vector<16x1xf32>
    %27 = vector.broadcast %26 : vector<16x1xf32> to vector<16x5xf32>
    %28 = arith.subf %24, %27 : vector<16x5xf32>
    %29 = math.exp %28 : vector<16x5xf32>
    %cst_24 = arith.constant dense<0.000000e+00> : vector<16xf32>
    %30 = vector.multi_reduction <add>, %29, %cst_24 [1] : vector<16x5xf32> to vector<16xf32>
    %31 = vector.shape_cast %30 : vector<16xf32> to vector<16x1xf32>
    %32 = vector.broadcast %31 : vector<16x1xf32> to vector<16x5xf32>
    %33 = arith.divf %29, %32 : vector<16x5xf32>
    %34 = math.exp %33 : vector<16x5xf32>
    %cst_25 = arith.constant dense<0.000000e+00> : vector<16xf32>
    %35 = vector.multi_reduction <add>, %34, %cst_25 [1] : vector<16x5xf32> to vector<16xf32>
    %36 = vector.shape_cast %35 : vector<16xf32> to vector<16x1xf32>
    %37 = math.log %36 : vector<16x1xf32>
    %38 = vector.broadcast %37 : vector<16x1xf32> to vector<16x5xf32>
    %39 = arith.subf %33, %38 : vector<16x5xf32>
    %40 = arith.mulf %18, %39 : vector<16x5xf32>
    %41 = vector.shape_cast %40 : vector<16x5xf32> to vector<1x16x5xf32>
    %cst_26 = arith.constant dense<0.000000e+00> : vector<1xf32>
    %42 = vector.multi_reduction <add>, %41, %cst_26 [1, 2] : vector<1x16x5xf32> to vector<1xf32>
    %43 = vector.shape_cast %42 : vector<1xf32> to vector<1x1x1xf32>
    %44 = vector.extract %43[0, 0, 0] : f32 from vector<1x1x1xf32>
    %cst_27 = arith.constant 0.000000e+00 : f32
    %45 = arith.subf %cst_27, %44 : f32
    %cst_28 = arith.constant 1.600000e+01 : f32
    %46 = arith.divf %45, %cst_28 : f32
    %47 = arith.mulf %33, %18 : vector<16x5xf32>
    %cst_29 = arith.constant dense<0.000000e+00> : vector<16xf32>
    %48 = vector.multi_reduction <add>, %47, %cst_29 [1] : vector<16x5xf32> to vector<16xf32>
    %49 = vector.shape_cast %48 : vector<16xf32> to vector<16x1xf32>
    %50 = vector.broadcast %49 : vector<16x1xf32> to vector<16x128xf32>
    %51 = arith.mulf %50, %0 : vector<16x128xf32>
    %cst_30 = arith.constant dense<0.000000e+00> : vector<12x128xf32>
    %52 = tpu.matmul %19, %51, %cst_30 {dimension_numbers = #tpu.dot_dimension_numbers<[1], [0], [0], [1], [0, 0, 1, 1], [], []>} : vector<12x16xf32>, vector<16x128xf32>, vector<12x128xf32> -> vector<12x128xf32>
    %cst_31 = arith.constant 0.000000e+00 : f32
    %53 = arith.addf %cst_31, %46 : f32
    %c0_32 = arith.constant 0 : index
    %c0_33 = arith.constant 0 : index
    %54 = vector.load %arg10[%c0_32, %c0_33] : memref<128x384xf32, #tpu.memory_space<vmem>>, vector<128x384xf32>
    %cst_34 = arith.constant dense<0.000000e+00> : vector<12x384xf32>
    %55 = tpu.matmul %3, %54, %cst_34 {dimension_numbers = #tpu.dot_dimension_numbers<[1], [0], [0], [1], [0, 0, 1, 1], [], []>} : vector<12x128xf32>, vector<128x384xf32>, vector<12x384xf32> -> vector<12x384xf32>
    %c0_35 = arith.constant 0 : index
    %c0_36 = arith.constant 0 : index
    %56 = vector.load %arg11[%c0_35, %c0_36] : memref<1x384xf32, #tpu.memory_space<vmem>>, vector<1x384xf32>
    %57 = vector.broadcast %56 : vector<1x384xf32> to vector<12x384xf32>
    %58 = arith.addf %55, %57 : vector<12x384xf32>
    %c0_37 = arith.constant 0 : index
    %c0_38 = arith.constant 0 : index
    %59 = vector.load %arg12[%c0_37, %c0_38] : memref<128x384xf32, #tpu.memory_space<vmem>>, vector<128x384xf32>
    %cst_39 = arith.constant dense<0.000000e+00> : vector<12x384xf32>
    %60 = tpu.matmul %52, %59, %cst_39 {dimension_numbers = #tpu.dot_dimension_numbers<[1], [0], [0], [1], [0, 0, 1, 1], [], []>} : vector<12x128xf32>, vector<128x384xf32>, vector<12x384xf32> -> vector<12x384xf32>
    %c0_40 = arith.constant 0 : index
    %c0_41 = arith.constant 0 : index
    %61 = vector.load %arg13[%c0_40, %c0_41] : memref<1x384xf32, #tpu.memory_space<vmem>>, vector<1x384xf32>
    %62 = vector.broadcast %61 : vector<1x384xf32> to vector<12x384xf32>
    %63 = arith.addf %60, %62 : vector<12x384xf32>
    %64 = vector.extract_strided_slice %58 {offsets = [0, 0], sizes = [12, 128], strides = [1, 1]} : vector<12x384xf32> to vector<12x128xf32>
    %65 = vector.extract_strided_slice %63 {offsets = [0, 0], sizes = [12, 128], strides = [1, 1]} : vector<12x384xf32> to vector<12x128xf32>
    %66 = arith.addf %64, %65 : vector<12x128xf32>
    %67 = arith.negf %66 : vector<12x128xf32>
    %68 = math.exp %67 : vector<12x128xf32>
    %cst_42 = arith.constant 1.000000e+00 : f32
    %69 = vector.broadcast %cst_42 : f32 to vector<12x128xf32>
    %70 = arith.addf %69, %68 : vector<12x128xf32>
    %71 = arith.divf %69, %70 : vector<12x128xf32>
    %72 = vector.extract_strided_slice %58 {offsets = [0, 128], sizes = [12, 128], strides = [1, 1]} : vector<12x384xf32> to vector<12x128xf32>
    %73 = vector.extract_strided_slice %63 {offsets = [0, 128], sizes = [12, 128], strides = [1, 1]} : vector<12x384xf32> to vector<12x128xf32>
    %74 = arith.addf %72, %73 : vector<12x128xf32>
    %75 = arith.negf %74 : vector<12x128xf32>
    %76 = math.exp %75 : vector<12x128xf32>
    %cst_43 = arith.constant 1.000000e+00 : f32
    %77 = vector.broadcast %cst_43 : f32 to vector<12x128xf32>
    %78 = arith.addf %77, %76 : vector<12x128xf32>
    %79 = arith.divf %77, %78 : vector<12x128xf32>
    %80 = vector.extract_strided_slice %58 {offsets = [0, 256], sizes = [12, 128], strides = [1, 1]} : vector<12x384xf32> to vector<12x128xf32>
    %81 = vector.extract_strided_slice %63 {offsets = [0, 256], sizes = [12, 128], strides = [1, 1]} : vector<12x384xf32> to vector<12x128xf32>
    %82 = arith.mulf %71, %81 : vector<12x128xf32>
    %83 = arith.addf %80, %82 : vector<12x128xf32>
    %84 = math.tanh %83 : vector<12x128xf32>
    %cst_44 = arith.constant 1.000000e+00 : f32
    %85 = vector.broadcast %cst_44 : f32 to vector<12x128xf32>
    %86 = arith.subf %85, %79 : vector<12x128xf32>
    %87 = arith.mulf %86, %84 : vector<12x128xf32>
    %88 = arith.mulf %79, %52 : vector<12x128xf32>
    %89 = arith.addf %87, %88 : vector<12x128xf32>
    %c0_45 = arith.constant 0 : index
    %c0_46 = arith.constant 0 : index
    %90 = vector.load %arg25[%c0_45, %c0_46] : memref<12x5xf32, #tpu.memory_space<vmem>>, vector<12x5xf32>
    %c0_47 = arith.constant 0 : index
    %c0_48 = arith.constant 0 : index
    %91 = vector.load %arg24[%c0_47, %c0_48] : memref<5x12xf32, #tpu.memory_space<vmem>>, vector<5x12xf32>
    %c0_49 = arith.constant 0 : index
    %c0_50 = arith.constant 0 : index
    %92 = vector.load %arg22[%c0_49, %c0_50] : memref<128x5xf32, #tpu.memory_space<vmem>>, vector<128x5xf32>
    %c0_51 = arith.constant 0 : index
    %c0_52 = arith.constant 0 : index
    %93 = vector.load %arg23[%c0_51, %c0_52] : memref<1x5xf32, #tpu.memory_space<vmem>>, vector<1x5xf32>
    %cst_53 = arith.constant dense<0.000000e+00> : vector<12x5xf32>
    %94 = tpu.matmul %89, %92, %cst_53 {dimension_numbers = #tpu.dot_dimension_numbers<[1], [0], [0], [1], [0, 0, 1, 1], [], []>} : vector<12x128xf32>, vector<128x5xf32>, vector<12x5xf32> -> vector<12x5xf32>
    %95 = vector.broadcast %93 : vector<1x5xf32> to vector<12x5xf32>
    %96 = arith.addf %94, %95 : vector<12x5xf32>
    %cst_54 = arith.constant dense<0xFF800000> : vector<12xf32>
    %97 = vector.multi_reduction <maximumf>, %96, %cst_54 [1] : vector<12x5xf32> to vector<12xf32>
    %98 = vector.shape_cast %97 : vector<12xf32> to vector<12x1xf32>
    %99 = vector.broadcast %98 : vector<12x1xf32> to vector<12x5xf32>
    %100 = arith.subf %96, %99 : vector<12x5xf32>
    %101 = math.exp %100 : vector<12x5xf32>
    %cst_55 = arith.constant dense<0.000000e+00> : vector<12xf32>
    %102 = vector.multi_reduction <add>, %101, %cst_55 [1] : vector<12x5xf32> to vector<12xf32>
    %103 = vector.shape_cast %102 : vector<12xf32> to vector<12x1xf32>
    %104 = vector.broadcast %103 : vector<12x1xf32> to vector<12x5xf32>
    %105 = arith.divf %101, %104 : vector<12x5xf32>
    %106 = math.exp %105 : vector<12x5xf32>
    %cst_56 = arith.constant dense<0.000000e+00> : vector<12xf32>
    %107 = vector.multi_reduction <add>, %106, %cst_56 [1] : vector<12x5xf32> to vector<12xf32>
    %108 = vector.shape_cast %107 : vector<12xf32> to vector<12x1xf32>
    %109 = math.log %108 : vector<12x1xf32>
    %110 = vector.broadcast %109 : vector<12x1xf32> to vector<12x5xf32>
    %111 = arith.subf %105, %110 : vector<12x5xf32>
    %112 = arith.mulf %90, %111 : vector<12x5xf32>
    %113 = vector.shape_cast %112 : vector<12x5xf32> to vector<1x12x5xf32>
    %cst_57 = arith.constant dense<0.000000e+00> : vector<1xf32>
    %114 = vector.multi_reduction <add>, %113, %cst_57 [1, 2] : vector<1x12x5xf32> to vector<1xf32>
    %115 = vector.shape_cast %114 : vector<1xf32> to vector<1x1x1xf32>
    %116 = vector.extract %115[0, 0, 0] : f32 from vector<1x1x1xf32>
    %cst_58 = arith.constant 0.000000e+00 : f32
    %117 = arith.subf %cst_58, %116 : f32
    %cst_59 = arith.constant 1.200000e+01 : f32
    %118 = arith.divf %117, %cst_59 : f32
    %119 = arith.mulf %105, %90 : vector<12x5xf32>
    %cst_60 = arith.constant dense<0.000000e+00> : vector<12xf32>
    %120 = vector.multi_reduction <add>, %119, %cst_60 [1] : vector<12x5xf32> to vector<12xf32>
    %121 = vector.shape_cast %120 : vector<12xf32> to vector<12x1xf32>
    %122 = vector.broadcast %121 : vector<12x1xf32> to vector<12x128xf32>
    %123 = arith.mulf %122, %89 : vector<12x128xf32>
    %cst_61 = arith.constant dense<0.000000e+00> : vector<5x128xf32>
    %124 = tpu.matmul %91, %123, %cst_61 {dimension_numbers = #tpu.dot_dimension_numbers<[1], [0], [0], [1], [0, 0, 1, 1], [], []>} : vector<5x12xf32>, vector<12x128xf32>, vector<5x128xf32> -> vector<5x128xf32>
    %125 = arith.addf %53, %118 : f32
    %c0_62 = arith.constant 0 : index
    %c0_63 = arith.constant 0 : index
    %126 = vector.load %arg10[%c0_62, %c0_63] : memref<128x384xf32, #tpu.memory_space<vmem>>, vector<128x384xf32>
    %cst_64 = arith.constant dense<0.000000e+00> : vector<5x384xf32>
    %127 = tpu.matmul %2, %126, %cst_64 {dimension_numbers = #tpu.dot_dimension_numbers<[1], [0], [0], [1], [0, 0, 1, 1], [], []>} : vector<5x128xf32>, vector<128x384xf32>, vector<5x384xf32> -> vector<5x384xf32>
    %c0_65 = arith.constant 0 : index
    %c0_66 = arith.constant 0 : index
    %128 = vector.load %arg11[%c0_65, %c0_66] : memref<1x384xf32, #tpu.memory_space<vmem>>, vector<1x384xf32>
    %129 = vector.broadcast %128 : vector<1x384xf32> to vector<5x384xf32>
    %130 = arith.addf %127, %129 : vector<5x384xf32>
    %c0_67 = arith.constant 0 : index
    %c0_68 = arith.constant 0 : index
    %131 = vector.load %arg12[%c0_67, %c0_68] : memref<128x384xf32, #tpu.memory_space<vmem>>, vector<128x384xf32>
    %cst_69 = arith.constant dense<0.000000e+00> : vector<5x384xf32>
    %132 = tpu.matmul %124, %131, %cst_69 {dimension_numbers = #tpu.dot_dimension_numbers<[1], [0], [0], [1], [0, 0, 1, 1], [], []>} : vector<5x128xf32>, vector<128x384xf32>, vector<5x384xf32> -> vector<5x384xf32>
    %c0_70 = arith.constant 0 : index
    %c0_71 = arith.constant 0 : index
    %133 = vector.load %arg13[%c0_70, %c0_71] : memref<1x384xf32, #tpu.memory_space<vmem>>, vector<1x384xf32>
    %134 = vector.broadcast %133 : vector<1x384xf32> to vector<5x384xf32>
    %135 = arith.addf %132, %134 : vector<5x384xf32>
    %136 = vector.extract_strided_slice %130 {offsets = [0, 0], sizes = [5, 128], strides = [1, 1]} : vector<5x384xf32> to vector<5x128xf32>
    %137 = vector.extract_strided_slice %135 {offsets = [0, 0], sizes = [5, 128], strides = [1, 1]} : vector<5x384xf32> to vector<5x128xf32>
    %138 = arith.addf %136, %137 : vector<5x128xf32>
    %139 = arith.negf %138 : vector<5x128xf32>
    %140 = math.exp %139 : vector<5x128xf32>
    %cst_72 = arith.constant 1.000000e+00 : f32
    %141 = vector.broadcast %cst_72 : f32 to vector<5x128xf32>
    %142 = arith.addf %141, %140 : vector<5x128xf32>
    %143 = arith.divf %141, %142 : vector<5x128xf32>
    %144 = vector.extract_strided_slice %130 {offsets = [0, 128], sizes = [5, 128], strides = [1, 1]} : vector<5x384xf32> to vector<5x128xf32>
    %145 = vector.extract_strided_slice %135 {offsets = [0, 128], sizes = [5, 128], strides = [1, 1]} : vector<5x384xf32> to vector<5x128xf32>
    %146 = arith.addf %144, %145 : vector<5x128xf32>
    %147 = arith.negf %146 : vector<5x128xf32>
    %148 = math.exp %147 : vector<5x128xf32>
    %cst_73 = arith.constant 1.000000e+00 : f32
    %149 = vector.broadcast %cst_73 : f32 to vector<5x128xf32>
    %150 = arith.addf %149, %148 : vector<5x128xf32>
    %151 = arith.divf %149, %150 : vector<5x128xf32>
    %152 = vector.extract_strided_slice %130 {offsets = [0, 256], sizes = [5, 128], strides = [1, 1]} : vector<5x384xf32> to vector<5x128xf32>
    %153 = vector.extract_strided_slice %135 {offsets = [0, 256], sizes = [5, 128], strides = [1, 1]} : vector<5x384xf32> to vector<5x128xf32>
    %154 = arith.mulf %143, %153 : vector<5x128xf32>
    %155 = arith.addf %152, %154 : vector<5x128xf32>
    %156 = math.tanh %155 : vector<5x128xf32>
    %cst_74 = arith.constant 1.000000e+00 : f32
    %157 = vector.broadcast %cst_74 : f32 to vector<5x128xf32>
    %158 = arith.subf %157, %151 : vector<5x128xf32>
    %159 = arith.mulf %158, %156 : vector<5x128xf32>
    %160 = arith.mulf %151, %124 : vector<5x128xf32>
    %161 = arith.addf %159, %160 : vector<5x128xf32>
    %c0_75 = arith.constant 0 : index
    %c0_76 = arith.constant 0 : index
    %162 = vector.load %arg25[%c0_75, %c0_76] : memref<12x5xf32, #tpu.memory_space<vmem>>, vector<12x5xf32>
    %c0_77 = arith.constant 0 : index
    %c0_78 = arith.constant 0 : index
    %163 = vector.load %arg28[%c0_77, %c0_78] : memref<16x12xf32, #tpu.memory_space<vmem>>, vector<16x12xf32>
    %c0_79 = arith.constant 0 : index
    %c0_80 = arith.constant 0 : index
    %164 = vector.load %arg26[%c0_79, %c0_80] : memref<128x5xf32, #tpu.memory_space<vmem>>, vector<128x5xf32>
    %c0_81 = arith.constant 0 : index
    %c0_82 = arith.constant 0 : index
    %165 = vector.load %arg27[%c0_81, %c0_82] : memref<1x5xf32, #tpu.memory_space<vmem>>, vector<1x5xf32>
    %cst_83 = arith.constant dense<0.000000e+00> : vector<12x5xf32>
    %166 = tpu.matmul %3, %164, %cst_83 {dimension_numbers = #tpu.dot_dimension_numbers<[1], [0], [0], [1], [0, 0, 1, 1], [], []>} : vector<12x128xf32>, vector<128x5xf32>, vector<12x5xf32> -> vector<12x5xf32>
    %167 = vector.broadcast %165 : vector<1x5xf32> to vector<12x5xf32>
    %168 = arith.addf %166, %167 : vector<12x5xf32>
    %cst_84 = arith.constant dense<0xFF800000> : vector<12xf32>
    %169 = vector.multi_reduction <maximumf>, %168, %cst_84 [1] : vector<12x5xf32> to vector<12xf32>
    %170 = vector.shape_cast %169 : vector<12xf32> to vector<12x1xf32>
    %171 = vector.broadcast %170 : vector<12x1xf32> to vector<12x5xf32>
    %172 = arith.subf %168, %171 : vector<12x5xf32>
    %173 = math.exp %172 : vector<12x5xf32>
    %cst_85 = arith.constant dense<0.000000e+00> : vector<12xf32>
    %174 = vector.multi_reduction <add>, %173, %cst_85 [1] : vector<12x5xf32> to vector<12xf32>
    %175 = vector.shape_cast %174 : vector<12xf32> to vector<12x1xf32>
    %176 = vector.broadcast %175 : vector<12x1xf32> to vector<12x5xf32>
    %177 = arith.divf %173, %176 : vector<12x5xf32>
    %178 = math.exp %177 : vector<12x5xf32>
    %cst_86 = arith.constant dense<0.000000e+00> : vector<12xf32>
    %179 = vector.multi_reduction <add>, %178, %cst_86 [1] : vector<12x5xf32> to vector<12xf32>
    %180 = vector.shape_cast %179 : vector<12xf32> to vector<12x1xf32>
    %181 = math.log %180 : vector<12x1xf32>
    %182 = vector.broadcast %181 : vector<12x1xf32> to vector<12x5xf32>
    %183 = arith.subf %177, %182 : vector<12x5xf32>
    %184 = arith.mulf %162, %183 : vector<12x5xf32>
    %185 = vector.shape_cast %184 : vector<12x5xf32> to vector<1x12x5xf32>
    %cst_87 = arith.constant dense<0.000000e+00> : vector<1xf32>
    %186 = vector.multi_reduction <add>, %185, %cst_87 [1, 2] : vector<1x12x5xf32> to vector<1xf32>
    %187 = vector.shape_cast %186 : vector<1xf32> to vector<1x1x1xf32>
    %188 = vector.extract %187[0, 0, 0] : f32 from vector<1x1x1xf32>
    %cst_88 = arith.constant 0.000000e+00 : f32
    %189 = arith.subf %cst_88, %188 : f32
    %cst_89 = arith.constant 1.200000e+01 : f32
    %190 = arith.divf %189, %cst_89 : f32
    %191 = arith.mulf %177, %162 : vector<12x5xf32>
    %cst_90 = arith.constant dense<0.000000e+00> : vector<12xf32>
    %192 = vector.multi_reduction <add>, %191, %cst_90 [1] : vector<12x5xf32> to vector<12xf32>
    %193 = vector.shape_cast %192 : vector<12xf32> to vector<12x1xf32>
    %194 = vector.broadcast %193 : vector<12x1xf32> to vector<12x128xf32>
    %195 = arith.mulf %194, %3 : vector<12x128xf32>
    %cst_91 = arith.constant dense<0.000000e+00> : vector<16x128xf32>
    %196 = tpu.matmul %163, %195, %cst_91 {dimension_numbers = #tpu.dot_dimension_numbers<[1], [0], [0], [1], [0, 0, 1, 1], [], []>} : vector<16x12xf32>, vector<12x128xf32>, vector<16x128xf32> -> vector<16x128xf32>
    %197 = arith.addf %125, %190 : f32
    %c0_92 = arith.constant 0 : index
    %c0_93 = arith.constant 0 : index
    %198 = vector.load %arg14[%c0_92, %c0_93] : memref<128x384xf32, #tpu.memory_space<vmem>>, vector<128x384xf32>
    %cst_94 = arith.constant dense<0.000000e+00> : vector<16x384xf32>
    %199 = tpu.matmul %0, %198, %cst_94 {dimension_numbers = #tpu.dot_dimension_numbers<[1], [0], [0], [1], [0, 0, 1, 1], [], []>} : vector<16x128xf32>, vector<128x384xf32>, vector<16x384xf32> -> vector<16x384xf32>
    %c0_95 = arith.constant 0 : index
    %c0_96 = arith.constant 0 : index
    %200 = vector.load %arg15[%c0_95, %c0_96] : memref<1x384xf32, #tpu.memory_space<vmem>>, vector<1x384xf32>
    %201 = vector.broadcast %200 : vector<1x384xf32> to vector<16x384xf32>
    %202 = arith.addf %199, %201 : vector<16x384xf32>
    %c0_97 = arith.constant 0 : index
    %c0_98 = arith.constant 0 : index
    %203 = vector.load %arg16[%c0_97, %c0_98] : memref<128x384xf32, #tpu.memory_space<vmem>>, vector<128x384xf32>
    %cst_99 = arith.constant dense<0.000000e+00> : vector<16x384xf32>
    %204 = tpu.matmul %196, %203, %cst_99 {dimension_numbers = #tpu.dot_dimension_numbers<[1], [0], [0], [1], [0, 0, 1, 1], [], []>} : vector<16x128xf32>, vector<128x384xf32>, vector<16x384xf32> -> vector<16x384xf32>
    %c0_100 = arith.constant 0 : index
    %c0_101 = arith.constant 0 : index
    %205 = vector.load %arg17[%c0_100, %c0_101] : memref<1x384xf32, #tpu.memory_space<vmem>>, vector<1x384xf32>
    %206 = vector.broadcast %205 : vector<1x384xf32> to vector<16x384xf32>
    %207 = arith.addf %204, %206 : vector<16x384xf32>
    %208 = vector.extract_strided_slice %202 {offsets = [0, 0], sizes = [16, 128], strides = [1, 1]} : vector<16x384xf32> to vector<16x128xf32>
    %209 = vector.extract_strided_slice %207 {offsets = [0, 0], sizes = [16, 128], strides = [1, 1]} : vector<16x384xf32> to vector<16x128xf32>
    %210 = arith.addf %208, %209 : vector<16x128xf32>
    %211 = arith.negf %210 : vector<16x128xf32>
    %212 = math.exp %211 : vector<16x128xf32>
    %cst_102 = arith.constant 1.000000e+00 : f32
    %213 = vector.broadcast %cst_102 : f32 to vector<16x128xf32>
    %214 = arith.addf %213, %212 : vector<16x128xf32>
    %215 = arith.divf %213, %214 : vector<16x128xf32>
    %216 = vector.extract_strided_slice %202 {offsets = [0, 128], sizes = [16, 128], strides = [1, 1]} : vector<16x384xf32> to vector<16x128xf32>
    %217 = vector.extract_strided_slice %207 {offsets = [0, 128], sizes = [16, 128], strides = [1, 1]} : vector<16x384xf32> to vector<16x128xf32>
    %218 = arith.addf %216, %217 : vector<16x128xf32>
    %219 = arith.negf %218 : vector<16x128xf32>
    %220 = math.exp %219 : vector<16x128xf32>
    %cst_103 = arith.constant 1.000000e+00 : f32
    %221 = vector.broadcast %cst_103 : f32 to vector<16x128xf32>
    %222 = arith.addf %221, %220 : vector<16x128xf32>
    %223 = arith.divf %221, %222 : vector<16x128xf32>
    %224 = vector.extract_strided_slice %202 {offsets = [0, 256], sizes = [16, 128], strides = [1, 1]} : vector<16x384xf32> to vector<16x128xf32>
    %225 = vector.extract_strided_slice %207 {offsets = [0, 256], sizes = [16, 128], strides = [1, 1]} : vector<16x384xf32> to vector<16x128xf32>
    %226 = arith.mulf %215, %225 : vector<16x128xf32>
    %227 = arith.addf %224, %226 : vector<16x128xf32>
    %228 = math.tanh %227 : vector<16x128xf32>
    %cst_104 = arith.constant 1.000000e+00 : f32
    %229 = vector.broadcast %cst_104 : f32 to vector<16x128xf32>
    %230 = arith.subf %229, %223 : vector<16x128xf32>
    %231 = arith.mulf %230, %228 : vector<16x128xf32>
    %232 = arith.mulf %223, %196 : vector<16x128xf32>
    %233 = arith.addf %231, %232 : vector<16x128xf32>
    %c0_105 = arith.constant 0 : index
    %c0_106 = arith.constant 0 : index
    %234 = vector.load %arg21[%c0_105, %c0_106] : memref<16x5xf32, #tpu.memory_space<vmem>>, vector<16x5xf32>
    %c0_107 = arith.constant 0 : index
    %c0_108 = arith.constant 0 : index
    %235 = vector.load %arg31[%c0_107, %c0_108] : memref<8x16xf32, #tpu.memory_space<vmem>>, vector<8x16xf32>
    %c0_109 = arith.constant 0 : index
    %c0_110 = arith.constant 0 : index
    %236 = vector.load %arg29[%c0_109, %c0_110] : memref<128x5xf32, #tpu.memory_space<vmem>>, vector<128x5xf32>
    %c0_111 = arith.constant 0 : index
    %c0_112 = arith.constant 0 : index
    %237 = vector.load %arg30[%c0_111, %c0_112] : memref<1x5xf32, #tpu.memory_space<vmem>>, vector<1x5xf32>
    %cst_113 = arith.constant dense<0.000000e+00> : vector<16x5xf32>
    %238 = tpu.matmul %233, %236, %cst_113 {dimension_numbers = #tpu.dot_dimension_numbers<[1], [0], [0], [1], [0, 0, 1, 1], [], []>} : vector<16x128xf32>, vector<128x5xf32>, vector<16x5xf32> -> vector<16x5xf32>
    %239 = vector.broadcast %237 : vector<1x5xf32> to vector<16x5xf32>
    %240 = arith.addf %238, %239 : vector<16x5xf32>
    %cst_114 = arith.constant dense<0xFF800000> : vector<16xf32>
    %241 = vector.multi_reduction <maximumf>, %240, %cst_114 [1] : vector<16x5xf32> to vector<16xf32>
    %242 = vector.shape_cast %241 : vector<16xf32> to vector<16x1xf32>
    %243 = vector.broadcast %242 : vector<16x1xf32> to vector<16x5xf32>
    %244 = arith.subf %240, %243 : vector<16x5xf32>
    %245 = math.exp %244 : vector<16x5xf32>
    %cst_115 = arith.constant dense<0.000000e+00> : vector<16xf32>
    %246 = vector.multi_reduction <add>, %245, %cst_115 [1] : vector<16x5xf32> to vector<16xf32>
    %247 = vector.shape_cast %246 : vector<16xf32> to vector<16x1xf32>
    %248 = vector.broadcast %247 : vector<16x1xf32> to vector<16x5xf32>
    %249 = arith.divf %245, %248 : vector<16x5xf32>
    %250 = math.exp %249 : vector<16x5xf32>
    %cst_116 = arith.constant dense<0.000000e+00> : vector<16xf32>
    %251 = vector.multi_reduction <add>, %250, %cst_116 [1] : vector<16x5xf32> to vector<16xf32>
    %252 = vector.shape_cast %251 : vector<16xf32> to vector<16x1xf32>
    %253 = math.log %252 : vector<16x1xf32>
    %254 = vector.broadcast %253 : vector<16x1xf32> to vector<16x5xf32>
    %255 = arith.subf %249, %254 : vector<16x5xf32>
    %256 = arith.mulf %234, %255 : vector<16x5xf32>
    %257 = vector.shape_cast %256 : vector<16x5xf32> to vector<1x16x5xf32>
    %cst_117 = arith.constant dense<0.000000e+00> : vector<1xf32>
    %258 = vector.multi_reduction <add>, %257, %cst_117 [1, 2] : vector<1x16x5xf32> to vector<1xf32>
    %259 = vector.shape_cast %258 : vector<1xf32> to vector<1x1x1xf32>
    %260 = vector.extract %259[0, 0, 0] : f32 from vector<1x1x1xf32>
    %cst_118 = arith.constant 0.000000e+00 : f32
    %261 = arith.subf %cst_118, %260 : f32
    %cst_119 = arith.constant 1.600000e+01 : f32
    %262 = arith.divf %261, %cst_119 : f32
    %263 = arith.mulf %249, %234 : vector<16x5xf32>
    %cst_120 = arith.constant dense<0.000000e+00> : vector<16xf32>
    %264 = vector.multi_reduction <add>, %263, %cst_120 [1] : vector<16x5xf32> to vector<16xf32>
    %265 = vector.shape_cast %264 : vector<16xf32> to vector<16x1xf32>
    %266 = vector.broadcast %265 : vector<16x1xf32> to vector<16x128xf32>
    %267 = arith.mulf %266, %233 : vector<16x128xf32>
    %cst_121 = arith.constant dense<0.000000e+00> : vector<8x128xf32>
    %268 = tpu.matmul %235, %267, %cst_121 {dimension_numbers = #tpu.dot_dimension_numbers<[1], [0], [0], [1], [0, 0, 1, 1], [], []>} : vector<8x16xf32>, vector<16x128xf32>, vector<8x128xf32> -> vector<8x128xf32>
    %269 = arith.addf %197, %262 : f32
    %c0_122 = arith.constant 0 : index
    %c0_123 = arith.constant 0 : index
    %270 = vector.load %arg14[%c0_122, %c0_123] : memref<128x384xf32, #tpu.memory_space<vmem>>, vector<128x384xf32>
    %cst_124 = arith.constant dense<0.000000e+00> : vector<8x384xf32>
    %271 = tpu.matmul %1, %270, %cst_124 {dimension_numbers = #tpu.dot_dimension_numbers<[1], [0], [0], [1], [0, 0, 1, 1], [], []>} : vector<8x128xf32>, vector<128x384xf32>, vector<8x384xf32> -> vector<8x384xf32>
    %c0_125 = arith.constant 0 : index
    %c0_126 = arith.constant 0 : index
    %272 = vector.load %arg15[%c0_125, %c0_126] : memref<1x384xf32, #tpu.memory_space<vmem>>, vector<1x384xf32>
    %273 = vector.broadcast %272 : vector<1x384xf32> to vector<8x384xf32>
    %274 = arith.addf %271, %273 : vector<8x384xf32>
    %c0_127 = arith.constant 0 : index
    %c0_128 = arith.constant 0 : index
    %275 = vector.load %arg16[%c0_127, %c0_128] : memref<128x384xf32, #tpu.memory_space<vmem>>, vector<128x384xf32>
    %cst_129 = arith.constant dense<0.000000e+00> : vector<8x384xf32>
    %276 = tpu.matmul %268, %275, %cst_129 {dimension_numbers = #tpu.dot_dimension_numbers<[1], [0], [0], [1], [0, 0, 1, 1], [], []>} : vector<8x128xf32>, vector<128x384xf32>, vector<8x384xf32> -> vector<8x384xf32>
    %c0_130 = arith.constant 0 : index
    %c0_131 = arith.constant 0 : index
    %277 = vector.load %arg17[%c0_130, %c0_131] : memref<1x384xf32, #tpu.memory_space<vmem>>, vector<1x384xf32>
    %278 = vector.broadcast %277 : vector<1x384xf32> to vector<8x384xf32>
    %279 = arith.addf %276, %278 : vector<8x384xf32>
    %280 = vector.extract_strided_slice %274 {offsets = [0, 0], sizes = [8, 128], strides = [1, 1]} : vector<8x384xf32> to vector<8x128xf32>
    %281 = vector.extract_strided_slice %279 {offsets = [0, 0], sizes = [8, 128], strides = [1, 1]} : vector<8x384xf32> to vector<8x128xf32>
    %282 = arith.addf %280, %281 : vector<8x128xf32>
    %283 = arith.negf %282 : vector<8x128xf32>
    %284 = math.exp %283 : vector<8x128xf32>
    %cst_132 = arith.constant 1.000000e+00 : f32
    %285 = vector.broadcast %cst_132 : f32 to vector<8x128xf32>
    %286 = arith.addf %285, %284 : vector<8x128xf32>
    %287 = arith.divf %285, %286 : vector<8x128xf32>
    %288 = vector.extract_strided_slice %274 {offsets = [0, 128], sizes = [8, 128], strides = [1, 1]} : vector<8x384xf32> to vector<8x128xf32>
    %289 = vector.extract_strided_slice %279 {offsets = [0, 128], sizes = [8, 128], strides = [1, 1]} : vector<8x384xf32> to vector<8x128xf32>
    %290 = arith.addf %288, %289 : vector<8x128xf32>
    %291 = arith.negf %290 : vector<8x128xf32>
    %292 = math.exp %291 : vector<8x128xf32>
    %cst_133 = arith.constant 1.000000e+00 : f32
    %293 = vector.broadcast %cst_133 : f32 to vector<8x128xf32>
    %294 = arith.addf %293, %292 : vector<8x128xf32>
    %295 = arith.divf %293, %294 : vector<8x128xf32>
    %296 = vector.extract_strided_slice %274 {offsets = [0, 256], sizes = [8, 128], strides = [1, 1]} : vector<8x384xf32> to vector<8x128xf32>
    %297 = vector.extract_strided_slice %279 {offsets = [0, 256], sizes = [8, 128], strides = [1, 1]} : vector<8x384xf32> to vector<8x128xf32>
    %298 = arith.mulf %287, %297 : vector<8x128xf32>
    %299 = arith.addf %296, %298 : vector<8x128xf32>
    %300 = math.tanh %299 : vector<8x128xf32>
    %cst_134 = arith.constant 1.000000e+00 : f32
    %301 = vector.broadcast %cst_134 : f32 to vector<8x128xf32>
    %302 = arith.subf %301, %295 : vector<8x128xf32>
    %303 = arith.mulf %302, %300 : vector<8x128xf32>
    %304 = arith.mulf %295, %268 : vector<8x128xf32>
    %305 = arith.addf %303, %304 : vector<8x128xf32>
    %c0_135 = arith.constant 0 : index
    %c0_136 = arith.constant 0 : index
    %306 = vector.load %arg35[%c0_135, %c0_136] : memref<8x5xf32, #tpu.memory_space<vmem>>, vector<8x5xf32>
    %c0_137 = arith.constant 0 : index
    %c0_138 = arith.constant 0 : index
    %307 = vector.load %arg32[%c0_137, %c0_138] : memref<128x5xf32, #tpu.memory_space<vmem>>, vector<128x5xf32>
    %c0_139 = arith.constant 0 : index
    %c0_140 = arith.constant 0 : index
    %308 = vector.load %arg33[%c0_139, %c0_140] : memref<1x5xf32, #tpu.memory_space<vmem>>, vector<1x5xf32>
    %cst_141 = arith.constant dense<0.000000e+00> : vector<8x5xf32>
    %309 = tpu.matmul %305, %307, %cst_141 {dimension_numbers = #tpu.dot_dimension_numbers<[1], [0], [0], [1], [0, 0, 1, 1], [], []>} : vector<8x128xf32>, vector<128x5xf32>, vector<8x5xf32> -> vector<8x5xf32>
    %310 = vector.broadcast %308 : vector<1x5xf32> to vector<8x5xf32>
    %311 = arith.addf %309, %310 : vector<8x5xf32>
    %cst_142 = arith.constant dense<0xFF800000> : vector<8xf32>
    %312 = vector.multi_reduction <maximumf>, %311, %cst_142 [1] : vector<8x5xf32> to vector<8xf32>
    %313 = vector.shape_cast %312 : vector<8xf32> to vector<8x1xf32>
    %314 = vector.broadcast %313 : vector<8x1xf32> to vector<8x5xf32>
    %315 = arith.subf %311, %314 : vector<8x5xf32>
    %316 = math.exp %315 : vector<8x5xf32>
    %cst_143 = arith.constant dense<0.000000e+00> : vector<8xf32>
    %317 = vector.multi_reduction <add>, %316, %cst_143 [1] : vector<8x5xf32> to vector<8xf32>
    %318 = vector.shape_cast %317 : vector<8xf32> to vector<8x1xf32>
    %319 = vector.broadcast %318 : vector<8x1xf32> to vector<8x5xf32>
    %320 = arith.divf %316, %319 : vector<8x5xf32>
    %321 = math.exp %320 : vector<8x5xf32>
    %cst_144 = arith.constant dense<0.000000e+00> : vector<8xf32>
    %322 = vector.multi_reduction <add>, %321, %cst_144 [1] : vector<8x5xf32> to vector<8xf32>
    %323 = vector.shape_cast %322 : vector<8xf32> to vector<8x1xf32>
    %324 = math.log %323 : vector<8x1xf32>
    %325 = vector.broadcast %324 : vector<8x1xf32> to vector<8x5xf32>
    %326 = arith.subf %320, %325 : vector<8x5xf32>
    %327 = arith.mulf %306, %326 : vector<8x5xf32>
    %328 = vector.shape_cast %327 : vector<8x5xf32> to vector<1x8x5xf32>
    %cst_145 = arith.constant dense<0.000000e+00> : vector<1xf32>
    %329 = vector.multi_reduction <add>, %328, %cst_145 [1, 2] : vector<1x8x5xf32> to vector<1xf32>
    %330 = vector.shape_cast %329 : vector<1xf32> to vector<1x1x1xf32>
    %331 = vector.extract %330[0, 0, 0] : f32 from vector<1x1x1xf32>
    %cst_146 = arith.constant 0.000000e+00 : f32
    %332 = arith.subf %cst_146, %331 : f32
    %cst_147 = arith.constant 8.000000e+00 : f32
    %333 = arith.divf %332, %cst_147 : f32
    %334 = arith.addf %269, %333 : f32
    %c0_148 = arith.constant 0 : index
    %c0_149 = arith.constant 0 : index
    %335 = vector.load %arg6[%c0_148, %c0_149] : memref<1x128xf32, #tpu.memory_space<vmem>>, vector<1x128xf32>
    %c0_150 = arith.constant 0 : index
    %c0_151 = arith.constant 0 : index
    %336 = vector.load %arg7[%c0_150, %c0_151] : memref<1x1xf32, #tpu.memory_space<vmem>>, vector<1x1xf32>
    %c0_152 = arith.constant 0 : index
    %c0_153 = arith.constant 0 : index
    %337 = vector.load %arg8[%c0_152, %c0_153] : memref<1x128xf32, #tpu.memory_space<vmem>>, vector<1x128xf32>
    %c0_154 = arith.constant 0 : index
    %c0_155 = arith.constant 0 : index
    %338 = vector.load %arg9[%c0_154, %c0_155] : memref<1x1xf32, #tpu.memory_space<vmem>>, vector<1x1xf32>
    %339 = vector.broadcast %335 : vector<1x128xf32> to vector<16x128xf32>
    %340 = arith.mulf %8, %339 : vector<16x128xf32>
    %cst_156 = arith.constant dense<0.000000e+00> : vector<16xf32>
    %341 = vector.multi_reduction <add>, %340, %cst_156 [1] : vector<16x128xf32> to vector<16xf32>
    %342 = vector.shape_cast %341 : vector<16xf32> to vector<16x1xf32>
    %343 = vector.broadcast %336 : vector<1x1xf32> to vector<16x1xf32>
    %344 = arith.addf %342, %343 : vector<16x1xf32>
    %cst_157 = arith.constant 0.000000e+00 : f32
    %345 = vector.broadcast %cst_157 : f32 to vector<16x1xf32>
    %346 = arith.maximumf %344, %345 : vector<16x1xf32>
    %347 = vector.broadcast %337 : vector<1x128xf32> to vector<16x128xf32>
    %348 = arith.mulf %233, %347 : vector<16x128xf32>
    %cst_158 = arith.constant dense<0.000000e+00> : vector<16xf32>
    %349 = vector.multi_reduction <add>, %348, %cst_158 [1] : vector<16x128xf32> to vector<16xf32>
    %350 = vector.shape_cast %349 : vector<16xf32> to vector<16x1xf32>
    %351 = vector.broadcast %338 : vector<1x1xf32> to vector<16x1xf32>
    %352 = arith.addf %350, %351 : vector<16x1xf32>
    %cst_159 = arith.constant 0.000000e+00 : f32
    %353 = vector.broadcast %cst_159 : f32 to vector<16x1xf32>
    %354 = arith.maximumf %352, %353 : vector<16x1xf32>
    %cst_160 = arith.constant dense<0xFF800000> : vector<1xf32>
    %355 = vector.multi_reduction <maximumf>, %346, %cst_160 [0] : vector<16x1xf32> to vector<1xf32>
    %356 = vector.shape_cast %355 : vector<1xf32> to vector<1x1xf32>
    %357 = vector.broadcast %356 : vector<1x1xf32> to vector<16x1xf32>
    %358 = arith.subf %346, %357 : vector<16x1xf32>
    %359 = math.exp %358 : vector<16x1xf32>
    %cst_161 = arith.constant dense<0.000000e+00> : vector<1xf32>
    %360 = vector.multi_reduction <add>, %359, %cst_161 [0] : vector<16x1xf32> to vector<1xf32>
    %361 = vector.shape_cast %360 : vector<1xf32> to vector<1x1xf32>
    %362 = vector.broadcast %361 : vector<1x1xf32> to vector<16x1xf32>
    %363 = arith.divf %359, %362 : vector<16x1xf32>
    %cst_162 = arith.constant dense<0xFF800000> : vector<1xf32>
    %364 = vector.multi_reduction <maximumf>, %354, %cst_162 [0] : vector<16x1xf32> to vector<1xf32>
    %365 = vector.shape_cast %364 : vector<1xf32> to vector<1x1xf32>
    %366 = vector.broadcast %365 : vector<1x1xf32> to vector<16x1xf32>
    %367 = arith.subf %354, %366 : vector<16x1xf32>
    %368 = math.exp %367 : vector<16x1xf32>
    %cst_163 = arith.constant dense<0.000000e+00> : vector<1xf32>
    %369 = vector.multi_reduction <add>, %368, %cst_163 [0] : vector<16x1xf32> to vector<1xf32>
    %370 = vector.shape_cast %369 : vector<1xf32> to vector<1x1xf32>
    %371 = vector.broadcast %370 : vector<1x1xf32> to vector<16x1xf32>
    %372 = arith.divf %368, %371 : vector<16x1xf32>
    %373 = vector.broadcast %363 : vector<16x1xf32> to vector<16x128xf32>
    %374 = arith.mulf %373, %8 : vector<16x128xf32>
    %375 = vector.broadcast %372 : vector<16x1xf32> to vector<16x128xf32>
    %376 = arith.mulf %375, %233 : vector<16x128xf32>
    %377 = arith.addf %374, %376 : vector<16x128xf32>
    %cst_164 = arith.constant 0.000000e+00 : f32
    %378 = vector.broadcast %cst_164 : f32 to vector<16x128xf32>
    %379 = arith.maximumf %377, %378 : vector<16x128xf32>
    %380 = vector.broadcast %335 : vector<1x128xf32> to vector<8x128xf32>
    %381 = arith.mulf %11, %380 : vector<8x128xf32>
    %cst_165 = arith.constant dense<0.000000e+00> : vector<8xf32>
    %382 = vector.multi_reduction <add>, %381, %cst_165 [1] : vector<8x128xf32> to vector<8xf32>
    %383 = vector.shape_cast %382 : vector<8xf32> to vector<8x1xf32>
    %384 = vector.broadcast %336 : vector<1x1xf32> to vector<8x1xf32>
    %385 = arith.addf %383, %384 : vector<8x1xf32>
    %cst_166 = arith.constant 0.000000e+00 : f32
    %386 = vector.broadcast %cst_166 : f32 to vector<8x1xf32>
    %387 = arith.maximumf %385, %386 : vector<8x1xf32>
    %388 = vector.broadcast %337 : vector<1x128xf32> to vector<8x128xf32>
    %389 = arith.mulf %305, %388 : vector<8x128xf32>
    %cst_167 = arith.constant dense<0.000000e+00> : vector<8xf32>
    %390 = vector.multi_reduction <add>, %389, %cst_167 [1] : vector<8x128xf32> to vector<8xf32>
    %391 = vector.shape_cast %390 : vector<8xf32> to vector<8x1xf32>
    %392 = vector.broadcast %338 : vector<1x1xf32> to vector<8x1xf32>
    %393 = arith.addf %391, %392 : vector<8x1xf32>
    %cst_168 = arith.constant 0.000000e+00 : f32
    %394 = vector.broadcast %cst_168 : f32 to vector<8x1xf32>
    %395 = arith.maximumf %393, %394 : vector<8x1xf32>
    %cst_169 = arith.constant dense<0xFF800000> : vector<1xf32>
    %396 = vector.multi_reduction <maximumf>, %387, %cst_169 [0] : vector<8x1xf32> to vector<1xf32>
    %397 = vector.shape_cast %396 : vector<1xf32> to vector<1x1xf32>
    %398 = vector.broadcast %397 : vector<1x1xf32> to vector<8x1xf32>
    %399 = arith.subf %387, %398 : vector<8x1xf32>
    %400 = math.exp %399 : vector<8x1xf32>
    %cst_170 = arith.constant dense<0.000000e+00> : vector<1xf32>
    %401 = vector.multi_reduction <add>, %400, %cst_170 [0] : vector<8x1xf32> to vector<1xf32>
    %402 = vector.shape_cast %401 : vector<1xf32> to vector<1x1xf32>
    %403 = vector.broadcast %402 : vector<1x1xf32> to vector<8x1xf32>
    %404 = arith.divf %400, %403 : vector<8x1xf32>
    %cst_171 = arith.constant dense<0xFF800000> : vector<1xf32>
    %405 = vector.multi_reduction <maximumf>, %395, %cst_171 [0] : vector<8x1xf32> to vector<1xf32>
    %406 = vector.shape_cast %405 : vector<1xf32> to vector<1x1xf32>
    %407 = vector.broadcast %406 : vector<1x1xf32> to vector<8x1xf32>
    %408 = arith.subf %395, %407 : vector<8x1xf32>
    %409 = math.exp %408 : vector<8x1xf32>
    %cst_172 = arith.constant dense<0.000000e+00> : vector<1xf32>
    %410 = vector.multi_reduction <add>, %409, %cst_172 [0] : vector<8x1xf32> to vector<1xf32>
    %411 = vector.shape_cast %410 : vector<1xf32> to vector<1x1xf32>
    %412 = vector.broadcast %411 : vector<1x1xf32> to vector<8x1xf32>
    %413 = arith.divf %409, %412 : vector<8x1xf32>
    %414 = vector.broadcast %404 : vector<8x1xf32> to vector<8x128xf32>
    %415 = arith.mulf %414, %11 : vector<8x128xf32>
    %416 = vector.broadcast %413 : vector<8x1xf32> to vector<8x128xf32>
    %417 = arith.mulf %416, %305 : vector<8x128xf32>
    %418 = arith.addf %415, %417 : vector<8x128xf32>
    %cst_173 = arith.constant 0.000000e+00 : f32
    %419 = vector.broadcast %cst_173 : f32 to vector<8x128xf32>
    %420 = arith.maximumf %418, %419 : vector<8x128xf32>
    %421 = vector.broadcast %335 : vector<1x128xf32> to vector<5x128xf32>
    %422 = arith.mulf %14, %421 : vector<5x128xf32>
    %cst_174 = arith.constant dense<0.000000e+00> : vector<5xf32>
    %423 = vector.multi_reduction <add>, %422, %cst_174 [1] : vector<5x128xf32> to vector<5xf32>
    %424 = vector.shape_cast %423 : vector<5xf32> to vector<5x1xf32>
    %425 = vector.broadcast %336 : vector<1x1xf32> to vector<5x1xf32>
    %426 = arith.addf %424, %425 : vector<5x1xf32>
    %cst_175 = arith.constant 0.000000e+00 : f32
    %427 = vector.broadcast %cst_175 : f32 to vector<5x1xf32>
    %428 = arith.maximumf %426, %427 : vector<5x1xf32>
    %429 = vector.broadcast %337 : vector<1x128xf32> to vector<5x128xf32>
    %430 = arith.mulf %161, %429 : vector<5x128xf32>
    %cst_176 = arith.constant dense<0.000000e+00> : vector<5xf32>
    %431 = vector.multi_reduction <add>, %430, %cst_176 [1] : vector<5x128xf32> to vector<5xf32>
    %432 = vector.shape_cast %431 : vector<5xf32> to vector<5x1xf32>
    %433 = vector.broadcast %338 : vector<1x1xf32> to vector<5x1xf32>
    %434 = arith.addf %432, %433 : vector<5x1xf32>
    %cst_177 = arith.constant 0.000000e+00 : f32
    %435 = vector.broadcast %cst_177 : f32 to vector<5x1xf32>
    %436 = arith.maximumf %434, %435 : vector<5x1xf32>
    %cst_178 = arith.constant dense<0xFF800000> : vector<1xf32>
    %437 = vector.multi_reduction <maximumf>, %428, %cst_178 [0] : vector<5x1xf32> to vector<1xf32>
    %438 = vector.shape_cast %437 : vector<1xf32> to vector<1x1xf32>
    %439 = vector.broadcast %438 : vector<1x1xf32> to vector<5x1xf32>
    %440 = arith.subf %428, %439 : vector<5x1xf32>
    %441 = math.exp %440 : vector<5x1xf32>
    %cst_179 = arith.constant dense<0.000000e+00> : vector<1xf32>
    %442 = vector.multi_reduction <add>, %441, %cst_179 [0] : vector<5x1xf32> to vector<1xf32>
    %443 = vector.shape_cast %442 : vector<1xf32> to vector<1x1xf32>
    %444 = vector.broadcast %443 : vector<1x1xf32> to vector<5x1xf32>
    %445 = arith.divf %441, %444 : vector<5x1xf32>
    %cst_180 = arith.constant dense<0xFF800000> : vector<1xf32>
    %446 = vector.multi_reduction <maximumf>, %436, %cst_180 [0] : vector<5x1xf32> to vector<1xf32>
    %447 = vector.shape_cast %446 : vector<1xf32> to vector<1x1xf32>
    %448 = vector.broadcast %447 : vector<1x1xf32> to vector<5x1xf32>
    %449 = arith.subf %436, %448 : vector<5x1xf32>
    %450 = math.exp %449 : vector<5x1xf32>
    %cst_181 = arith.constant dense<0.000000e+00> : vector<1xf32>
    %451 = vector.multi_reduction <add>, %450, %cst_181 [0] : vector<5x1xf32> to vector<1xf32>
    %452 = vector.shape_cast %451 : vector<1xf32> to vector<1x1xf32>
    %453 = vector.broadcast %452 : vector<1x1xf32> to vector<5x1xf32>
    %454 = arith.divf %450, %453 : vector<5x1xf32>
    %455 = vector.broadcast %445 : vector<5x1xf32> to vector<5x128xf32>
    %456 = arith.mulf %455, %14 : vector<5x128xf32>
    %457 = vector.broadcast %454 : vector<5x1xf32> to vector<5x128xf32>
    %458 = arith.mulf %457, %161 : vector<5x128xf32>
    %459 = arith.addf %456, %458 : vector<5x128xf32>
    %cst_182 = arith.constant 0.000000e+00 : f32
    %460 = vector.broadcast %cst_182 : f32 to vector<5x128xf32>
    %461 = arith.maximumf %459, %460 : vector<5x128xf32>
    %462 = vector.broadcast %335 : vector<1x128xf32> to vector<12x128xf32>
    %463 = arith.mulf %17, %462 : vector<12x128xf32>
    %cst_183 = arith.constant dense<0.000000e+00> : vector<12xf32>
    %464 = vector.multi_reduction <add>, %463, %cst_183 [1] : vector<12x128xf32> to vector<12xf32>
    %465 = vector.shape_cast %464 : vector<12xf32> to vector<12x1xf32>
    %466 = vector.broadcast %336 : vector<1x1xf32> to vector<12x1xf32>
    %467 = arith.addf %465, %466 : vector<12x1xf32>
    %cst_184 = arith.constant 0.000000e+00 : f32
    %468 = vector.broadcast %cst_184 : f32 to vector<12x1xf32>
    %469 = arith.maximumf %467, %468 : vector<12x1xf32>
    %470 = vector.broadcast %337 : vector<1x128xf32> to vector<12x128xf32>
    %471 = arith.mulf %89, %470 : vector<12x128xf32>
    %cst_185 = arith.constant dense<0.000000e+00> : vector<12xf32>
    %472 = vector.multi_reduction <add>, %471, %cst_185 [1] : vector<12x128xf32> to vector<12xf32>
    %473 = vector.shape_cast %472 : vector<12xf32> to vector<12x1xf32>
    %474 = vector.broadcast %338 : vector<1x1xf32> to vector<12x1xf32>
    %475 = arith.addf %473, %474 : vector<12x1xf32>
    %cst_186 = arith.constant 0.000000e+00 : f32
    %476 = vector.broadcast %cst_186 : f32 to vector<12x1xf32>
    %477 = arith.maximumf %475, %476 : vector<12x1xf32>
    %cst_187 = arith.constant dense<0xFF800000> : vector<1xf32>
    %478 = vector.multi_reduction <maximumf>, %469, %cst_187 [0] : vector<12x1xf32> to vector<1xf32>
    %479 = vector.shape_cast %478 : vector<1xf32> to vector<1x1xf32>
    %480 = vector.broadcast %479 : vector<1x1xf32> to vector<12x1xf32>
    %481 = arith.subf %469, %480 : vector<12x1xf32>
    %482 = math.exp %481 : vector<12x1xf32>
    %cst_188 = arith.constant dense<0.000000e+00> : vector<1xf32>
    %483 = vector.multi_reduction <add>, %482, %cst_188 [0] : vector<12x1xf32> to vector<1xf32>
    %484 = vector.shape_cast %483 : vector<1xf32> to vector<1x1xf32>
    %485 = vector.broadcast %484 : vector<1x1xf32> to vector<12x1xf32>
    %486 = arith.divf %482, %485 : vector<12x1xf32>
    %cst_189 = arith.constant dense<0xFF800000> : vector<1xf32>
    %487 = vector.multi_reduction <maximumf>, %477, %cst_189 [0] : vector<12x1xf32> to vector<1xf32>
    %488 = vector.shape_cast %487 : vector<1xf32> to vector<1x1xf32>
    %489 = vector.broadcast %488 : vector<1x1xf32> to vector<12x1xf32>
    %490 = arith.subf %477, %489 : vector<12x1xf32>
    %491 = math.exp %490 : vector<12x1xf32>
    %cst_190 = arith.constant dense<0.000000e+00> : vector<1xf32>
    %492 = vector.multi_reduction <add>, %491, %cst_190 [0] : vector<12x1xf32> to vector<1xf32>
    %493 = vector.shape_cast %492 : vector<1xf32> to vector<1x1xf32>
    %494 = vector.broadcast %493 : vector<1x1xf32> to vector<12x1xf32>
    %495 = arith.divf %491, %494 : vector<12x1xf32>
    %496 = vector.broadcast %486 : vector<12x1xf32> to vector<12x128xf32>
    %497 = arith.mulf %496, %17 : vector<12x128xf32>
    %498 = vector.broadcast %495 : vector<12x1xf32> to vector<12x128xf32>
    %499 = arith.mulf %498, %89 : vector<12x128xf32>
    %500 = arith.addf %497, %499 : vector<12x128xf32>
    %cst_191 = arith.constant 0.000000e+00 : f32
    %501 = vector.broadcast %cst_191 : f32 to vector<12x128xf32>
    %502 = arith.maximumf %500, %501 : vector<12x128xf32>
    %cst_192 = arith.constant 0.000000e+00 : f32
    %503 = vector.broadcast %cst_192 : f32 to vector<41x128xf32>
    %504 = tpu.iota {dimensions = array<i32: 0>} : vector<41x16xi32>
    %505 = tpu.iota {dimensions = array<i32: 1>} : vector<41x16xi32>
    %c0_i32 = arith.constant 0 : i32
    %506 = vector.broadcast %c0_i32 : i32 to vector<41x16xi32>
    %507 = arith.addi %505, %506 : vector<41x16xi32>
    %508 = arith.cmpi eq, %504, %507 : vector<41x16xi32>
    %509 = arith.extui %508 : vector<41x16xi1> to vector<41x16xi32>
    %510 = arith.sitofp %509 : vector<41x16xi32> to vector<41x16xf32>
    %cst_193 = arith.constant dense<0.000000e+00> : vector<41x128xf32>
    %511 = tpu.matmul %510, %379, %cst_193 {dimension_numbers = #tpu.dot_dimension_numbers<[1], [0], [0], [1], [0, 0, 1, 1], [], []>} : vector<41x16xf32>, vector<16x128xf32>, vector<41x128xf32> -> vector<41x128xf32>
    %512 = arith.addf %503, %511 : vector<41x128xf32>
    %513 = tpu.iota {dimensions = array<i32: 0>} : vector<41x8xi32>
    %514 = tpu.iota {dimensions = array<i32: 1>} : vector<41x8xi32>
    %c16_i32 = arith.constant 16 : i32
    %515 = vector.broadcast %c16_i32 : i32 to vector<41x8xi32>
    %516 = arith.addi %514, %515 : vector<41x8xi32>
    %517 = arith.cmpi eq, %513, %516 : vector<41x8xi32>
    %518 = arith.extui %517 : vector<41x8xi1> to vector<41x8xi32>
    %519 = arith.sitofp %518 : vector<41x8xi32> to vector<41x8xf32>
    %cst_194 = arith.constant dense<0.000000e+00> : vector<41x128xf32>
    %520 = tpu.matmul %519, %420, %cst_194 {dimension_numbers = #tpu.dot_dimension_numbers<[1], [0], [0], [1], [0, 0, 1, 1], [], []>} : vector<41x8xf32>, vector<8x128xf32>, vector<41x128xf32> -> vector<41x128xf32>
    %521 = arith.addf %512, %520 : vector<41x128xf32>
    %522 = tpu.iota {dimensions = array<i32: 0>} : vector<41x5xi32>
    %523 = tpu.iota {dimensions = array<i32: 1>} : vector<41x5xi32>
    %c24_i32 = arith.constant 24 : i32
    %524 = vector.broadcast %c24_i32 : i32 to vector<41x5xi32>
    %525 = arith.addi %523, %524 : vector<41x5xi32>
    %526 = arith.cmpi eq, %522, %525 : vector<41x5xi32>
    %527 = arith.extui %526 : vector<41x5xi1> to vector<41x5xi32>
    %528 = arith.sitofp %527 : vector<41x5xi32> to vector<41x5xf32>
    %cst_195 = arith.constant dense<0.000000e+00> : vector<41x128xf32>
    %529 = tpu.matmul %528, %461, %cst_195 {dimension_numbers = #tpu.dot_dimension_numbers<[1], [0], [0], [1], [0, 0, 1, 1], [], []>} : vector<41x5xf32>, vector<5x128xf32>, vector<41x128xf32> -> vector<41x128xf32>
    %530 = arith.addf %521, %529 : vector<41x128xf32>
    %531 = tpu.iota {dimensions = array<i32: 0>} : vector<41x12xi32>
    %532 = tpu.iota {dimensions = array<i32: 1>} : vector<41x12xi32>
    %c29_i32 = arith.constant 29 : i32
    %533 = vector.broadcast %c29_i32 : i32 to vector<41x12xi32>
    %534 = arith.addi %532, %533 : vector<41x12xi32>
    %535 = arith.cmpi eq, %531, %534 : vector<41x12xi32>
    %536 = arith.extui %535 : vector<41x12xi1> to vector<41x12xi32>
    %537 = arith.sitofp %536 : vector<41x12xi32> to vector<41x12xf32>
    %cst_196 = arith.constant dense<0.000000e+00> : vector<41x128xf32>
    %538 = tpu.matmul %537, %502, %cst_196 {dimension_numbers = #tpu.dot_dimension_numbers<[1], [0], [0], [1], [0, 0, 1, 1], [], []>} : vector<41x12xf32>, vector<12x128xf32>, vector<41x128xf32> -> vector<41x128xf32>
    %539 = arith.addf %530, %538 : vector<41x128xf32>
    %c0_197 = arith.constant 0 : index
    %c0_198 = arith.constant 0 : index
    %540 = vector.load %arg44[%c0_197, %c0_198] : memref<41x128xf32, #tpu.memory_space<vmem>>, vector<41x128xf32>
    tpu.vector_store %arg44[%c0_197, %c0_198], %539 {strides = array<i32>} : memref<41x128xf32, #tpu.memory_space<vmem>>, vector<41x128xf32>,
    %541 = tpu.iota {dimensions = array<i32: 1>} : vector<10x41xi32>
    %c0_199 = arith.constant 0 : index
    %c0_200 = arith.constant 0 : index
    %542 = vector.load %arg37[%c0_199, %c0_200] : memref<10x1xi32, #tpu.memory_space<vmem>>, vector<10x1xi32>
    %543 = vector.broadcast %542 : vector<10x1xi32> to vector<10x41xi32>
    %544 = arith.cmpi eq, %541, %543 : vector<10x41xi32>
    %545 = arith.extui %544 : vector<10x41xi1> to vector<10x41xi32>
    %546 = arith.sitofp %545 : vector<10x41xi32> to vector<10x41xf32>
    %c0_201 = arith.constant 0 : index
    %c0_202 = arith.constant 0 : index
    %547 = vector.load %arg38[%c0_201, %c0_202] : memref<10x1xi32, #tpu.memory_space<vmem>>, vector<10x1xi32>
    %548 = vector.broadcast %547 : vector<10x1xi32> to vector<10x41xi32>
    %549 = arith.cmpi eq, %541, %548 : vector<10x41xi32>
    %550 = arith.extui %549 : vector<10x41xi1> to vector<10x41xi32>
    %551 = arith.sitofp %550 : vector<10x41xi32> to vector<10x41xf32>
    %552 = arith.addf %546, %551 : vector<10x41xf32>
    %cst_203 = arith.constant dense<0.000000e+00> : vector<10x128xf32>
    %553 = tpu.matmul %552, %539, %cst_203 {dimension_numbers = #tpu.dot_dimension_numbers<[1], [0], [0], [1], [0, 0, 1, 1], [], []>} : vector<10x41xf32>, vector<41x128xf32>, vector<10x128xf32> -> vector<10x128xf32>
    %c0_204 = arith.constant 0 : index
    %c0_205 = arith.constant 0 : index
    %554 = vector.load %arg41[%c0_204, %c0_205] : memref<10x1xi32, #tpu.memory_space<vmem>>, vector<10x1xi32>
    %555 = vector.broadcast %554 : vector<10x1xi32> to vector<10x41xi32>
    %556 = arith.cmpi eq, %541, %555 : vector<10x41xi32>
    %557 = arith.extui %556 : vector<10x41xi1> to vector<10x41xi32>
    %558 = arith.sitofp %557 : vector<10x41xi32> to vector<10x41xf32>
    %cst_206 = arith.constant dense<0.000000e+00> : vector<10x128xf32>
    %559 = tpu.matmul %558, %539, %cst_206 {dimension_numbers = #tpu.dot_dimension_numbers<[1], [0], [0], [1], [0, 0, 1, 1], [], []>} : vector<10x41xf32>, vector<41x128xf32>, vector<10x128xf32> -> vector<10x128xf32>
    %c0_207 = arith.constant 0 : index
    %c0_208 = arith.constant 0 : index
    %560 = vector.load %arg42[%c0_207, %c0_208] : memref<10x1xi32, #tpu.memory_space<vmem>>, vector<10x1xi32>
    %561 = vector.broadcast %560 : vector<10x1xi32> to vector<10x41xi32>
    %562 = arith.cmpi eq, %541, %561 : vector<10x41xi32>
    %563 = arith.extui %562 : vector<10x41xi1> to vector<10x41xi32>
    %564 = arith.sitofp %563 : vector<10x41xi32> to vector<10x41xf32>
    %cst_209 = arith.constant dense<0.000000e+00> : vector<10x128xf32>
    %565 = tpu.matmul %564, %539, %cst_209 {dimension_numbers = #tpu.dot_dimension_numbers<[1], [0], [0], [1], [0, 0, 1, 1], [], []>} : vector<10x41xf32>, vector<41x128xf32>, vector<10x128xf32> -> vector<10x128xf32>
    %c0_210 = arith.constant 0 : index
    %c0_211 = arith.constant 0 : index
    %566 = vector.load %arg36[%c0_210, %c0_211] : memref<12x128xf32, #tpu.memory_space<vmem>>, vector<12x128xf32>
    %567 = tpu.iota {dimensions = array<i32: 1>} : vector<10x12xi32>
    %c0_212 = arith.constant 0 : index
    %c0_213 = arith.constant 0 : index
    %568 = vector.load %arg40[%c0_212, %c0_213] : memref<10x1xi32, #tpu.memory_space<vmem>>, vector<10x1xi32>
    %569 = vector.broadcast %568 : vector<10x1xi32> to vector<10x12xi32>
    %570 = arith.cmpi eq, %567, %569 : vector<10x12xi32>
    %571 = arith.extui %570 : vector<10x12xi1> to vector<10x12xi32>
    %572 = arith.sitofp %571 : vector<10x12xi32> to vector<10x12xf32>
    %cst_214 = arith.constant dense<0.000000e+00> : vector<10x128xf32>
    %573 = tpu.matmul %572, %566, %cst_214 {dimension_numbers = #tpu.dot_dimension_numbers<[1], [0], [0], [1], [0, 0, 1, 1], [], []>} : vector<10x12xf32>, vector<12x128xf32>, vector<10x128xf32> -> vector<10x128xf32>
    %574 = math.tanh %553 : vector<10x128xf32>
    %575 = arith.mulf %573, %574 : vector<10x128xf32>
    %cst_215 = arith.constant dense<0.000000e+00> : vector<10xf32>
    %576 = vector.multi_reduction <add>, %575, %cst_215 [1] : vector<10x128xf32> to vector<10xf32>
    %577 = vector.shape_cast %576 : vector<10xf32> to vector<10x1xf32>
    %578 = arith.mulf %559, %565 : vector<10x128xf32>
    %cst_216 = arith.constant dense<0.000000e+00> : vector<10xf32>
    %579 = vector.multi_reduction <add>, %578, %cst_216 [1] : vector<10x128xf32> to vector<10xf32>
    %580 = vector.shape_cast %579 : vector<10xf32> to vector<10x1xf32>
    %c0_217 = arith.constant 0 : index
    %c0_218 = arith.constant 0 : index
    %581 = vector.load %arg39[%c0_217, %c0_218] : memref<10x1xf32, #tpu.memory_space<vmem>>, vector<10x1xf32>
    %582 = arith.mulf %581, %577 : vector<10x1xf32>
    %cst_219 = arith.constant 0.000000e+00 : f32
    %583 = vector.broadcast %cst_219 : f32 to vector<10x1xf32>
    %584 = arith.minimumf %582, %583 : vector<10x1xf32>
    %585 = math.absf %582 : vector<10x1xf32>
    %cst_220 = arith.constant 0.000000e+00 : f32
    %586 = vector.broadcast %cst_220 : f32 to vector<10x1xf32>
    %587 = arith.subf %586, %585 : vector<10x1xf32>
    %588 = math.exp %587 : vector<10x1xf32>
    %589 = math.log1p %588 : vector<10x1xf32>
    %590 = arith.subf %584, %589 : vector<10x1xf32>
    %591 = vector.shape_cast %590 : vector<10x1xf32> to vector<1x10x1xf32>
    %cst_221 = arith.constant dense<0.000000e+00> : vector<1xf32>
    %592 = vector.multi_reduction <add>, %591, %cst_221 [1, 2] : vector<1x10x1xf32> to vector<1xf32>
    %593 = vector.shape_cast %592 : vector<1xf32> to vector<1x1x1xf32>
    %594 = vector.extract %593[0, 0, 0] : f32 from vector<1x1x1xf32>
    %cst_222 = arith.constant 0.000000e+00 : f32
    %595 = arith.subf %cst_222, %594 : f32
    %c0_223 = arith.constant 0 : index
    %c0_224 = arith.constant 0 : index
    %596 = vector.load %arg43[%c0_223, %c0_224] : memref<10x1xf32, #tpu.memory_space<vmem>>, vector<10x1xf32>
    %597 = arith.mulf %596, %580 : vector<10x1xf32>
    %cst_225 = arith.constant 0.000000e+00 : f32
    %598 = vector.broadcast %cst_225 : f32 to vector<10x1xf32>
    %599 = arith.minimumf %597, %598 : vector<10x1xf32>
    %600 = math.absf %597 : vector<10x1xf32>
    %cst_226 = arith.constant 0.000000e+00 : f32
    %601 = vector.broadcast %cst_226 : f32 to vector<10x1xf32>
    %602 = arith.subf %601, %600 : vector<10x1xf32>
    %603 = math.exp %602 : vector<10x1xf32>
    %604 = math.log1p %603 : vector<10x1xf32>
    %605 = arith.subf %599, %604 : vector<10x1xf32>
    %606 = vector.shape_cast %605 : vector<10x1xf32> to vector<1x10x1xf32>
    %cst_227 = arith.constant dense<0.000000e+00> : vector<1xf32>
    %607 = vector.multi_reduction <add>, %606, %cst_227 [1, 2] : vector<1x10x1xf32> to vector<1xf32>
    %608 = vector.shape_cast %607 : vector<1xf32> to vector<1x1x1xf32>
    %609 = vector.extract %608[0, 0, 0] : f32 from vector<1x1x1xf32>
    %610 = arith.subf %595, %609 : f32
    %cst_228 = arith.constant 5.000000e-01 : f32
    %611 = arith.mulf %cst_228, %334 : f32
    %612 = arith.addf %610, %611 : f32
    %c0_229 = arith.constant 0 : index
    %c0_230 = arith.constant 0 : index
    %613 = memref.load %arg45[%c0_229, %c0_230] : memref<1x1xf32, #tpu.memory_space<smem>>
    memref.store %612, %arg45[%c0_229, %c0_230] : memref<1x1xf32, #tpu.memory_space<smem>>
    return
  }
}

</mosaic_0001>

<llo_original>
// kernel: tpu_custom_call.1
$region0: #{tpu_custom_call.1}
  #allocation0 [shape = 'u32[]', space=smem, size = 0x4, offset = 0x4, fixed_abs, tag = 'smem constant byte address 0x4 - core index']
  #allocation1 [shape = 'u32[72,128]{1,0:T(1,128)}', space=vmem, size = 0x9000, scoped, tag = 'internal scratch']
  #allocation2 [shape = 'f32[1,1]{1,0:T(1,128)S(1)}', space=vmem, size = 0x200, scoped, tag = 'scoped memory for tpu_custom_call.1']
  #allocation3 [shape = 'f32[1,1]{1,0:T(1,128)S(1)}', space=vmem, size = 0x200, scoped, tag = 'scoped memory for tpu_custom_call.1']
  %s0 = inlined_call_operand.smem [shape: u32[46], index: -1, kind: input, shape index: {}]
  %s1 = sld [smem:[%s0]]
  %s2 = scalar_lea.smem %s0, 1
  %s3 = sld [smem:[%s2]]
  %s4 = scalar_lea.smem %s0, 2
  %s5 = sld [smem:[%s4]]
  %s6 = scalar_lea.smem %s0, 3
  %s7 = sld [smem:[%s6]]
  %s8 = scalar_lea.smem %s0, 4
  %s9 = sld [smem:[%s8]]
  %s10 = scalar_lea.smem %s0, 5
  %s11 = sld [smem:[%s10]]
  %s12 = scalar_lea.smem %s0, 6
  %s13 = sld [smem:[%s12]]
  %s14 = scalar_lea.smem %s0, 7
  %s15 = sld [smem:[%s14]]
  %s16 = scalar_lea.smem %s0, 8
  %s17 = sld [smem:[%s16]]
  %s18 = scalar_lea.smem %s0, 9
  %s19 = sld [smem:[%s18]]
  %s20 = scalar_lea.smem %s0, 10
  %s21 = sld [smem:[%s20]]
  %s22 = scalar_lea.smem %s0, 11
  %s23 = sld [smem:[%s22]]
  %s24 = scalar_lea.smem %s0, 12
  %s25 = sld [smem:[%s24]]
  %s26 = scalar_lea.smem %s0, 13
  %s27 = sld [smem:[%s26]]
  %s28 = scalar_lea.smem %s0, 14
  %s29 = sld [smem:[%s28]]
  %s30 = scalar_lea.smem %s0, 15
  %s31 = sld [smem:[%s30]]
  %s32 = scalar_lea.smem %s0, 16
  %s33 = sld [smem:[%s32]]
  %s34 = scalar_lea.smem %s0, 17
  %s35 = sld [smem:[%s34]]
  %s36 = scalar_lea.smem %s0, 18
  %s37 = sld [smem:[%s36]]
  %s38 = scalar_lea.smem %s0, 19
  %s39 = sld [smem:[%s38]]
  %s40 = scalar_lea.smem %s0, 20
  %s41 = sld [smem:[%s40]]
  %s42 = scalar_lea.smem %s0, 21
  %s43 = sld [smem:[%s42]]
  %s44 = scalar_lea.smem %s0, 22
  %s45 = sld [smem:[%s44]]
  %s46 = scalar_lea.smem %s0, 23
  %s47 = sld [smem:[%s46]]
  %s48 = scalar_lea.smem %s0, 24
  %s49 = sld [smem:[%s48]]
  %s50 = scalar_lea.smem %s0, 25
  %s51 = sld [smem:[%s50]]
  %s52 = scalar_lea.smem %s0, 26
  %s53 = sld [smem:[%s52]]
  %s54 = scalar_lea.smem %s0, 27
  %s55 = sld [smem:[%s54]]
  %s56 = scalar_lea.smem %s0, 28
  %s57 = sld [smem:[%s56]]
  %s58 = scalar_lea.smem %s0, 29
  %s59 = sld [smem:[%s58]]
  %s60 = scalar_lea.smem %s0, 30
  %s61 = sld [smem:[%s60]]
  %s62 = scalar_lea.smem %s0, 31
  %s63 = sld [smem:[%s62]]
  %s64 = scalar_lea.smem %s0, 32
  %s65 = sld [smem:[%s64]]
  %s66 = scalar_lea.smem %s0, 33
  %s67 = sld [smem:[%s66]]
  %s68 = scalar_lea.smem %s0, 34
  %s69 = sld [smem:[%s68]]
  %s70 = scalar_lea.smem %s0, 35
  %s71 = sld [smem:[%s70]]
  %s72 = scalar_lea.smem %s0, 36
  %s73 = sld [smem:[%s72]]
  %s74 = scalar_lea.smem %s0, 37
  %s75 = sld [smem:[%s74]]
  %s76 = scalar_lea.smem %s0, 38
  %s77 = sld [smem:[%s76]]
  %s78 = scalar_lea.smem %s0, 39
  %s79 = sld [smem:[%s78]]
  %s80 = scalar_lea.smem %s0, 40
  %s81 = sld [smem:[%s80]]
  %s82 = scalar_lea.smem %s0, 41
  %s83 = sld [smem:[%s82]]
  %s84 = scalar_lea.smem %s0, 42
  %s85 = sld [smem:[%s84]]
  %s86 = scalar_lea.smem %s0, 43
  %s87 = sld [smem:[%s86]]
  %s88 = scalar_lea.smem %s0, 44
  %s89 = sld [smem:[%s88]]
  %s90 = scalar_lea.smem %s0, 45
  %s91 = sld [smem:[%s90]]
  %92 = xla_tuple %s89, %s91
  %s93 = sld [smem:[#allocation0]]
  $region210: #{tpu_custom_call.1} parent=0
    _
  %s95 = ssub.s32 1, %s93
  %s96 = scalar_select 0, %s95, %s93
  %v97 = vstv %s15
  %98 = vst [vmem:[#allocation2] sm:$0x1] %v97
  %v99 = vstv %s19
  %100 = vst [vmem:[#allocation3] sm:$0x1] %v99
  $region1: #{tpu_custom_call.1} parent=0
    #allocation4 [shape = 'u8[196608]{0}', space=vmem, size = 0x30000, scoped, tag = 'input window, operand 10, single buffered']
    #allocation5 [shape = 's32[1]{0}', space=sflag, size = 0x4, scoped, tag = 'scoped memory for tpu_custom_call.1']
    #allocation6 [shape = 's32[1]{0}', space=sflag, size = 0x4, scoped, tag = 'scoped memory for tpu_custom_call.1']
    #allocation7 [shape = 's32[1]{0}', space=sflag, size = 0x4, scoped, tag = 'scoped memory for tpu_custom_call.1']
    #allocation8 [shape = 'u8[196608]{0}', space=vmem, size = 0x30000, scoped, tag = 'input window, operand 12, single buffered']
    #allocation9 [shape = 's32[1]{0}', space=sflag, size = 0x4, scoped, tag = 'scoped memory for tpu_custom_call.1']
    #allocation10 [shape = 'u8[196608]{0}', space=vmem, size = 0x30000, scoped, tag = 'input window, operand 14, single buffered']
    #allocation11 [shape = 'u8[196608]{0}', space=vmem, size = 0x30000, scoped, tag = 'input window, operand 16, single buffered']
    #allocation12 [shape = 's32[1]{0}', space=sflag, size = 0x4, scoped, tag = 'scoped memory for tpu_custom_call.1']
    #allocation13 [shape = 'u8[24576]{0}', space=vmem, size = 0x6000, scoped, tag = 'output window, operand 0, single buffered']
    #allocation14 [shape = 'u8[512]{0}', space=smem, size = 0x200, scoped, tag = 'output window, operand 1, single buffered']
    %101 = vsyncpa [#allocation5], 0
    %102 = vsyncpa [#allocation9], 0
    %103 = vsyncpa [#allocation12], 0
    %104 = vsyncpa [#allocation6], 0
    %105 = vsyncpa [#allocation7], 0
    // Predicated region
    $region2: #{tpu_custom_call.1} parent=1 // pred_check
      _
    $region3: #{tpu_custom_call.1} parent=1 // pred_check_branch
      %107 = sbr.rel (0) target = $region5
    $region4: #{tpu_custom_call.1} parent=1 // pred_region
      _
    $region5: #{tpu_custom_call.1} parent=1 // pred_fallthru
      _
    // Predicated region
    $region6: #{tpu_custom_call.1} parent=1 // pred_check
      _
    $region7: #{tpu_custom_call.1} parent=1 // pred_check_branch
      %109 = sbr.rel (0) target = $region9
    $region8: #{tpu_custom_call.1} parent=1 // pred_region
      _
    $region9: #{tpu_custom_call.1} parent=1 // pred_fallthru
      _
    // Predicated region
    $region10: #{tpu_custom_call.1} parent=1 // pred_check
      _
    $region11: #{tpu_custom_call.1} parent=1 // pred_check_branch
      %111 = sbr.rel (0) target = $region13
    $region12: #{tpu_custom_call.1} parent=1 // pred_region
      _
    $region13: #{tpu_custom_call.1} parent=1 // pred_fallthru
      _
    // Predicated region
    $region14: #{tpu_custom_call.1} parent=1 // pred_check
      _
    $region15: #{tpu_custom_call.1} parent=1 // pred_check_branch
      %113 = sbr.rel (0) target = $region17
    $region16: #{tpu_custom_call.1} parent=1 // pred_region
      _
    $region17: #{tpu_custom_call.1} parent=1 // pred_fallthru
      _
    // Predicated region
    $region18: #{tpu_custom_call.1} parent=1 // pred_check
      _
    $region19: #{tpu_custom_call.1} parent=1 // pred_check_branch
      %115 = sbr.rel (0) target = $region21
    $region20: #{tpu_custom_call.1} parent=1 // pred_region
      _
    $region21: #{tpu_custom_call.1} parent=1 // pred_fallthru
      _
    // Predicated region
    $region22: #{tpu_custom_call.1} parent=1 // pred_check
      _
    $region23: #{tpu_custom_call.1} parent=1 // pred_check_branch
      %117 = sbr.rel (0) target = $region25
    $region24: #{tpu_custom_call.1} parent=1 // pred_region
      _
    $region25: #{tpu_custom_call.1} parent=1 // pred_fallthru
      _
    // Predicated region
    $region26: #{tpu_custom_call.1} parent=1 // pred_check
      _
    $region27: #{tpu_custom_call.1} parent=1 // pred_check_branch
      %119 = sbr.rel (0) target = $region29
    $region28: #{tpu_custom_call.1} parent=1 // pred_region
      _
    $region29: #{tpu_custom_call.1} parent=1 // pred_fallthru
      _
    // Predicated region
    $region30: #{tpu_custom_call.1} parent=1 // pred_check
      _
    $region31: #{tpu_custom_call.1} parent=1 // pred_check_branch
      %121 = sbr.rel (0) target = $region33
    $region32: #{tpu_custom_call.1} parent=1 // pred_region
      _
    $region33: #{tpu_custom_call.1} parent=1 // pred_fallthru
      _
    // Predicated region
    $region34: #{tpu_custom_call.1} parent=1 // pred_check
      _
    $region35: #{tpu_custom_call.1} parent=1 // pred_check_branch
      %123 = sbr.rel (0) target = $region37
    $region36: #{tpu_custom_call.1} parent=1 // pred_region
      _
    $region37: #{tpu_custom_call.1} parent=1 // pred_fallthru
      _
    // Predicated region
    $region38: #{tpu_custom_call.1} parent=1 // pred_check
      _
    $region39: #{tpu_custom_call.1} parent=1 // pred_check_branch
      %125 = sbr.rel (0) target = $region41
    $region40: #{tpu_custom_call.1} parent=1 // pred_region
      _
    $region41: #{tpu_custom_call.1} parent=1 // pred_fallthru
      _
    // Predicated region
    $region42: #{tpu_custom_call.1} parent=1 // pred_check
      _
    $region43: #{tpu_custom_call.1} parent=1 // pred_check_branch
      %127 = sbr.rel (0) target = $region45
    $region44: #{tpu_custom_call.1} parent=1 // pred_region
      %129 = vsyncadd [#allocation5], 0
      %s130 = sshll.u32 %s21, 4
      %s131 = int_to_ptr.hbm [resolvable:$true] %s130
      %s132 = sshll.u32 [#allocation4], 4
      %s133 = int_to_ptr.vmem [resolvable:$true] %s132
      %138 = dma.hbm_to_vmem [thread:$0]  %s131, 6144, %s133, [#allocation5], 384, 384, 24
    $region45: #{tpu_custom_call.1} parent=1 // pred_fallthru
      _
    // Predicated region
    $region46: #{tpu_custom_call.1} parent=1 // pred_check
      _
    $region47: #{tpu_custom_call.1} parent=1 // pred_check_branch
      %140 = sbr.rel (0) target = $region49
    $region48: #{tpu_custom_call.1} parent=1 // pred_region
      _
    $region49: #{tpu_custom_call.1} parent=1 // pred_fallthru
      _
    // Predicated region
    $region50: #{tpu_custom_call.1} parent=1 // pred_check
      _
    $region51: #{tpu_custom_call.1} parent=1 // pred_check_branch
      %142 = sbr.rel (0) target = $region53
    $region52: #{tpu_custom_call.1} parent=1 // pred_region
      %144 = vsyncadd [#allocation9], 0
      %s145 = sshll.u32 %s25, 4
      %s146 = int_to_ptr.hbm [resolvable:$true] %s145
      %s147 = sshll.u32 [#allocation8], 4
      %s148 = int_to_ptr.vmem [resolvable:$true] %s147
      %153 = dma.hbm_to_vmem [thread:$0]  %s146, 6144, %s148, [#allocation9], 384, 384, 24
    $region53: #{tpu_custom_call.1} parent=1 // pred_fallthru
      _
    // Predicated region
    $region54: #{tpu_custom_call.1} parent=1 // pred_check
      _
    $region55: #{tpu_custom_call.1} parent=1 // pred_check_branch
      %155 = sbr.rel (0) target = $region57
    $region56: #{tpu_custom_call.1} parent=1 // pred_region
      _
    $region57: #{tpu_custom_call.1} parent=1 // pred_fallthru
      _
    // Predicated region
    $region58: #{tpu_custom_call.1} parent=1 // pred_check
      _
    $region59: #{tpu_custom_call.1} parent=1 // pred_check_branch
      %157 = sbr.rel (0) target = $region61
    $region60: #{tpu_custom_call.1} parent=1 // pred_region
      %159 = vsyncadd [#allocation9], 0
      %s160 = sshll.u32 %s29, 4
      %s161 = int_to_ptr.hbm [resolvable:$true] %s160
      %s162 = sshll.u32 [#allocation10], 4
      %s163 = int_to_ptr.vmem [resolvable:$true] %s162
      %168 = dma.hbm_to_vmem [thread:$0]  %s161, 6144, %s163, [#allocation9], 384, 384, 24
    $region61: #{tpu_custom_call.1} parent=1 // pred_fallthru
      _
    // Predicated region
    $region62: #{tpu_custom_call.1} parent=1 // pred_check
      _
    $region63: #{tpu_custom_call.1} parent=1 // pred_check_branch
      %170 = sbr.rel (0) target = $region65
    $region64: #{tpu_custom_call.1} parent=1 // pred_region
      _
    $region65: #{tpu_custom_call.1} parent=1 // pred_fallthru
      _
    // Predicated region
    $region66: #{tpu_custom_call.1} parent=1 // pred_check
      _
    $region67: #{tpu_custom_call.1} parent=1 // pred_check_branch
      %172 = sbr.rel (0) target = $region69
    $region68: #{tpu_custom_call.1} parent=1 // pred_region
      %174 = vsyncadd [#allocation12], 0
      %s175 = sshll.u32 %s33, 4
      %s176 = int_to_ptr.hbm [resolvable:$true] %s175
      %s177 = sshll.u32 [#allocation11], 4
      %s178 = int_to_ptr.vmem [resolvable:$true] %s177
      %183 = dma.hbm_to_vmem [thread:$0]  %s176, 6144, %s178, [#allocation12], 384, 384, 24
    $region69: #{tpu_custom_call.1} parent=1 // pred_fallthru
      _
    // Predicated region
    $region70: #{tpu_custom_call.1} parent=1 // pred_check
      _
    $region71: #{tpu_custom_call.1} parent=1 // pred_check_branch
      %185 = sbr.rel (0) target = $region73
    $region72: #{tpu_custom_call.1} parent=1 // pred_region
      _
    $region73: #{tpu_custom_call.1} parent=1 // pred_fallthru
      _
    // Predicated region
    $region74: #{tpu_custom_call.1} parent=1 // pred_check
      _
    $region75: #{tpu_custom_call.1} parent=1 // pred_check_branch
      %187 = sbr.rel (0) target = $region77
    $region76: #{tpu_custom_call.1} parent=1 // pred_region
      _
    $region77: #{tpu_custom_call.1} parent=1 // pred_fallthru
      _
    // Predicated region
    $region78: #{tpu_custom_call.1} parent=1 // pred_check
      _
    $region79: #{tpu_custom_call.1} parent=1 // pred_check_branch
      %189 = sbr.rel (0) target = $region81
    $region80: #{tpu_custom_call.1} parent=1 // pred_region
      _
    $region81: #{tpu_custom_call.1} parent=1 // pred_fallthru
      _
    // Predicated region
    $region82: #{tpu_custom_call.1} parent=1 // pred_check
      _
    $region83: #{tpu_custom_call.1} parent=1 // pred_check_branch
      %191 = sbr.rel (0) target = $region85
    $region84: #{tpu_custom_call.1} parent=1 // pred_region
      _
    $region85: #{tpu_custom_call.1} parent=1 // pred_fallthru
      _
    // Predicated region
    $region86: #{tpu_custom_call.1} parent=1 // pred_check
      _
    $region87: #{tpu_custom_call.1} parent=1 // pred_check_branch
      %193 = sbr.rel (0) target = $region89
    $region88: #{tpu_custom_call.1} parent=1 // pred_region
      _
    $region89: #{tpu_custom_call.1} parent=1 // pred_fallthru
      _
    // Predicated region
    $region90: #{tpu_custom_call.1} parent=1 // pred_check
      _
    $region91: #{tpu_custom_call.1} parent=1 // pred_check_branch
      %195 = sbr.rel (0) target = $region93
    $region92: #{tpu_custom_call.1} parent=1 // pred_region
      _
    $region93: #{tpu_custom_call.1} parent=1 // pred_fallthru
      _
    // Predicated region
    $region94: #{tpu_custom_call.1} parent=1 // pred_check
      _
    $region95: #{tpu_custom_call.1} parent=1 // pred_check_branch
      %197 = sbr.rel (0) target = $region97
    $region96: #{tpu_custom_call.1} parent=1 // pred_region
      _
    $region97: #{tpu_custom_call.1} parent=1 // pred_fallthru
      _
    // Predicated region
    $region98: #{tpu_custom_call.1} parent=1 // pred_check
      _
    $region99: #{tpu_custom_call.1} parent=1 // pred_check_branch
      %199 = sbr.rel (0) target = $region101
    $region100: #{tpu_custom_call.1} parent=1 // pred_region
      _
    $region101: #{tpu_custom_call.1} parent=1 // pred_fallthru
      _
    // Predicated region
    $region102: #{tpu_custom_call.1} parent=1 // pred_check
      _
    $region103: #{tpu_custom_call.1} parent=1 // pred_check_branch
      %201 = sbr.rel (0) target = $region105
    $region104: #{tpu_custom_call.1} parent=1 // pred_region
      _
    $region105: #{tpu_custom_call.1} parent=1 // pred_fallthru
      _
    // Predicated region
    $region106: #{tpu_custom_call.1} parent=1 // pred_check
      _
    $region107: #{tpu_custom_call.1} parent=1 // pred_check_branch
      %203 = sbr.rel (0) target = $region109
    $region108: #{tpu_custom_call.1} parent=1 // pred_region
      _
    $region109: #{tpu_custom_call.1} parent=1 // pred_fallthru
      _
    // Predicated region
    $region110: #{tpu_custom_call.1} parent=1 // pred_check
      _
    $region111: #{tpu_custom_call.1} parent=1 // pred_check_branch
      %205 = sbr.rel (0) target = $region113
    $region112: #{tpu_custom_call.1} parent=1 // pred_region
      _
    $region113: #{tpu_custom_call.1} parent=1 // pred_fallthru
      _
    // Predicated region
    $region114: #{tpu_custom_call.1} parent=1 // pred_check
      _
    $region115: #{tpu_custom_call.1} parent=1 // pred_check_branch
      %207 = sbr.rel (0) target = $region117
    $region116: #{tpu_custom_call.1} parent=1 // pred_region
      _
    $region117: #{tpu_custom_call.1} parent=1 // pred_fallthru
      _
    // Predicated region
    $region118: #{tpu_custom_call.1} parent=1 // pred_check
      _
    $region119: #{tpu_custom_call.1} parent=1 // pred_check_branch
      %209 = sbr.rel (0) target = $region121
    $region120: #{tpu_custom_call.1} parent=1 // pred_region
      _
    $region121: #{tpu_custom_call.1} parent=1 // pred_fallthru
      _
    // Predicated region
    $region122: #{tpu_custom_call.1} parent=1 // pred_check
      _
    $region123: #{tpu_custom_call.1} parent=1 // pred_check_branch
      %211 = sbr.rel (0) target = $region125
    $region124: #{tpu_custom_call.1} parent=1 // pred_region
      _
    $region125: #{tpu_custom_call.1} parent=1 // pred_fallthru
      _
    // Predicated region
    $region126: #{tpu_custom_call.1} parent=1 // pred_check
      _
    $region127: #{tpu_custom_call.1} parent=1 // pred_check_branch
      %213 = sbr.rel (0) target = $region129
    $region128: #{tpu_custom_call.1} parent=1 // pred_region
      _
    $region129: #{tpu_custom_call.1} parent=1 // pred_fallthru
      _
    // Predicated region
    $region130: #{tpu_custom_call.1} parent=1 // pred_check
      _
    $region131: #{tpu_custom_call.1} parent=1 // pred_check_branch
      %215 = sbr.rel (0) target = $region133
    $region132: #{tpu_custom_call.1} parent=1 // pred_region
      _
    $region133: #{tpu_custom_call.1} parent=1 // pred_fallthru
      _
    // Predicated region
    $region134: #{tpu_custom_call.1} parent=1 // pred_check
      _
    $region135: #{tpu_custom_call.1} parent=1 // pred_check_branch
      %217 = sbr.rel (0) target = $region137
    $region136: #{tpu_custom_call.1} parent=1 // pred_region
      _
    $region137: #{tpu_custom_call.1} parent=1 // pred_fallthru
      _
    // Predicated region
    $region138: #{tpu_custom_call.1} parent=1 // pred_check
      _
    $region139: #{tpu_custom_call.1} parent=1 // pred_check_branch
      %219 = sbr.rel (0) target = $region141
    $region140: #{tpu_custom_call.1} parent=1 // pred_region
      _
    $region141: #{tpu_custom_call.1} parent=1 // pred_fallthru
      _
    // Predicated region
    $region142: #{tpu_custom_call.1} parent=1 // pred_check
      _
    $region143: #{tpu_custom_call.1} parent=1 // pred_check_branch
      %221 = sbr.rel (0) target = $region145
    $region144: #{tpu_custom_call.1} parent=1 // pred_region
      _
    $region145: #{tpu_custom_call.1} parent=1 // pred_fallthru
      _
    // Predicated region
    $region146: #{tpu_custom_call.1} parent=1 // pred_check
      _
    $region147: #{tpu_custom_call.1} parent=1 // pred_check_branch
      %223 = sbr.rel (0) target = $region149
    $region148: #{tpu_custom_call.1} parent=1 // pred_region
      _
    $region149: #{tpu_custom_call.1} parent=1 // pred_fallthru
      _
    // Predicated region
    $region150: #{tpu_custom_call.1} parent=1 // pred_check
      _
    $region151: #{tpu_custom_call.1} parent=1 // pred_check_branch
      %225 = sbr.rel (0) target = $region153
    $region152: #{tpu_custom_call.1} parent=1 // pred_region
      _
    $region153: #{tpu_custom_call.1} parent=1 // pred_fallthru
      _
    // Predicated region
    $region154: #{tpu_custom_call.1} parent=1 // pred_check
      _
    $region155: #{tpu_custom_call.1} parent=1 // pred_check_branch
      %227 = sbr.rel (0) target = $region157
    $region156: #{tpu_custom_call.1} parent=1 // pred_region
      _
    $region157: #{tpu_custom_call.1} parent=1 // pred_fallthru
      _
    // Predicated region
    $region158: #{tpu_custom_call.1} parent=1 // pred_check
      _
    $region159: #{tpu_custom_call.1} parent=1 // pred_check_branch
      %229 = sbr.rel (0) target = $region161
    $region160: #{tpu_custom_call.1} parent=1 // pred_region
      _
    $region161: #{tpu_custom_call.1} parent=1 // pred_fallthru
      _
    // Predicated region
    $region162: #{tpu_custom_call.1} parent=1 // pred_check
      _
    $region163: #{tpu_custom_call.1} parent=1 // pred_check_branch
      %231 = sbr.rel (0) target = $region165
    $region164: #{tpu_custom_call.1} parent=1 // pred_region
      _
    $region165: #{tpu_custom_call.1} parent=1 // pred_fallthru
      _
    // Predicated region
    $region166: #{tpu_custom_call.1} parent=1 // pred_check
      _
    $region167: #{tpu_custom_call.1} parent=1 // pred_check_branch
      %233 = sbr.rel (0) target = $region169
    $region168: #{tpu_custom_call.1} parent=1 // pred_region
      _
    $region169: #{tpu_custom_call.1} parent=1 // pred_fallthru
      _
    // Predicated region
    $region170: #{tpu_custom_call.1} parent=1 // pred_check
      _
    $region171: #{tpu_custom_call.1} parent=1 // pred_check_branch
      %235 = sbr.rel (0) target = $region173
    $region172: #{tpu_custom_call.1} parent=1 // pred_region
      _
    $region173: #{tpu_custom_call.1} parent=1 // pred_fallthru
      _
    // Predicated region
    $region174: #{tpu_custom_call.1} parent=1 // pred_check
      _
    $region175: #{tpu_custom_call.1} parent=1 // pred_check_branch
      %237 = sbr.rel (0) target = $region177
    $region176: #{tpu_custom_call.1} parent=1 // pred_region
      _
    $region177: #{tpu_custom_call.1} parent=1 // pred_fallthru
      _
    // Predicated region
    $region178: #{tpu_custom_call.1} parent=1 // pred_check
      _
    $region179: #{tpu_custom_call.1} parent=1 // pred_check_branch
      %239 = sbr.rel (0) target = $region181
    $region180: #{tpu_custom_call.1} parent=1 // pred_region
      %241 = dma.done [#allocation5], 6144
    $region181: #{tpu_custom_call.1} parent=1 // pred_fallthru
      _
    // Predicated region
    $region182: #{tpu_custom_call.1} parent=1 // pred_check
      _
    $region183: #{tpu_custom_call.1} parent=1 // pred_check_branch
      %243 = sbr.rel (0) target = $region185
    $region184: #{tpu_custom_call.1} parent=1 // pred_region
      %245 = dma.done [#allocation9], 6144
    $region185: #{tpu_custom_call.1} parent=1 // pred_fallthru
      _
    // Predicated region
    $region186: #{tpu_custom_call.1} parent=1 // pred_check
      _
    $region187: #{tpu_custom_call.1} parent=1 // pred_check_branch
      %247 = sbr.rel (0) target = $region189
    $region188: #{tpu_custom_call.1} parent=1 // pred_region
      %249 = dma.done [#allocation9], 6144
    $region189: #{tpu_custom_call.1} parent=1 // pred_fallthru
      _
    // Predicated region
    $region190: #{tpu_custom_call.1} parent=1 // pred_check
      _
    $region191: #{tpu_custom_call.1} parent=1 // pred_check_branch
      %251 = sbr.rel (0) target = $region193
    $region192: #{tpu_custom_call.1} parent=1 // pred_region
      %253 = dma.done [#allocation12], 6144
    $region193: #{tpu_custom_call.1} parent=1 // pred_fallthru
      _
    %v254 = vld [vmem:[%s1] sm:$0xff]
    %v255 = vld [vmem:[%s1 + $0x8] sm:$0xff]
    %v256 = vld [vmem:[%s3] sm:$0xff]
    %v257 = vld [vmem:[%s5] sm:$0x1f]
    %v258 = vld [vmem:[%s7] sm:$0xff]
    %v259 = vld [vmem:[%s7 + $0x8] sm:$0xf]
    %v260 = vld [vmem:[%s9] sm:$0xff]
    %v261 = vld [vmem:[%s9 + $0x8] sm:$0xff]
    %v262 = vld [vmem:[%s9 + $0x10] sm:$0xff]
    %v263 = vld [vmem:[%s9 + $0x18] sm:$0xff]
    %v264 = vld [vmem:[%s9 + $0x20] sm:$0xff]
    %v265 = vld [vmem:[%s9 + $0x28] sm:$0xff]
    %v266 = vld [vmem:[%s9 + $0x30] sm:$0xff]
    %v267 = vld [vmem:[%s9 + $0x38] sm:$0xff]
    %v268 = vld [vmem:[%s9 + $0x40] sm:$0xff]
    %v269 = vld [vmem:[%s9 + $0x48] sm:$0xff]
    %v270 = vld [vmem:[%s9 + $0x50] sm:$0xff]
    %v271 = vld [vmem:[%s9 + $0x58] sm:$0xff]
    %v272 = vld [vmem:[%s9 + $0x60] sm:$0xff]
    %v273 = vld [vmem:[%s9 + $0x68] sm:$0xff]
    %v274 = vld [vmem:[%s9 + $0x70] sm:$0xff]
    %v275 = vld [vmem:[%s9 + $0x78] sm:$0xff]
    %v276 = vld [vmem:[%s11] sm:$0x1]
    %v278 = vperm.slane %v276, 0
    %280 = vmatpush.msra.mxu0 %v275
    %281 = vmatpush.msra.mxu0 %v274
    %282 = vmatpush.msra.mxu0 %v273
    %283 = vmatpush.msra.mxu0 %v272
    %284 = vmatpush.msra.mxu0 %v271
    %285 = vmatpush.msra.mxu0 %v270
    %286 = vmatpush.msra.mxu0 %v269
    %287 = vmatpush.msra.mxu0 %v268
    %288 = vmatpush.msra.mxu0 %v267
    %289 = vmatpush.msra.mxu0 %v266
    %290 = vmatpush.msra.mxu0 %v265
    %291 = vmatpush.msra.mxu0 %v264
    %292 = vmatpush.msra.mxu0 %v263
    %293 = vmatpush.msra.mxu0 %v262
    %294 = vmatpush.msra.mxu0 %v261
    %295 = vmatpush.msra.mxu0 %v260
    %296 = vmatmul.f32.gmra.mxu0 %v254
    %v297 = vpop.f32.mrf.mxu0
    %v298 = vadd.f32 %v278, %v297
    %299 = vmatmul.f32.gmra.mxu0 %v255
    %v300 = vpop.f32.mrf.mxu0
    %v301 = vadd.f32 %v278, %v300
    %302 = vdwg.mxu0
    %303 = vmatpush.msra.mxu0 %v275
    %304 = vmatpush.msra.mxu0 %v274
    %305 = vmatpush.msra.mxu0 %v273
    %306 = vmatpush.msra.mxu0 %v272
    %307 = vmatpush.msra.mxu0 %v271
    %308 = vmatpush.msra.mxu0 %v270
    %309 = vmatpush.msra.mxu0 %v269
    %310 = vmatpush.msra.mxu0 %v268
    %311 = vmatpush.msra.mxu0 %v267
    %312 = vmatpush.msra.mxu0 %v266
    %313 = vmatpush.msra.mxu0 %v265
    %314 = vmatpush.msra.mxu0 %v264
    %315 = vmatpush.msra.mxu0 %v263
    %316 = vmatpush.msra.mxu0 %v262
    %317 = vmatpush.msra.mxu0 %v261
    %318 = vmatpush.msra.mxu0 %v260
    %319 = vmatmul.f32.gmra.mxu0 %v256
    %v320 = vpop.f32.mrf.mxu0
    %v321 = vadd.f32 %v278, %v320
    %322 = vdwg.mxu0
    %323 = vmatpush.msra.mxu0 %v275
    %324 = vmatpush.msra.mxu0 %v274
    %325 = vmatpush.msra.mxu0 %v273
    %326 = vmatpush.msra.mxu0 %v272
    %327 = vmatpush.msra.mxu0 %v271
    %328 = vmatpush.msra.mxu0 %v270
    %329 = vmatpush.msra.mxu0 %v269
    %330 = vmatpush.msra.mxu0 %v268
    %331 = vmatpush.msra.mxu0 %v267
    %332 = vmatpush.msra.mxu0 %v266
    %333 = vmatpush.msra.mxu0 %v265
    %334 = vmatpush.msra.mxu0 %v264
    %335 = vmatpush.msra.mxu0 %v263
    %336 = vmatpush.msra.mxu0 %v262
    %337 = vmatpush.msra.mxu0 %v261
    %338 = vmatpush.msra.mxu0 %v260
    %339 = vmatmul.f32.gmra.mxu0 %v257
    %v340 = vpop.f32.mrf.mxu0
    %v341 = vadd.f32 %v278, %v340
    %342 = vdwg.mxu0
    %343 = vmatpush.msra.mxu0 %v275
    %344 = vmatpush.msra.mxu0 %v274
    %345 = vmatpush.msra.mxu0 %v273
    %346 = vmatpush.msra.mxu0 %v272
    %347 = vmatpush.msra.mxu0 %v271
    %348 = vmatpush.msra.mxu0 %v270
    %349 = vmatpush.msra.mxu0 %v269
    %350 = vmatpush.msra.mxu0 %v268
    %351 = vmatpush.msra.mxu0 %v267
    %352 = vmatpush.msra.mxu0 %v266
    %353 = vmatpush.msra.mxu0 %v265
    %354 = vmatpush.msra.mxu0 %v264
    %355 = vmatpush.msra.mxu0 %v263
    %356 = vmatpush.msra.mxu0 %v262
    %357 = vmatpush.msra.mxu0 %v261
    %358 = vmatpush.msra.mxu0 %v260
    %359 = vmatmul.f32.gmra.mxu0 %v258
    %v360 = vpop.f32.mrf.mxu0
    %v361 = vadd.f32 %v278, %v360
    %362 = vmatmul.f32.gmra.mxu0 %v259
    %v363 = vpop.f32.mrf.mxu0
    %v364 = vadd.f32 %v278, %v363
    %365 = vdwg.mxu0
    %v366 = vld [vmem:[%s43] sm:$0xff]
    %v367 = vld [vmem:[%s43 + $0x8] sm:$0xff]
    %v368 = vld [vmem:[%s41] sm:$0xff]
    %v369 = vld [vmem:[%s41 + $0x8] sm:$0xf]
    %v370 = vld [vmem:[%s37] sm:$0xff]
    %v371 = vld [vmem:[%s37 + $0x8] sm:$0xff]
    %v372 = vld [vmem:[%s37 + $0x10] sm:$0xff]
    %v373 = vld [vmem:[%s37 + $0x18] sm:$0xff]
    %v374 = vld [vmem:[%s37 + $0x20] sm:$0xff]
    %v375 = vld [vmem:[%s37 + $0x28] sm:$0xff]
    %v376 = vld [vmem:[%s37 + $0x30] sm:$0xff]
    %v377 = vld [vmem:[%s37 + $0x38] sm:$0xff]
    %v378 = vld [vmem:[%s37 + $0x40] sm:$0xff]
    %v379 = vld [vmem:[%s37 + $0x48] sm:$0xff]
    %v380 = vld [vmem:[%s37 + $0x50] sm:$0xff]
    %v381 = vld [vmem:[%s37 + $0x58] sm:$0xff]
    %v382 = vld [vmem:[%s37 + $0x60] sm:$0xff]
    %v383 = vld [vmem:[%s37 + $0x68] sm:$0xff]
    %v384 = vld [vmem:[%s37 + $0x70] sm:$0xff]
    %v385 = vld [vmem:[%s37 + $0x78] sm:$0xff]
    %v386 = vld [vmem:[%s39] sm:$0x1]
    %v388 = vperm.slane %v386, 0
    %390 = vmatpush.msra.mxu0 %v385
    %391 = vmatpush.msra.mxu0 %v384
    %392 = vmatpush.msra.mxu0 %v383
    %393 = vmatpush.msra.mxu0 %v382
    %394 = vmatpush.msra.mxu0 %v381
    %395 = vmatpush.msra.mxu0 %v380
    %396 = vmatpush.msra.mxu0 %v379
    %397 = vmatpush.msra.mxu0 %v378
    %398 = vmatpush.msra.mxu0 %v377
    %399 = vmatpush.msra.mxu0 %v376
    %400 = vmatpush.msra.mxu0 %v375
    %401 = vmatpush.msra.mxu0 %v374
    %402 = vmatpush.msra.mxu0 %v373
    %403 = vmatpush.msra.mxu0 %v372
    %404 = vmatpush.msra.mxu0 %v371
    %405 = vmatpush.msra.mxu0 %v370
    %406 = vmatmul.f32.gmra.mxu0 %v254
    %v407 = vpop.f32.mrf.mxu0
    %v408 = vadd.f32 %v388, %v407
    %409 = vmatmul.f32.gmra.mxu0 %v255
    %v410 = vpop.f32.mrf.mxu0
    %v411 = vadd.f32 %v388, %v410
    %412 = vdwg.mxu0
    %vm413 = vcmask 39936
    %v414 = vsel %vm413, %v408, -inf
    %415 = vmax.xlane.f32.xlu0 %v414
    %v416 = vpop.xlane.xlu0 %415
    %v417 = vsel %vm413, %v411, -inf
    %418 = vmax.xlane.f32.xlu0 %v417
    %v419 = vpop.xlane.xlu0 %418
    %v420 = vsub.f32 %v408, %v416
    %v421 = vsub.f32 %v411, %v419
    %v422 = vmul.f32 %v420, 1.442695
    %v423 = vpow.pop %v422
    %v424 = vmul.f32 %v421, 1.442695
    %v425 = vpow.pop %v424
    %v426 = vsel %vm413, %v423, 0.0
    %427 = vadd.xlane.f32.xlu0 %v426
    %v428 = vpop.xlane.xlu0 %427
    %v429 = vsel %vm413, %v425, 0.0
    %430 = vadd.xlane.f32.xlu0 %v429
    %v431 = vpop.xlane.xlu0 %430
    %v432 = vrcp.pop %v428
    %v433 = vmul.f32 %v428, %v432
    %v434 = vsub.f32 1.0, %v433
    %v435 = vmul.f32 %v432, %v434
    %v436 = vadd.f32 %v432, %v435
    %vm437 = vweird.f32 %v428
    %vm438 = vweird.f32 %v432
    %vm439 = vmor %vm437, %vm438
    %v440 = vsel %vm439, %v432, %v436
    %v441 = vand.u32 2147483647, %v428
    %vm442 = vcmp.eq.f32.partialorder %v441, 8.507059e+37
    %v443 = vand.u32 %v428, 2147483648
    %v444 = vor.u32 1.1754944e-38, %v443
    %v445 = vsel %vm442, %v444, %v440
    %v446 = vmul.f32 %v423, %v445
    %v447 = vrcp.pop %v431
    %v448 = vmul.f32 %v431, %v447
    %v449 = vsub.f32 1.0, %v448
    %v450 = vmul.f32 %v447, %v449
    %v451 = vadd.f32 %v447, %v450
    %vm452 = vweird.f32 %v431
    %vm453 = vweird.f32 %v447
    %vm454 = vmor %vm452, %vm453
    %v455 = vsel %vm454, %v447, %v451
    %v456 = vand.u32 2147483647, %v431
    %vm457 = vcmp.eq.f32.partialorder %v456, 8.507059e+37
    %v458 = vand.u32 %v431, 2147483648
    %v459 = vor.u32 1.1754944e-38, %v458
    %v460 = vsel %vm457, %v459, %v455
    %v461 = vmul.f32 %v425, %v460
    %v462 = vmul.f32 %v446, 1.442695
    %v463 = vpow.pop %v462
    %v464 = vmul.f32 %v461, 1.442695
    %v465 = vpow.pop %v464
    %v466 = vsel %vm413, %v463, 0.0
    %467 = vadd.xlane.f32.xlu0 %v466
    %v468 = vpop.xlane.xlu0 %467
    %v469 = vsel %vm413, %v465, 0.0
    %470 = vadd.xlane.f32.xlu0 %v469
    %v471 = vpop.xlane.xlu0 %470
    %v472 = vlog2.pop %v468
    %v473 = vmul.f32 %v472, 0.6931472
    %v474 = vlog2.pop %v471
    %v475 = vmul.f32 %v474, 0.6931472
    %v476 = vsub.f32 %v446, %v473
    %v477 = vsub.f32 %v461, %v475
    %v478 = vmul.f32 %v366, %v476
    %v479 = vmul.f32 %v367, %v477
    %v480 = vsel %vm413, %v478, 0.0
    %v481 = vsel %vm413, %v479, 0.0
    %v482 = vadd.f32 %v480, %v481
    %483 = vadd.xlane.f32.xlu0 %v482
    %v484 = vpop.xlane.xlu0 %483
    %v485 = vrot.slane %v484, 4
    %v486 = vadd.f32 %v484, %v485
    %v487 = vrot.slane %v486, 2
    %v488 = vadd.f32 %v486, %v487
    %v489 = vrot.slane %v488, 1
    %v490 = vadd.f32 %v488, %v489
    %s491 = vtos %v490
    %s492 = ssub.f32 0.0, %s491
    %v493 = vrcp.pop 16.0
    %v494 = vmul.f32 16.0, %v493
    %v495 = vsub.f32 1.0, %v494
    %v496 = vmul.f32 %v493, %v495
    %v497 = vadd.f32 %v493, %v496
    %vm498 = vweird.f32 %v493
    %v499 = vsel %vm498, %v493, %v497
    %s500 = vtos %v499
    %s501 = smul.f32 %s492, %s500
    %v502 = vmul.f32 %v446, %v366
    %v503 = vmul.f32 %v461, %v367
    %v504 = vsel %vm413, %v502, 0.0
    %505 = vadd.xlane.f32.xlu0 %v504
    %v506 = vpop.xlane.xlu0 %505
    %v507 = vsel %vm413, %v503, 0.0
    %508 = vadd.xlane.f32.xlu0 %v507
    %v509 = vpop.xlane.xlu0 %508
    %v510 = vmul.f32 %v506, %v254
    %v511 = vmul.f32 %v509, %v255
    %vm512 = vcmask 130048
    %v514 = vsel %vm512, %v368, 0
    %v517 = vsel %vm512, %v369, 0
    %519 = vmatpush.msra.mxu0 0.0
    %520 = vmatpush.msra.mxu0 0.0
    %521 = vmatpush.msra.mxu0 0.0
    %522 = vmatpush.msra.mxu0 0.0
    %523 = vmatpush.msra.mxu0 0.0
    %524 = vmatpush.msra.mxu0 0.0
    %525 = vmatpush.msra.mxu0 0.0
    %526 = vmatpush.msra.mxu0 0.0
    %527 = vmatpush.msra.mxu0 0.0
    %528 = vmatpush.msra.mxu0 0.0
    %529 = vmatpush.msra.mxu0 0.0
    %530 = vmatpush.msra.mxu0 0.0
    %531 = vmatpush.msra.mxu0 0.0
    %532 = vmatpush.msra.mxu0 0.0
    %533 = vmatpush.msra.mxu0 %v511
    %534 = vmatpush.msra.mxu0 %v510
    %535 = vmatmul.f32.gmra.mxu0 %v514
    %v536 = vpop.f32.mrf.mxu0
    %v537 = vadd.f32 0.0, %v536
    %538 = vmatmul.f32.gmra.mxu0 %v517
    %v539 = vpop.f32.mrf.mxu0
    %v540 = vadd.f32 0.0, %v539
    %541 = vdwg.mxu0
    %s542 = sadd.f32 %s501, 0.0
    %v543 = vld [vmem:[#allocation4] sm:$0xff]
    %v544 = vld [vmem:[#allocation4 + $0x8] sm:$0xff]
    %v545 = vld [vmem:[#allocation4 + $0x10] sm:$0xff]
    %v546 = vld [vmem:[#allocation4 + $0x18] sm:$0xff]
    %v547 = vld [vmem:[#allocation4 + $0x20] sm:$0xff]
    %v548 = vld [vmem:[#allocation4 + $0x28] sm:$0xff]
    %v549 = vld [vmem:[#allocation4 + $0x30] sm:$0xff]
    %v550 = vld [vmem:[#allocation4 + $0x38] sm:$0xff]
    %v551 = vld [vmem:[#allocation4 + $0x40] sm:$0xff]
    %v552 = vld [vmem:[#allocation4 + $0x48] sm:$0xff]
    %v553 = vld [vmem:[#allocation4 + $0x50] sm:$0xff]
    %v554 = vld [vmem:[#allocation4 + $0x58] sm:$0xff]
    %v555 = vld [vmem:[#allocation4 + $0x60] sm:$0xff]
    %v556 = vld [vmem:[#allocation4 + $0x68] sm:$0xff]
    %v557 = vld [vmem:[#allocation4 + $0x70] sm:$0xff]
    %v558 = vld [vmem:[#allocation4 + $0x78] sm:$0xff]
    %v559 = vld [vmem:[#allocation4 + $0x80] sm:$0xff]
    %v560 = vld [vmem:[#allocation4 + $0x88] sm:$0xff]
    %v561 = vld [vmem:[#allocation4 + $0x90] sm:$0xff]
    %v562 = vld [vmem:[#allocation4 + $0x98] sm:$0xff]
    %v563 = vld [vmem:[#allocation4 + $0xa0] sm:$0xff]
    %v564 = vld [vmem:[#allocation4 + $0xa8] sm:$0xff]
    %v565 = vld [vmem:[#allocation4 + $0xb0] sm:$0xff]
    %v566 = vld [vmem:[#allocation4 + $0xb8] sm:$0xff]
    %v567 = vld [vmem:[#allocation4 + $0xc0] sm:$0xff]
    %v568 = vld [vmem:[#allocation4 + $0xc8] sm:$0xff]
    %v569 = vld [vmem:[#allocation4 + $0xd0] sm:$0xff]
    %v570 = vld [vmem:[#allocation4 + $0xd8] sm:$0xff]
    %v571 = vld [vmem:[#allocation4 + $0xe0] sm:$0xff]
    %v572 = vld [vmem:[#allocation4 + $0xe8] sm:$0xff]
    %v573 = vld [vmem:[#allocation4 + $0xf0] sm:$0xff]
    %v574 = vld [vmem:[#allocation4 + $0xf8] sm:$0xff]
    %v575 = vld [vmem:[#allocation4 + $0x100] sm:$0xff]
    %v576 = vld [vmem:[#allocation4 + $0x108] sm:$0xff]
    %v577 = vld [vmem:[#allocation4 + $0x110] sm:$0xff]
    %v578 = vld [vmem:[#allocation4 + $0x118] sm:$0xff]
    %v579 = vld [vmem:[#allocation4 + $0x120] sm:$0xff]
    %v580 = vld [vmem:[#allocation4 + $0x128] sm:$0xff]
    %v581 = vld [vmem:[#allocation4 + $0x130] sm:$0xff]
    %v582 = vld [vmem:[#allocation4 + $0x138] sm:$0xff]
    %v583 = vld [vmem:[#allocation4 + $0x140] sm:$0xff]
    %v584 = vld [vmem:[#allocation4 + $0x148] sm:$0xff]
    %v585 = vld [vmem:[#allocation4 + $0x150] sm:$0xff]
    %v586 = vld [vmem:[#allocation4 + $0x158] sm:$0xff]
    %v587 = vld [vmem:[#allocation4 + $0x160] sm:$0xff]
    %v588 = vld [vmem:[#allocation4 + $0x168] sm:$0xff]
    %v589 = vld [vmem:[#allocation4 + $0x170] sm:$0xff]
    %v590 = vld [vmem:[#allocation4 + $0x178] sm:$0xff]
    %v591 = vld [vmem:[%s23] sm:$0x7]
    %v593 = vperm.slane %v591, 0
    %v594 = vperm.slane %v591, 1
    %v595 = vperm.slane %v591, 2
    %599 = vmatpush.msra.mxu0 %v588
    %600 = vmatpush.msra.mxu0 %v585
    %601 = vmatpush.msra.mxu0 %v582
    %602 = vmatpush.msra.mxu0 %v579
    %603 = vmatpush.msra.mxu0 %v576
    %604 = vmatpush.msra.mxu0 %v573
    %605 = vmatpush.msra.mxu0 %v570
    %606 = vmatpush.msra.mxu0 %v567
    %607 = vmatpush.msra.mxu0 %v564
    %608 = vmatpush.msra.mxu0 %v561
    %609 = vmatpush.msra.mxu0 %v558
    %610 = vmatpush.msra.mxu0 %v555
    %611 = vmatpush.msra.mxu0 %v552
    %612 = vmatpush.msra.mxu0 %v549
    %613 = vmatpush.msra.mxu0 %v546
    %614 = vmatpush.msra.mxu0 %v543
    %615 = vmatmul.f32.gmra.mxu0 %v258
    %v616 = vpop.f32.mrf.mxu0
    %v617 = vadd.f32 %v593, %v616
    %618 = vmatmul.f32.gmra.mxu0 %v259
    %v619 = vpop.f32.mrf.mxu0
    %v620 = vadd.f32 %v593, %v619
    %621 = vdwg.mxu0
    %622 = vmatpush.msra.mxu0 %v589
    %623 = vmatpush.msra.mxu0 %v586
    %624 = vmatpush.msra.mxu0 %v583
    %625 = vmatpush.msra.mxu0 %v580
    %626 = vmatpush.msra.mxu0 %v577
    %627 = vmatpush.msra.mxu0 %v574
    %628 = vmatpush.msra.mxu0 %v571
    %629 = vmatpush.msra.mxu0 %v568
    %630 = vmatpush.msra.mxu0 %v565
    %631 = vmatpush.msra.mxu0 %v562
    %632 = vmatpush.msra.mxu0 %v559
    %633 = vmatpush.msra.mxu0 %v556
    %634 = vmatpush.msra.mxu0 %v553
    %635 = vmatpush.msra.mxu0 %v550
    %636 = vmatpush.msra.mxu0 %v547
    %637 = vmatpush.msra.mxu0 %v544
    %638 = vmatmul.f32.gmra.mxu0 %v258
    %v639 = vpop.f32.mrf.mxu0
    %v640 = vadd.f32 %v594, %v639
    %641 = vmatmul.f32.gmra.mxu0 %v259
    %v642 = vpop.f32.mrf.mxu0
    %v643 = vadd.f32 %v594, %v642
    %644 = vdwg.mxu0
    %645 = vmatpush.msra.mxu0 %v590
    %646 = vmatpush.msra.mxu0 %v587
    %647 = vmatpush.msra.mxu0 %v584
    %648 = vmatpush.msra.mxu0 %v581
    %649 = vmatpush.msra.mxu0 %v578
    %650 = vmatpush.msra.mxu0 %v575
    %651 = vmatpush.msra.mxu0 %v572
    %652 = vmatpush.msra.mxu0 %v569
    %653 = vmatpush.msra.mxu0 %v566
    %654 = vmatpush.msra.mxu0 %v563
    %655 = vmatpush.msra.mxu0 %v560
    %656 = vmatpush.msra.mxu0 %v557
    %657 = vmatpush.msra.mxu0 %v554
    %658 = vmatpush.msra.mxu0 %v551
    %659 = vmatpush.msra.mxu0 %v548
    %660 = vmatpush.msra.mxu0 %v545
    %661 = vmatmul.f32.gmra.mxu0 %v258
    %v662 = vpop.f32.mrf.mxu0
    %v663 = vadd.f32 %v595, %v662
    %664 = vmatmul.f32.gmra.mxu0 %v259
    %v665 = vpop.f32.mrf.mxu0
    %v666 = vadd.f32 %v595, %v665
    %667 = vdwg.mxu0
    %v668 = vld [vmem:[#allocation8] sm:$0xff]
    %v669 = vld [vmem:[#allocation8 + $0x8] sm:$0xff]
    %v670 = vld [vmem:[#allocation8 + $0x10] sm:$0xff]
    %v671 = vld [vmem:[#allocation8 + $0x18] sm:$0xff]
    %v672 = vld [vmem:[#allocation8 + $0x20] sm:$0xff]
    %v673 = vld [vmem:[#allocation8 + $0x28] sm:$0xff]
    %v674 = vld [vmem:[#allocation8 + $0x30] sm:$0xff]
    %v675 = vld [vmem:[#allocation8 + $0x38] sm:$0xff]
    %v676 = vld [vmem:[#allocation8 + $0x40] sm:$0xff]
    %v677 = vld [vmem:[#allocation8 + $0x48] sm:$0xff]
    %v678 = vld [vmem:[#allocation8 + $0x50] sm:$0xff]
    %v679 = vld [vmem:[#allocation8 + $0x58] sm:$0xff]
    %v680 = vld [vmem:[#allocation8 + $0x60] sm:$0xff]
    %v681 = vld [vmem:[#allocation8 + $0x68] sm:$0xff]
    %v682 = vld [vmem:[#allocation8 + $0x70] sm:$0xff]
    %v683 = vld [vmem:[#allocation8 + $0x78] sm:$0xff]
    %v684 = vld [vmem:[#allocation8 + $0x80] sm:$0xff]
    %v685 = vld [vmem:[#allocation8 + $0x88] sm:$0xff]
    %v686 = vld [vmem:[#allocation8 + $0x90] sm:$0xff]
    %v687 = vld [vmem:[#allocation8 + $0x98] sm:$0xff]
    %v688 = vld [vmem:[#allocation8 + $0xa0] sm:$0xff]
    %v689 = vld [vmem:[#allocation8 + $0xa8] sm:$0xff]
    %v690 = vld [vmem:[#allocation8 + $0xb0] sm:$0xff]
    %v691 = vld [vmem:[#allocation8 + $0xb8] sm:$0xff]
    %v692 = vld [vmem:[#allocation8 + $0xc0] sm:$0xff]
    %v693 = vld [vmem:[#allocation8 + $0xc8] sm:$0xff]
    %v694 = vld [vmem:[#allocation8 + $0xd0] sm:$0xff]
    %v695 = vld [vmem:[#allocation8 + $0xd8] sm:$0xff]
    %v696 = vld [vmem:[#allocation8 + $0xe0] sm:$0xff]
    %v697 = vld [vmem:[#allocation8 + $0xe8] sm:$0xff]
    %v698 = vld [vmem:[#allocation8 + $0xf0] sm:$0xff]
    %v699 = vld [vmem:[#allocation8 + $0xf8] sm:$0xff]
    %v700 = vld [vmem:[#allocation8 + $0x100] sm:$0xff]
    %v701 = vld [vmem:[#allocation8 + $0x108] sm:$0xff]
    %v702 = vld [vmem:[#allocation8 + $0x110] sm:$0xff]
    %v703 = vld [vmem:[#allocation8 + $0x118] sm:$0xff]
    %v704 = vld [vmem:[#allocation8 + $0x120] sm:$0xff]
    %v705 = vld [vmem:[#allocation8 + $0x128] sm:$0xff]
    %v706 = vld [vmem:[#allocation8 + $0x130] sm:$0xff]
    %v707 = vld [vmem:[#allocation8 + $0x138] sm:$0xff]
    %v708 = vld [vmem:[#allocation8 + $0x140] sm:$0xff]
    %v709 = vld [vmem:[#allocation8 + $0x148] sm:$0xff]
    %v710 = vld [vmem:[#allocation8 + $0x150] sm:$0xff]
    %v711 = vld [vmem:[#allocation8 + $0x158] sm:$0xff]
    %v712 = vld [vmem:[#allocation8 + $0x160] sm:$0xff]
    %v713 = vld [vmem:[#allocation8 + $0x168] sm:$0xff]
    %v714 = vld [vmem:[#allocation8 + $0x170] sm:$0xff]
    %v715 = vld [vmem:[#allocation8 + $0x178] sm:$0xff]
    %v716 = vld [vmem:[%s27] sm:$0x7]
    %v718 = vperm.slane %v716, 0
    %v719 = vperm.slane %v716, 1
    %v720 = vperm.slane %v716, 2
    %724 = vmatpush.msra.mxu0 %v713
    %725 = vmatpush.msra.mxu0 %v710
    %726 = vmatpush.msra.mxu0 %v707
    %727 = vmatpush.msra.mxu0 %v704
    %728 = vmatpush.msra.mxu0 %v701
    %729 = vmatpush.msra.mxu0 %v698
    %730 = vmatpush.msra.mxu0 %v695
    %731 = vmatpush.msra.mxu0 %v692
    %732 = vmatpush.msra.mxu0 %v689
    %733 = vmatpush.msra.mxu0 %v686
    %734 = vmatpush.msra.mxu0 %v683
    %735 = vmatpush.msra.mxu0 %v680
    %736 = vmatpush.msra.mxu0 %v677
    %737 = vmatpush.msra.mxu0 %v674
    %738 = vmatpush.msra.mxu0 %v671
    %739 = vmatpush.msra.mxu0 %v668
    %740 = vmatmul.f32.gmra.mxu0 %v537
    %v741 = vpop.f32.mrf.mxu0
    %v742 = vadd.f32 %v718, %v741
    %743 = vmatmul.f32.gmra.mxu0 %v540
    %v744 = vpop.f32.mrf.mxu0
    %v745 = vadd.f32 %v718, %v744
    %746 = vdwg.mxu0
    %747 = vmatpush.msra.mxu0 %v714
    %748 = vmatpush.msra.mxu0 %v711
    %749 = vmatpush.msra.mxu0 %v708
    %750 = vmatpush.msra.mxu0 %v705
    %751 = vmatpush.msra.mxu0 %v702
    %752 = vmatpush.msra.mxu0 %v699
    %753 = vmatpush.msra.mxu0 %v696
    %754 = vmatpush.msra.mxu0 %v693
    %755 = vmatpush.msra.mxu0 %v690
    %756 = vmatpush.msra.mxu0 %v687
    %757 = vmatpush.msra.mxu0 %v684
    %758 = vmatpush.msra.mxu0 %v681
    %759 = vmatpush.msra.mxu0 %v678
    %760 = vmatpush.msra.mxu0 %v675
    %761 = vmatpush.msra.mxu0 %v672
    %762 = vmatpush.msra.mxu0 %v669
    %763 = vmatmul.f32.gmra.mxu0 %v537
    %v764 = vpop.f32.mrf.mxu0
    %v765 = vadd.f32 %v719, %v764
    %766 = vmatmul.f32.gmra.mxu0 %v540
    %v767 = vpop.f32.mrf.mxu0
    %v768 = vadd.f32 %v719, %v767
    %769 = vdwg.mxu0
    %770 = vmatpush.msra.mxu0 %v715
    %771 = vmatpush.msra.mxu0 %v712
    %772 = vmatpush.msra.mxu0 %v709
    %773 = vmatpush.msra.mxu0 %v706
    %774 = vmatpush.msra.mxu0 %v703
    %775 = vmatpush.msra.mxu0 %v700
    %776 = vmatpush.msra.mxu0 %v697
    %777 = vmatpush.msra.mxu0 %v694
    %778 = vmatpush.msra.mxu0 %v691
    %779 = vmatpush.msra.mxu0 %v688
    %780 = vmatpush.msra.mxu0 %v685
    %781 = vmatpush.msra.mxu0 %v682
    %782 = vmatpush.msra.mxu0 %v679
    %783 = vmatpush.msra.mxu0 %v676
    %784 = vmatpush.msra.mxu0 %v673
    %785 = vmatpush.msra.mxu0 %v670
    %786 = vmatmul.f32.gmra.mxu0 %v537
    %v787 = vpop.f32.mrf.mxu0
    %v788 = vadd.f32 %v720, %v787
    %789 = vmatmul.f32.gmra.mxu0 %v540
    %v790 = vpop.f32.mrf.mxu0
    %v791 = vadd.f32 %v720, %v790
    %792 = vdwg.mxu0
    %v793 = vadd.f32 %v617, %v742
    %v794 = vadd.f32 %v620, %v745
    %v795 = vxor.u32 %v793, 2147483648
    %v796 = vxor.u32 %v794, 2147483648
    %v797 = vmul.f32 %v795, 1.442695
    %v798 = vpow.pop %v797
    %v799 = vmul.f32 %v796, 1.442695
    %v800 = vpow.pop %v799
    %v801 = vadd.f32 %v798, 1.0
    %v802 = vadd.f32 %v800, 1.0
    %v803 = vrcp.pop %v801
    %v804 = vmul.f32 %v801, %v803
    %v805 = vsub.f32 1.0, %v804
    %v806 = vmul.f32 %v803, %v805
    %v807 = vadd.f32 %v803, %v806
    %vm808 = vweird.f32 %v801
    %vm809 = vweird.f32 %v803
    %vm810 = vmor %vm808, %vm809
    %v811 = vsel %vm810, %v803, %v807
    %v812 = vand.u32 2147483647, %v801
    %vm813 = vcmp.eq.f32.partialorder %v812, 8.507059e+37
    %v814 = vand.u32 %v801, 2147483648
    %v815 = vor.u32 1.1754944e-38, %v814
    %v816 = vsel %vm813, %v815, %v811
    %v817 = vmul.f32 1.0, %v816
    %v818 = vrcp.pop %v802
    %v819 = vmul.f32 %v802, %v818
    %v820 = vsub.f32 1.0, %v819
    %v821 = vmul.f32 %v818, %v820
    %v822 = vadd.f32 %v818, %v821
    %vm823 = vweird.f32 %v802
    %vm824 = vweird.f32 %v818
    %vm825 = vmor %vm823, %vm824
    %v826 = vsel %vm825, %v818, %v822
    %v827 = vand.u32 2147483647, %v802
    %vm828 = vcmp.eq.f32.partialorder %v827, 8.507059e+37
    %v829 = vand.u32 %v802, 2147483648
    %v830 = vor.u32 1.1754944e-38, %v829
    %v831 = vsel %vm828, %v830, %v826
    %v832 = vmul.f32 1.0, %v831
    %v833 = vadd.f32 %v640, %v765
    %v834 = vadd.f32 %v643, %v768
    %v835 = vxor.u32 %v833, 2147483648
    %v836 = vxor.u32 %v834, 2147483648
    %v837 = vmul.f32 %v835, 1.442695
    %v838 = vpow.pop %v837
    %v839 = vmul.f32 %v836, 1.442695
    %v840 = vpow.pop %v839
    %v841 = vadd.f32 %v838, 1.0
    %v842 = vadd.f32 %v840, 1.0
    %v843 = vrcp.pop %v841
    %v844 = vmul.f32 %v841, %v843
    %v845 = vsub.f32 1.0, %v844
    %v846 = vmul.f32 %v843, %v845
    %v847 = vadd.f32 %v843, %v846
    %vm848 = vweird.f32 %v841
    %vm849 = vweird.f32 %v843
    %vm850 = vmor %vm848, %vm849
    %v851 = vsel %vm850, %v843, %v847
    %v852 = vand.u32 2147483647, %v841
    %vm853 = vcmp.eq.f32.partialorder %v852, 8.507059e+37
    %v854 = vand.u32 %v841, 2147483648
    %v855 = vor.u32 1.1754944e-38, %v854
    %v856 = vsel %vm853, %v855, %v851
    %v857 = vmul.f32 1.0, %v856
    %v858 = vrcp.pop %v842
    %v859 = vmul.f32 %v842, %v858
    %v860 = vsub.f32 1.0, %v859
    %v861 = vmul.f32 %v858, %v860
    %v862 = vadd.f32 %v858, %v861
    %vm863 = vweird.f32 %v842
    %vm864 = vweird.f32 %v858
    %vm865 = vmor %vm863, %vm864
    %v866 = vsel %vm865, %v858, %v862
    %v867 = vand.u32 2147483647, %v842
    %vm868 = vcmp.eq.f32.partialorder %v867, 8.507059e+37
    %v869 = vand.u32 %v842, 2147483648
    %v870 = vor.u32 1.1754944e-38, %v869
    %v871 = vsel %vm868, %v870, %v866
    %v872 = vmul.f32 1.0, %v871
    %v873 = vmul.f32 %v817, %v788
    %v874 = vmul.f32 %v832, %v791
    %v875 = vadd.f32 %v663, %v873
    %v876 = vadd.f32 %v666, %v874
    %v877 = vtanh.pop %v875
    %v878 = vtanh.pop %v876
    %v879 = vsub.f32 1.0, %v857
    %v880 = vsub.f32 1.0, %v872
    %v881 = vmul.f32 %v879, %v877
    %v882 = vmul.f32 %v880, %v878
    %v883 = vmul.f32 %v857, %v537
    %v884 = vmul.f32 %v872, %v540
    %v885 = vadd.f32 %v881, %v883
    %v886 = vadd.f32 %v882, %v884
    %v887 = vld [vmem:[%s51] sm:$0xff]
    %v888 = vld [vmem:[%s51 + $0x8] sm:$0xf]
    %v889 = vld [vmem:[%s49] sm:$0x1f]
    %v890 = vld [vmem:[%s45] sm:$0xff]
    %v891 = vld [vmem:[%s45 + $0x8] sm:$0xff]
    %v892 = vld [vmem:[%s45 + $0x10] sm:$0xff]
    %v893 = vld [vmem:[%s45 + $0x18] sm:$0xff]
    %v894 = vld [vmem:[%s45 + $0x20] sm:$0xff]
    %v895 = vld [vmem:[%s45 + $0x28] sm:$0xff]
    %v896 = vld [vmem:[%s45 + $0x30] sm:$0xff]
    %v897 = vld [vmem:[%s45 + $0x38] sm:$0xff]
    %v898 = vld [vmem:[%s45 + $0x40] sm:$0xff]
    %v899 = vld [vmem:[%s45 + $0x48] sm:$0xff]
    %v900 = vld [vmem:[%s45 + $0x50] sm:$0xff]
    %v901 = vld [vmem:[%s45 + $0x58] sm:$0xff]
    %v902 = vld [vmem:[%s45 + $0x60] sm:$0xff]
    %v903 = vld [vmem:[%s45 + $0x68] sm:$0xff]
    %v904 = vld [vmem:[%s45 + $0x70] sm:$0xff]
    %v905 = vld [vmem:[%s45 + $0x78] sm:$0xff]
    %v906 = vld [vmem:[%s47] sm:$0x1]
    %v908 = vperm.slane %v906, 0
    %910 = vmatpush.msra.mxu0 %v905
    %911 = vmatpush.msra.mxu0 %v904
    %912 = vmatpush.msra.mxu0 %v903
    %913 = vmatpush.msra.mxu0 %v902
    %914 = vmatpush.msra.mxu0 %v901
    %915 = vmatpush.msra.mxu0 %v900
    %916 = vmatpush.msra.mxu0 %v899
    %917 = vmatpush.msra.mxu0 %v898
    %918 = vmatpush.msra.mxu0 %v897
    %919 = vmatpush.msra.mxu0 %v896
    %920 = vmatpush.msra.mxu0 %v895
    %921 = vmatpush.msra.mxu0 %v894
    %922 = vmatpush.msra.mxu0 %v893
    %923 = vmatpush.msra.mxu0 %v892
    %924 = vmatpush.msra.mxu0 %v891
    %925 = vmatpush.msra.mxu0 %v890
    %926 = vmatmul.f32.gmra.mxu0 %v885
    %v927 = vpop.f32.mrf.mxu0
    %v928 = vadd.f32 %v908, %v927
    %929 = vmatmul.f32.gmra.mxu0 %v886
    %v930 = vpop.f32.mrf.mxu0
    %v931 = vadd.f32 %v908, %v930
    %932 = vdwg.mxu0
    %v933 = vsel %vm413, %v928, -inf
    %934 = vmax.xlane.f32.xlu0 %v933
    %v935 = vpop.xlane.xlu0 %934
    %vm936 = vcmask 35840
    %v937 = vsel %vm936, %v931, -inf
    %938 = vmax.xlane.f32.xlu0 %v937
    %v939 = vpop.xlane.xlu0 %938
    %v940 = vsub.f32 %v928, %v935
    %v941 = vsub.f32 %v931, %v939
    %v942 = vmul.f32 %v940, 1.442695
    %v943 = vpow.pop %v942
    %v944 = vmul.f32 %v941, 1.442695
    %v945 = vpow.pop %v944
    %v946 = vsel %vm413, %v943, 0.0
    %947 = vadd.xlane.f32.xlu0 %v946
    %v948 = vpop.xlane.xlu0 %947
    %v949 = vsel %vm936, %v945, 0.0
    %950 = vadd.xlane.f32.xlu0 %v949
    %v951 = vpop.xlane.xlu0 %950
    %v952 = vrcp.pop %v948
    %v953 = vmul.f32 %v948, %v952
    %v954 = vsub.f32 1.0, %v953
    %v955 = vmul.f32 %v952, %v954
    %v956 = vadd.f32 %v952, %v955
    %vm957 = vweird.f32 %v948
    %vm958 = vweird.f32 %v952
    %vm959 = vmor %vm957, %vm958
    %v960 = vsel %vm959, %v952, %v956
    %v961 = vand.u32 2147483647, %v948
    %vm962 = vcmp.eq.f32.partialorder %v961, 8.507059e+37
    %v963 = vand.u32 %v948, 2147483648
    %v964 = vor.u32 1.1754944e-38, %v963
    %v965 = vsel %vm962, %v964, %v960
    %v966 = vmul.f32 %v943, %v965
    %v967 = vrcp.pop %v951
    %v968 = vmul.f32 %v951, %v967
    %v969 = vsub.f32 1.0, %v968
    %v970 = vmul.f32 %v967, %v969
    %v971 = vadd.f32 %v967, %v970
    %vm972 = vweird.f32 %v951
    %vm973 = vweird.f32 %v967
    %vm974 = vmor %vm972, %vm973
    %v975 = vsel %vm974, %v967, %v971
    %v976 = vand.u32 2147483647, %v951
    %vm977 = vcmp.eq.f32.partialorder %v976, 8.507059e+37
    %v978 = vand.u32 %v951, 2147483648
    %v979 = vor.u32 1.1754944e-38, %v978
    %v980 = vsel %vm977, %v979, %v975
    %v981 = vmul.f32 %v945, %v980
    %v982 = vmul.f32 %v966, 1.442695
    %v983 = vpow.pop %v982
    %v984 = vmul.f32 %v981, 1.442695
    %v985 = vpow.pop %v984
    %v986 = vsel %vm413, %v983, 0.0
    %987 = vadd.xlane.f32.xlu0 %v986
    %v988 = vpop.xlane.xlu0 %987
    %v989 = vsel %vm936, %v985, 0.0
    %990 = vadd.xlane.f32.xlu0 %v989
    %v991 = vpop.xlane.xlu0 %990
    %v992 = vlog2.pop %v988
    %v993 = vmul.f32 %v992, 0.6931472
    %v994 = vlog2.pop %v991
    %v995 = vmul.f32 %v994, 0.6931472
    %v996 = vsub.f32 %v966, %v993
    %v997 = vsub.f32 %v981, %v995
    %v998 = vmul.f32 %v887, %v996
    %v999 = vmul.f32 %v888, %v997
    %v1000 = vsel %vm413, %v998, 0.0
    %v1001 = vsel %vm936, %v999, 0.0
    %v1002 = vadd.f32 %v1000, %v1001
    %1003 = vadd.xlane.f32.xlu0 %v1002
    %v1004 = vpop.xlane.xlu0 %1003
    %v1005 = vrot.slane %v1004, 4
    %v1006 = vadd.f32 %v1004, %v1005
    %v1007 = vrot.slane %v1006, 2
    %v1008 = vadd.f32 %v1006, %v1007
    %v1009 = vrot.slane %v1008, 1
    %v1010 = vadd.f32 %v1008, %v1009
    %s1011 = vtos %v1010
    %s1012 = ssub.f32 0.0, %s1011
    %v1013 = vrcp.pop 12.0
    %v1014 = vmul.f32 12.0, %v1013
    %v1015 = vsub.f32 1.0, %v1014
    %v1016 = vmul.f32 %v1013, %v1015
    %v1017 = vadd.f32 %v1013, %v1016
    %vm1018 = vweird.f32 %v1013
    %v1019 = vsel %vm1018, %v1013, %v1017
    %s1020 = vtos %v1019
    %s1021 = smul.f32 %s1012, %s1020
    %v1022 = vmul.f32 %v966, %v887
    %v1023 = vmul.f32 %v981, %v888
    %v1024 = vsel %vm413, %v1022, 0.0
    %1025 = vadd.xlane.f32.xlu0 %v1024
    %v1026 = vpop.xlane.xlu0 %1025
    %v1027 = vsel %vm936, %v1023, 0.0
    %1028 = vadd.xlane.f32.xlu0 %v1027
    %v1029 = vpop.xlane.xlu0 %1028
    %v1030 = vmul.f32 %v1026, %v885
    %v1031 = vmul.f32 %v1029, %v886
    %vm1032 = vcmask 97280
    %v1034 = vsel %vm1032, %v889, 0
    %vm1036 = vcmask 1043456
    %v1038 = vsel %vm1036, %v1031, 0
    %1040 = vmatpush.msra.mxu0 0.0
    %1041 = vmatpush.msra.mxu0 0.0
    %1042 = vmatpush.msra.mxu0 0.0
    %1043 = vmatpush.msra.mxu0 0.0
    %1044 = vmatpush.msra.mxu0 0.0
    %1045 = vmatpush.msra.mxu0 0.0
    %1046 = vmatpush.msra.mxu0 0.0
    %1047 = vmatpush.msra.mxu0 0.0
    %1048 = vmatpush.msra.mxu0 0.0
    %1049 = vmatpush.msra.mxu0 0.0
    %1050 = vmatpush.msra.mxu0 0.0
    %1051 = vmatpush.msra.mxu0 0.0
    %1052 = vmatpush.msra.mxu0 0.0
    %1053 = vmatpush.msra.mxu0 0.0
    %1054 = vmatpush.msra.mxu0 %v1038
    %1055 = vmatpush.msra.mxu0 %v1030
    %1056 = vmatmul.f32.gmra.mxu0 %v1034
    %v1057 = vpop.f32.mrf.mxu0
    %v1058 = vadd.f32 0.0, %v1057
    %1059 = vdwg.mxu0
    %s1060 = sadd.f32 %s542, %s1021
    %1061 = vmatpush.msra.mxu0 %v588
    %1062 = vmatpush.msra.mxu0 %v585
    %1063 = vmatpush.msra.mxu0 %v582
    %1064 = vmatpush.msra.mxu0 %v579
    %1065 = vmatpush.msra.mxu0 %v576
    %1066 = vmatpush.msra.mxu0 %v573
    %1067 = vmatpush.msra.mxu0 %v570
    %1068 = vmatpush.msra.mxu0 %v567
    %1069 = vmatpush.msra.mxu0 %v564
    %1070 = vmatpush.msra.mxu0 %v561
    %1071 = vmatpush.msra.mxu0 %v558
    %1072 = vmatpush.msra.mxu0 %v555
    %1073 = vmatpush.msra.mxu0 %v552
    %1074 = vmatpush.msra.mxu0 %v549
    %1075 = vmatpush.msra.mxu0 %v546
    %1076 = vmatpush.msra.mxu0 %v543
    %1077 = vmatmul.f32.gmra.mxu0 %v257
    %v1078 = vpop.f32.mrf.mxu0
    %v1079 = vadd.f32 %v593, %v1078
    %1080 = vdwg.mxu0
    %1081 = vmatpush.msra.mxu0 %v589
    %1082 = vmatpush.msra.mxu0 %v586
    %1083 = vmatpush.msra.mxu0 %v583
    %1084 = vmatpush.msra.mxu0 %v580
    %1085 = vmatpush.msra.mxu0 %v577
    %1086 = vmatpush.msra.mxu0 %v574
    %1087 = vmatpush.msra.mxu0 %v571
    %1088 = vmatpush.msra.mxu0 %v568
    %1089 = vmatpush.msra.mxu0 %v565
    %1090 = vmatpush.msra.mxu0 %v562
    %1091 = vmatpush.msra.mxu0 %v559
    %1092 = vmatpush.msra.mxu0 %v556
    %1093 = vmatpush.msra.mxu0 %v553
    %1094 = vmatpush.msra.mxu0 %v550
    %1095 = vmatpush.msra.mxu0 %v547
    %1096 = vmatpush.msra.mxu0 %v544
    %1097 = vmatmul.f32.gmra.mxu0 %v257
    %v1098 = vpop.f32.mrf.mxu0
    %v1099 = vadd.f32 %v594, %v1098
    %1100 = vdwg.mxu0
    %1101 = vmatpush.msra.mxu0 %v590
    %1102 = vmatpush.msra.mxu0 %v587
    %1103 = vmatpush.msra.mxu0 %v584
    %1104 = vmatpush.msra.mxu0 %v581
    %1105 = vmatpush.msra.mxu0 %v578
    %1106 = vmatpush.msra.mxu0 %v575
    %1107 = vmatpush.msra.mxu0 %v572
    %1108 = vmatpush.msra.mxu0 %v569
    %1109 = vmatpush.msra.mxu0 %v566
    %1110 = vmatpush.msra.mxu0 %v563
    %1111 = vmatpush.msra.mxu0 %v560
    %1112 = vmatpush.msra.mxu0 %v557
    %1113 = vmatpush.msra.mxu0 %v554
    %1114 = vmatpush.msra.mxu0 %v551
    %1115 = vmatpush.msra.mxu0 %v548
    %1116 = vmatpush.msra.mxu0 %v545
    %1117 = vmatmul.f32.gmra.mxu0 %v257
    %v1118 = vpop.f32.mrf.mxu0
    %v1119 = vadd.f32 %v595, %v1118
    %1120 = vdwg.mxu0
    %1121 = vmatpush.msra.mxu0 %v713
    %1122 = vmatpush.msra.mxu0 %v710
    %1123 = vmatpush.msra.mxu0 %v707
    %1124 = vmatpush.msra.mxu0 %v704
    %1125 = vmatpush.msra.mxu0 %v701
    %1126 = vmatpush.msra.mxu0 %v698
    %1127 = vmatpush.msra.mxu0 %v695
    %1128 = vmatpush.msra.mxu0 %v692
    %1129 = vmatpush.msra.mxu0 %v689
    %1130 = vmatpush.msra.mxu0 %v686
    %1131 = vmatpush.msra.mxu0 %v683
    %1132 = vmatpush.msra.mxu0 %v680
    %1133 = vmatpush.msra.mxu0 %v677
    %1134 = vmatpush.msra.mxu0 %v674
    %1135 = vmatpush.msra.mxu0 %v671
    %1136 = vmatpush.msra.mxu0 %v668
    %1137 = vmatmul.f32.gmra.mxu0 %v1058
    %v1138 = vpop.f32.mrf.mxu0
    %v1139 = vadd.f32 %v718, %v1138
    %1140 = vdwg.mxu0
    %1141 = vmatpush.msra.mxu0 %v714
    %1142 = vmatpush.msra.mxu0 %v711
    %1143 = vmatpush.msra.mxu0 %v708
    %1144 = vmatpush.msra.mxu0 %v705
    %1145 = vmatpush.msra.mxu0 %v702
    %1146 = vmatpush.msra.mxu0 %v699
    %1147 = vmatpush.msra.mxu0 %v696
    %1148 = vmatpush.msra.mxu0 %v693
    %1149 = vmatpush.msra.mxu0 %v690
    %1150 = vmatpush.msra.mxu0 %v687
    %1151 = vmatpush.msra.mxu0 %v684
    %1152 = vmatpush.msra.mxu0 %v681
    %1153 = vmatpush.msra.mxu0 %v678
    %1154 = vmatpush.msra.mxu0 %v675
    %1155 = vmatpush.msra.mxu0 %v672
    %1156 = vmatpush.msra.mxu0 %v669
    %1157 = vmatmul.f32.gmra.mxu0 %v1058
    %v1158 = vpop.f32.mrf.mxu0
    %v1159 = vadd.f32 %v719, %v1158
    %1160 = vdwg.mxu0
    %1161 = vmatpush.msra.mxu0 %v715
    %1162 = vmatpush.msra.mxu0 %v712
    %1163 = vmatpush.msra.mxu0 %v709
    %1164 = vmatpush.msra.mxu0 %v706
    %1165 = vmatpush.msra.mxu0 %v703
    %1166 = vmatpush.msra.mxu0 %v700
    %1167 = vmatpush.msra.mxu0 %v697
    %1168 = vmatpush.msra.mxu0 %v694
    %1169 = vmatpush.msra.mxu0 %v691
    %1170 = vmatpush.msra.mxu0 %v688
    %1171 = vmatpush.msra.mxu0 %v685
    %1172 = vmatpush.msra.mxu0 %v682
    %1173 = vmatpush.msra.mxu0 %v679
    %1174 = vmatpush.msra.mxu0 %v676
    %1175 = vmatpush.msra.mxu0 %v673
    %1176 = vmatpush.msra.mxu0 %v670
    %1177 = vmatmul.f32.gmra.mxu0 %v1058
    %v1178 = vpop.f32.mrf.mxu0
    %v1179 = vadd.f32 %v720, %v1178
    %1180 = vdwg.mxu0
    %v1181 = vadd.f32 %v1079, %v1139
    %v1182 = vxor.u32 %v1181, 2147483648
    %v1183 = vmul.f32 %v1182, 1.442695
    %v1184 = vpow.pop %v1183
    %v1185 = vadd.f32 %v1184, 1.0
    %v1186 = vrcp.pop %v1185
    %v1187 = vmul.f32 %v1185, %v1186
    %v1188 = vsub.f32 1.0, %v1187
    %v1189 = vmul.f32 %v1186, %v1188
    %v1190 = vadd.f32 %v1186, %v1189
    %vm1191 = vweird.f32 %v1185
    %vm1192 = vweird.f32 %v1186
    %vm1193 = vmor %vm1191, %vm1192
    %v1194 = vsel %vm1193, %v1186, %v1190
    %v1195 = vand.u32 2147483647, %v1185
    %vm1196 = vcmp.eq.f32.partialorder %v1195, 8.507059e+37
    %v1197 = vand.u32 %v1185, 2147483648
    %v1198 = vor.u32 1.1754944e-38, %v1197
    %v1199 = vsel %vm1196, %v1198, %v1194
    %v1200 = vmul.f32 1.0, %v1199
    %v1201 = vadd.f32 %v1099, %v1159
    %v1202 = vxor.u32 %v1201, 2147483648
    %v1203 = vmul.f32 %v1202, 1.442695
    %v1204 = vpow.pop %v1203
    %v1205 = vadd.f32 %v1204, 1.0
    %v1206 = vrcp.pop %v1205
    %v1207 = vmul.f32 %v1205, %v1206
    %v1208 = vsub.f32 1.0, %v1207
    %v1209 = vmul.f32 %v1206, %v1208
    %v1210 = vadd.f32 %v1206, %v1209
    %vm1211 = vweird.f32 %v1205
    %vm1212 = vweird.f32 %v1206
    %vm1213 = vmor %vm1211, %vm1212
    %v1214 = vsel %vm1213, %v1206, %v1210
    %v1215 = vand.u32 2147483647, %v1205
    %vm1216 = vcmp.eq.f32.partialorder %v1215, 8.507059e+37
    %v1217 = vand.u32 %v1205, 2147483648
    %v1218 = vor.u32 1.1754944e-38, %v1217
    %v1219 = vsel %vm1216, %v1218, %v1214
    %v1220 = vmul.f32 1.0, %v1219
    %v1221 = vmul.f32 %v1200, %v1179
    %v1222 = vadd.f32 %v1119, %v1221
    %v1223 = vtanh.pop %v1222
    %v1224 = vsub.f32 1.0, %v1220
    %v1225 = vmul.f32 %v1224, %v1223
    %v1226 = vmul.f32 %v1220, %v1058
    %v1227 = vadd.f32 %v1225, %v1226
    %v1228 = vld [vmem:[%s57] sm:$0xff]
    %v1229 = vld [vmem:[%s57 + $0x8] sm:$0xff]
    %v1230 = vld [vmem:[%s53] sm:$0xff]
    %v1231 = vld [vmem:[%s53 + $0x8] sm:$0xff]
    %v1232 = vld [vmem:[%s53 + $0x10] sm:$0xff]
    %v1233 = vld [vmem:[%s53 + $0x18] sm:$0xff]
    %v1234 = vld [vmem:[%s53 + $0x20] sm:$0xff]
    %v1235 = vld [vmem:[%s53 + $0x28] sm:$0xff]
    %v1236 = vld [vmem:[%s53 + $0x30] sm:$0xff]
    %v1237 = vld [vmem:[%s53 + $0x38] sm:$0xff]
    %v1238 = vld [vmem:[%s53 + $0x40] sm:$0xff]
    %v1239 = vld [vmem:[%s53 + $0x48] sm:$0xff]
    %v1240 = vld [vmem:[%s53 + $0x50] sm:$0xff]
    %v1241 = vld [vmem:[%s53 + $0x58] sm:$0xff]
    %v1242 = vld [vmem:[%s53 + $0x60] sm:$0xff]
    %v1243 = vld [vmem:[%s53 + $0x68] sm:$0xff]
    %v1244 = vld [vmem:[%s53 + $0x70] sm:$0xff]
    %v1245 = vld [vmem:[%s53 + $0x78] sm:$0xff]
    %v1246 = vld [vmem:[%s55] sm:$0x1]
    %v1248 = vperm.slane %v1246, 0
    %1250 = vmatpush.msra.mxu0 %v1245
    %1251 = vmatpush.msra.mxu0 %v1244
    %1252 = vmatpush.msra.mxu0 %v1243
    %1253 = vmatpush.msra.mxu0 %v1242
    %1254 = vmatpush.msra.mxu0 %v1241
    %1255 = vmatpush.msra.mxu0 %v1240
    %1256 = vmatpush.msra.mxu0 %v1239
    %1257 = vmatpush.msra.mxu0 %v1238
    %1258 = vmatpush.msra.mxu0 %v1237
    %1259 = vmatpush.msra.mxu0 %v1236
    %1260 = vmatpush.msra.mxu0 %v1235
    %1261 = vmatpush.msra.mxu0 %v1234
    %1262 = vmatpush.msra.mxu0 %v1233
    %1263 = vmatpush.msra.mxu0 %v1232
    %1264 = vmatpush.msra.mxu0 %v1231
    %1265 = vmatpush.msra.mxu0 %v1230
    %1266 = vmatmul.f32.gmra.mxu0 %v258
    %v1267 = vpop.f32.mrf.mxu0
    %v1268 = vadd.f32 %v1248, %v1267
    %1269 = vmatmul.f32.gmra.mxu0 %v259
    %v1270 = vpop.f32.mrf.mxu0
    %v1271 = vadd.f32 %v1248, %v1270
    %1272 = vdwg.mxu0
    %v1273 = vsel %vm413, %v1268, -inf
    %1274 = vmax.xlane.f32.xlu0 %v1273
    %v1275 = vpop.xlane.xlu0 %1274
    %v1276 = vsel %vm936, %v1271, -inf
    %1277 = vmax.xlane.f32.xlu0 %v1276
    %v1278 = vpop.xlane.xlu0 %1277
    %v1279 = vsub.f32 %v1268, %v1275
    %v1280 = vsub.f32 %v1271, %v1278
    %v1281 = vmul.f32 %v1279, 1.442695
    %v1282 = vpow.pop %v1281
    %v1283 = vmul.f32 %v1280, 1.442695
    %v1284 = vpow.pop %v1283
    %v1285 = vsel %vm413, %v1282, 0.0
    %1286 = vadd.xlane.f32.xlu0 %v1285
    %v1287 = vpop.xlane.xlu0 %1286
    %v1288 = vsel %vm936, %v1284, 0.0
    %1289 = vadd.xlane.f32.xlu0 %v1288
    %v1290 = vpop.xlane.xlu0 %1289
    %v1291 = vrcp.pop %v1287
    %v1292 = vmul.f32 %v1287, %v1291
    %v1293 = vsub.f32 1.0, %v1292
    %v1294 = vmul.f32 %v1291, %v1293
    %v1295 = vadd.f32 %v1291, %v1294
    %vm1296 = vweird.f32 %v1287
    %vm1297 = vweird.f32 %v1291
    %vm1298 = vmor %vm1296, %vm1297
    %v1299 = vsel %vm1298, %v1291, %v1295
    %v1300 = vand.u32 2147483647, %v1287
    %vm1301 = vcmp.eq.f32.partialorder %v1300, 8.507059e+37
    %v1302 = vand.u32 %v1287, 2147483648
    %v1303 = vor.u32 1.1754944e-38, %v1302
    %v1304 = vsel %vm1301, %v1303, %v1299
    %v1305 = vmul.f32 %v1282, %v1304
    %v1306 = vrcp.pop %v1290
    %v1307 = vmul.f32 %v1290, %v1306
    %v1308 = vsub.f32 1.0, %v1307
    %v1309 = vmul.f32 %v1306, %v1308
    %v1310 = vadd.f32 %v1306, %v1309
    %vm1311 = vweird.f32 %v1290
    %vm1312 = vweird.f32 %v1306
    %vm1313 = vmor %vm1311, %vm1312
    %v1314 = vsel %vm1313, %v1306, %v1310
    %v1315 = vand.u32 2147483647, %v1290
    %vm1316 = vcmp.eq.f32.partialorder %v1315, 8.507059e+37
    %v1317 = vand.u32 %v1290, 2147483648
    %v1318 = vor.u32 1.1754944e-38, %v1317
    %v1319 = vsel %vm1316, %v1318, %v1314
    %v1320 = vmul.f32 %v1284, %v1319
    %v1321 = vmul.f32 %v1305, 1.442695
    %v1322 = vpow.pop %v1321
    %v1323 = vmul.f32 %v1320, 1.442695
    %v1324 = vpow.pop %v1323
    %v1325 = vsel %vm413, %v1322, 0.0
    %1326 = vadd.xlane.f32.xlu0 %v1325
    %v1327 = vpop.xlane.xlu0 %1326
    %v1328 = vsel %vm936, %v1324, 0.0
    %1329 = vadd.xlane.f32.xlu0 %v1328
    %v1330 = vpop.xlane.xlu0 %1329
    %v1331 = vlog2.pop %v1327
    %v1332 = vmul.f32 %v1331, 0.6931472
    %v1333 = vlog2.pop %v1330
    %v1334 = vmul.f32 %v1333, 0.6931472
    %v1335 = vsub.f32 %v1305, %v1332
    %v1336 = vsub.f32 %v1320, %v1334
    %v1337 = vmul.f32 %v887, %v1335
    %v1338 = vmul.f32 %v888, %v1336
    %v1339 = vsel %vm413, %v1337, 0.0
    %v1340 = vsel %vm936, %v1338, 0.0
    %v1341 = vadd.f32 %v1339, %v1340
    %1342 = vadd.xlane.f32.xlu0 %v1341
    %v1343 = vpop.xlane.xlu0 %1342
    %v1344 = vrot.slane %v1343, 4
    %v1345 = vadd.f32 %v1343, %v1344
    %v1346 = vrot.slane %v1345, 2
    %v1347 = vadd.f32 %v1345, %v1346
    %v1348 = vrot.slane %v1347, 1
    %v1349 = vadd.f32 %v1347, %v1348
    %s1350 = vtos %v1349
    %s1351 = ssub.f32 0.0, %s1350
    %v1352 = vrcp.pop 12.0
    %v1353 = vmul.f32 12.0, %v1352
    %v1354 = vsub.f32 1.0, %v1353
    %v1355 = vmul.f32 %v1352, %v1354
    %v1356 = vadd.f32 %v1352, %v1355
    %vm1357 = vweird.f32 %v1352
    %v1358 = vsel %vm1357, %v1352, %v1356
    %s1359 = vtos %v1358
    %s1360 = smul.f32 %s1351, %s1359
    %v1361 = vmul.f32 %v1305, %v887
    %v1362 = vmul.f32 %v1320, %v888
    %v1363 = vsel %vm413, %v1361, 0.0
    %1364 = vadd.xlane.f32.xlu0 %v1363
    %v1365 = vpop.xlane.xlu0 %1364
    %v1366 = vsel %vm936, %v1362, 0.0
    %1367 = vadd.xlane.f32.xlu0 %v1366
    %v1368 = vpop.xlane.xlu0 %1367
    %v1369 = vmul.f32 %v1365, %v258
    %v1370 = vmul.f32 %v1368, %v259
    %v1372 = vsel %vm1032, %v1228, 0
    %v1375 = vsel %vm1032, %v1229, 0
    %v1378 = vsel %vm1036, %v1370, 0
    %1380 = vmatpush.msra.mxu0 0.0
    %1381 = vmatpush.msra.mxu0 0.0
    %1382 = vmatpush.msra.mxu0 0.0
    %1383 = vmatpush.msra.mxu0 0.0
    %1384 = vmatpush.msra.mxu0 0.0
    %1385 = vmatpush.msra.mxu0 0.0
    %1386 = vmatpush.msra.mxu0 0.0
    %1387 = vmatpush.msra.mxu0 0.0
    %1388 = vmatpush.msra.mxu0 0.0
    %1389 = vmatpush.msra.mxu0 0.0
    %1390 = vmatpush.msra.mxu0 0.0
    %1391 = vmatpush.msra.mxu0 0.0
    %1392 = vmatpush.msra.mxu0 0.0
    %1393 = vmatpush.msra.mxu0 0.0
    %1394 = vmatpush.msra.mxu0 %v1378
    %1395 = vmatpush.msra.mxu0 %v1369
    %1396 = vmatmul.f32.gmra.mxu0 %v1372
    %v1397 = vpop.f32.mrf.mxu0
    %v1398 = vadd.f32 0.0, %v1397
    %1399 = vmatmul.f32.gmra.mxu0 %v1375
    %v1400 = vpop.f32.mrf.mxu0
    %v1401 = vadd.f32 0.0, %v1400
    %1402 = vdwg.mxu0
    %s1403 = sadd.f32 %s1060, %s1360
    %v1404 = vld [vmem:[#allocation10] sm:$0xff]
    %v1405 = vld [vmem:[#allocation10 + $0x8] sm:$0xff]
    %v1406 = vld [vmem:[#allocation10 + $0x10] sm:$0xff]
    %v1407 = vld [vmem:[#allocation10 + $0x18] sm:$0xff]
    %v1408 = vld [vmem:[#allocation10 + $0x20] sm:$0xff]
    %v1409 = vld [vmem:[#allocation10 + $0x28] sm:$0xff]
    %v1410 = vld [vmem:[#allocation10 + $0x30] sm:$0xff]
    %v1411 = vld [vmem:[#allocation10 + $0x38] sm:$0xff]
    %v1412 = vld [vmem:[#allocation10 + $0x40] sm:$0xff]
    %v1413 = vld [vmem:[#allocation10 + $0x48] sm:$0xff]
    %v1414 = vld [vmem:[#allocation10 + $0x50] sm:$0xff]
    %v1415 = vld [vmem:[#allocation10 + $0x58] sm:$0xff]
    %v1416 = vld [vmem:[#allocation10 + $0x60] sm:$0xff]
    %v1417 = vld [vmem:[#allocation10 + $0x68] sm:$0xff]
    %v1418 = vld [vmem:[#allocation10 + $0x70] sm:$0xff]
    %v1419 = vld [vmem:[#allocation10 + $0x78] sm:$0xff]
    %v1420 = vld [vmem:[#allocation10 + $0x80] sm:$0xff]
    %v1421 = vld [vmem:[#allocation10 + $0x88] sm:$0xff]
    %v1422 = vld [vmem:[#allocation10 + $0x90] sm:$0xff]
    %v1423 = vld [vmem:[#allocation10 + $0x98] sm:$0xff]
    %v1424 = vld [vmem:[#allocation10 + $0xa0] sm:$0xff]
    %v1425 = vld [vmem:[#allocation10 + $0xa8] sm:$0xff]
    %v1426 = vld [vmem:[#allocation10 + $0xb0] sm:$0xff]
    %v1427 = vld [vmem:[#allocation10 + $0xb8] sm:$0xff]
    %v1428 = vld [vmem:[#allocation10 + $0xc0] sm:$0xff]
    %v1429 = vld [vmem:[#allocation10 + $0xc8] sm:$0xff]
    %v1430 = vld [vmem:[#allocation10 + $0xd0] sm:$0xff]
    %v1431 = vld [vmem:[#allocation10 + $0xd8] sm:$0xff]
    %v1432 = vld [vmem:[#allocation10 + $0xe0] sm:$0xff]
    %v1433 = vld [vmem:[#allocation10 + $0xe8] sm:$0xff]
    %v1434 = vld [vmem:[#allocation10 + $0xf0] sm:$0xff]
    %v1435 = vld [vmem:[#allocation10 + $0xf8] sm:$0xff]
    %v1436 = vld [vmem:[#allocation10 + $0x100] sm:$0xff]
    %v1437 = vld [vmem:[#allocation10 + $0x108] sm:$0xff]
    %v1438 = vld [vmem:[#allocation10 + $0x110] sm:$0xff]
    %v1439 = vld [vmem:[#allocation10 + $0x118] sm:$0xff]
    %v1440 = vld [vmem:[#allocation10 + $0x120] sm:$0xff]
    %v1441 = vld [vmem:[#allocation10 + $0x128] sm:$0xff]
    %v1442 = vld [vmem:[#allocation10 + $0x130] sm:$0xff]
    %v1443 = vld [vmem:[#allocation10 + $0x138] sm:$0xff]
    %v1444 = vld [vmem:[#allocation10 + $0x140] sm:$0xff]
    %v1445 = vld [vmem:[#allocation10 + $0x148] sm:$0xff]
    %v1446 = vld [vmem:[#allocation10 + $0x150] sm:$0xff]
    %v1447 = vld [vmem:[#allocation10 + $0x158] sm:$0xff]
    %v1448 = vld [vmem:[#allocation10 + $0x160] sm:$0xff]
    %v1449 = vld [vmem:[#allocation10 + $0x168] sm:$0xff]
    %v1450 = vld [vmem:[#allocation10 + $0x170] sm:$0xff]
    %v1451 = vld [vmem:[#allocation10 + $0x178] sm:$0xff]
    %v1452 = vld [vmem:[%s31] sm:$0x7]
    %v1454 = vperm.slane %v1452, 0
    %v1455 = vperm.slane %v1452, 1
    %v1456 = vperm.slane %v1452, 2
    %1460 = vmatpush.msra.mxu0 %v1449
    %1461 = vmatpush.msra.mxu0 %v1446
    %1462 = vmatpush.msra.mxu0 %v1443
    %1463 = vmatpush.msra.mxu0 %v1440
    %1464 = vmatpush.msra.mxu0 %v1437
    %1465 = vmatpush.msra.mxu0 %v1434
    %1466 = vmatpush.msra.mxu0 %v1431
    %1467 = vmatpush.msra.mxu0 %v1428
    %1468 = vmatpush.msra.mxu0 %v1425
    %1469 = vmatpush.msra.mxu0 %v1422
    %1470 = vmatpush.msra.mxu0 %v1419
    %1471 = vmatpush.msra.mxu0 %v1416
    %1472 = vmatpush.msra.mxu0 %v1413
    %1473 = vmatpush.msra.mxu0 %v1410
    %1474 = vmatpush.msra.mxu0 %v1407
    %1475 = vmatpush.msra.mxu0 %v1404
    %1476 = vmatmul.f32.gmra.mxu0 %v254
    %v1477 = vpop.f32.mrf.mxu0
    %v1478 = vadd.f32 %v1454, %v1477
    %1479 = vmatmul.f32.gmra.mxu0 %v255
    %v1480 = vpop.f32.mrf.mxu0
    %v1481 = vadd.f32 %v1454, %v1480
    %1482 = vdwg.mxu0
    %1483 = vmatpush.msra.mxu0 %v1450
    %1484 = vmatpush.msra.mxu0 %v1447
    %1485 = vmatpush.msra.mxu0 %v1444
    %1486 = vmatpush.msra.mxu0 %v1441
    %1487 = vmatpush.msra.mxu0 %v1438
    %1488 = vmatpush.msra.mxu0 %v1435
    %1489 = vmatpush.msra.mxu0 %v1432
    %1490 = vmatpush.msra.mxu0 %v1429
    %1491 = vmatpush.msra.mxu0 %v1426
    %1492 = vmatpush.msra.mxu0 %v1423
    %1493 = vmatpush.msra.mxu0 %v1420
    %1494 = vmatpush.msra.mxu0 %v1417
    %1495 = vmatpush.msra.mxu0 %v1414
    %1496 = vmatpush.msra.mxu0 %v1411
    %1497 = vmatpush.msra.mxu0 %v1408
    %1498 = vmatpush.msra.mxu0 %v1405
    %1499 = vmatmul.f32.gmra.mxu0 %v254
    %v1500 = vpop.f32.mrf.mxu0
    %v1501 = vadd.f32 %v1455, %v1500
    %1502 = vmatmul.f32.gmra.mxu0 %v255
    %v1503 = vpop.f32.mrf.mxu0
    %v1504 = vadd.f32 %v1455, %v1503
    %1505 = vdwg.mxu0
    %1506 = vmatpush.msra.mxu0 %v1451
    %1507 = vmatpush.msra.mxu0 %v1448
    %1508 = vmatpush.msra.mxu0 %v1445
    %1509 = vmatpush.msra.mxu0 %v1442
    %1510 = vmatpush.msra.mxu0 %v1439
    %1511 = vmatpush.msra.mxu0 %v1436
    %1512 = vmatpush.msra.mxu0 %v1433
    %1513 = vmatpush.msra.mxu0 %v1430
    %1514 = vmatpush.msra.mxu0 %v1427
    %1515 = vmatpush.msra.mxu0 %v1424
    %1516 = vmatpush.msra.mxu0 %v1421
    %1517 = vmatpush.msra.mxu0 %v1418
    %1518 = vmatpush.msra.mxu0 %v1415
    %1519 = vmatpush.msra.mxu0 %v1412
    %1520 = vmatpush.msra.mxu0 %v1409
    %1521 = vmatpush.msra.mxu0 %v1406
    %1522 = vmatmul.f32.gmra.mxu0 %v254
    %v1523 = vpop.f32.mrf.mxu0
    %v1524 = vadd.f32 %v1456, %v1523
    %1525 = vmatmul.f32.gmra.mxu0 %v255
    %v1526 = vpop.f32.mrf.mxu0
    %v1527 = vadd.f32 %v1456, %v1526
    %1528 = vdwg.mxu0
    %v1529 = vld [vmem:[#allocation11] sm:$0xff]
    %v1530 = vld [vmem:[#allocation11 + $0x8] sm:$0xff]
    %v1531 = vld [vmem:[#allocation11 + $0x10] sm:$0xff]
    %v1532 = vld [vmem:[#allocation11 + $0x18] sm:$0xff]
    %v1533 = vld [vmem:[#allocation11 + $0x20] sm:$0xff]
    %v1534 = vld [vmem:[#allocation11 + $0x28] sm:$0xff]
    %v1535 = vld [vmem:[#allocation11 + $0x30] sm:$0xff]
    %v1536 = vld [vmem:[#allocation11 + $0x38] sm:$0xff]
    %v1537 = vld [vmem:[#allocation11 + $0x40] sm:$0xff]
    %v1538 = vld [vmem:[#allocation11 + $0x48] sm:$0xff]
    %v1539 = vld [vmem:[#allocation11 + $0x50] sm:$0xff]
    %v1540 = vld [vmem:[#allocation11 + $0x58] sm:$0xff]
    %v1541 = vld [vmem:[#allocation11 + $0x60] sm:$0xff]
    %v1542 = vld [vmem:[#allocation11 + $0x68] sm:$0xff]
    %v1543 = vld [vmem:[#allocation11 + $0x70] sm:$0xff]
    %v1544 = vld [vmem:[#allocation11 + $0x78] sm:$0xff]
    %v1545 = vld [vmem:[#allocation11 + $0x80] sm:$0xff]
    %v1546 = vld [vmem:[#allocation11 + $0x88] sm:$0xff]
    %v1547 = vld [vmem:[#allocation11 + $0x90] sm:$0xff]
    %v1548 = vld [vmem:[#allocation11 + $0x98] sm:$0xff]
    %v1549 = vld [vmem:[#allocation11 + $0xa0] sm:$0xff]
    %v1550 = vld [vmem:[#allocation11 + $0xa8] sm:$0xff]
    %v1551 = vld [vmem:[#allocation11 + $0xb0] sm:$0xff]
    %v1552 = vld [vmem:[#allocation11 + $0xb8] sm:$0xff]
    %v1553 = vld [vmem:[#allocation11 + $0xc0] sm:$0xff]
    %v1554 = vld [vmem:[#allocation11 + $0xc8] sm:$0xff]
    %v1555 = vld [vmem:[#allocation11 + $0xd0] sm:$0xff]
    %v1556 = vld [vmem:[#allocation11 + $0xd8] sm:$0xff]
    %v1557 = vld [vmem:[#allocation11 + $0xe0] sm:$0xff]
    %v1558 = vld [vmem:[#allocation11 + $0xe8] sm:$0xff]
    %v1559 = vld [vmem:[#allocation11 + $0xf0] sm:$0xff]
    %v1560 = vld [vmem:[#allocation11 + $0xf8] sm:$0xff]
    %v1561 = vld [vmem:[#allocation11 + $0x100] sm:$0xff]
    %v1562 = vld [vmem:[#allocation11 + $0x108] sm:$0xff]
    %v1563 = vld [vmem:[#allocation11 + $0x110] sm:$0xff]
    %v1564 = vld [vmem:[#allocation11 + $0x118] sm:$0xff]
    %v1565 = vld [vmem:[#allocation11 + $0x120] sm:$0xff]
    %v1566 = vld [vmem:[#allocation11 + $0x128] sm:$0xff]
    %v1567 = vld [vmem:[#allocation11 + $0x130] sm:$0xff]
    %v1568 = vld [vmem:[#allocation11 + $0x138] sm:$0xff]
    %v1569 = vld [vmem:[#allocation11 + $0x140] sm:$0xff]
    %v1570 = vld [vmem:[#allocation11 + $0x148] sm:$0xff]
    %v1571 = vld [vmem:[#allocation11 + $0x150] sm:$0xff]
    %v1572 = vld [vmem:[#allocation11 + $0x158] sm:$0xff]
    %v1573 = vld [vmem:[#allocation11 + $0x160] sm:$0xff]
    %v1574 = vld [vmem:[#allocation11 + $0x168] sm:$0xff]
    %v1575 = vld [vmem:[#allocation11 + $0x170] sm:$0xff]
    %v1576 = vld [vmem:[#allocation11 + $0x178] sm:$0xff]
    %v1577 = vld [vmem:[%s35] sm:$0x7]
    %v1579 = vperm.slane %v1577, 0
    %v1580 = vperm.slane %v1577, 1
    %v1581 = vperm.slane %v1577, 2
    %1585 = vmatpush.msra.mxu0 %v1574
    %1586 = vmatpush.msra.mxu0 %v1571
    %1587 = vmatpush.msra.mxu0 %v1568
    %1588 = vmatpush.msra.mxu0 %v1565
    %1589 = vmatpush.msra.mxu0 %v1562
    %1590 = vmatpush.msra.mxu0 %v1559
    %1591 = vmatpush.msra.mxu0 %v1556
    %1592 = vmatpush.msra.mxu0 %v1553
    %1593 = vmatpush.msra.mxu0 %v1550
    %1594 = vmatpush.msra.mxu0 %v1547
    %1595 = vmatpush.msra.mxu0 %v1544
    %1596 = vmatpush.msra.mxu0 %v1541
    %1597 = vmatpush.msra.mxu0 %v1538
    %1598 = vmatpush.msra.mxu0 %v1535
    %1599 = vmatpush.msra.mxu0 %v1532
    %1600 = vmatpush.msra.mxu0 %v1529
    %1601 = vmatmul.f32.gmra.mxu0 %v1398
    %v1602 = vpop.f32.mrf.mxu0
    %v1603 = vadd.f32 %v1579, %v1602
    %1604 = vmatmul.f32.gmra.mxu0 %v1401
    %v1605 = vpop.f32.mrf.mxu0
    %v1606 = vadd.f32 %v1579, %v1605
    %1607 = vdwg.mxu0
    %1608 = vmatpush.msra.mxu0 %v1575
    %1609 = vmatpush.msra.mxu0 %v1572
    %1610 = vmatpush.msra.mxu0 %v1569
    %1611 = vmatpush.msra.mxu0 %v1566
    %1612 = vmatpush.msra.mxu0 %v1563
    %1613 = vmatpush.msra.mxu0 %v1560
    %1614 = vmatpush.msra.mxu0 %v1557
    %1615 = vmatpush.msra.mxu0 %v1554
    %1616 = vmatpush.msra.mxu0 %v1551
    %1617 = vmatpush.msra.mxu0 %v1548
    %1618 = vmatpush.msra.mxu0 %v1545
    %1619 = vmatpush.msra.mxu0 %v1542
    %1620 = vmatpush.msra.mxu0 %v1539
    %1621 = vmatpush.msra.mxu0 %v1536
    %1622 = vmatpush.msra.mxu0 %v1533
    %1623 = vmatpush.msra.mxu0 %v1530
    %1624 = vmatmul.f32.gmra.mxu0 %v1398
    %v1625 = vpop.f32.mrf.mxu0
    %v1626 = vadd.f32 %v1580, %v1625
    %1627 = vmatmul.f32.gmra.mxu0 %v1401
    %v1628 = vpop.f32.mrf.mxu0
    %v1629 = vadd.f32 %v1580, %v1628
    %1630 = vdwg.mxu0
    %1631 = vmatpush.msra.mxu0 %v1576
    %1632 = vmatpush.msra.mxu0 %v1573
    %1633 = vmatpush.msra.mxu0 %v1570
    %1634 = vmatpush.msra.mxu0 %v1567
    %1635 = vmatpush.msra.mxu0 %v1564
    %1636 = vmatpush.msra.mxu0 %v1561
    %1637 = vmatpush.msra.mxu0 %v1558
    %1638 = vmatpush.msra.mxu0 %v1555
    %1639 = vmatpush.msra.mxu0 %v1552
    %1640 = vmatpush.msra.mxu0 %v1549
    %1641 = vmatpush.msra.mxu0 %v1546
    %1642 = vmatpush.msra.mxu0 %v1543
    %1643 = vmatpush.msra.mxu0 %v1540
    %1644 = vmatpush.msra.mxu0 %v1537
    %1645 = vmatpush.msra.mxu0 %v1534
    %1646 = vmatpush.msra.mxu0 %v1531
    %1647 = vmatmul.f32.gmra.mxu0 %v1398
    %v1648 = vpop.f32.mrf.mxu0
    %v1649 = vadd.f32 %v1581, %v1648
    %1650 = vmatmul.f32.gmra.mxu0 %v1401
    %v1651 = vpop.f32.mrf.mxu0
    %v1652 = vadd.f32 %v1581, %v1651
    %1653 = vdwg.mxu0
    %v1654 = vadd.f32 %v1478, %v1603
    %v1655 = vadd.f32 %v1481, %v1606
    %v1656 = vxor.u32 %v1654, 2147483648
    %v1657 = vxor.u32 %v1655, 2147483648
    %v1658 = vmul.f32 %v1656, 1.442695
    %v1659 = vpow.pop %v1658
    %v1660 = vmul.f32 %v1657, 1.442695
    %v1661 = vpow.pop %v1660
    %v1662 = vadd.f32 %v1659, 1.0
    %v1663 = vadd.f32 %v1661, 1.0
    %v1664 = vrcp.pop %v1662
    %v1665 = vmul.f32 %v1662, %v1664
    %v1666 = vsub.f32 1.0, %v1665
    %v1667 = vmul.f32 %v1664, %v1666
    %v1668 = vadd.f32 %v1664, %v1667
    %vm1669 = vweird.f32 %v1662
    %vm1670 = vweird.f32 %v1664
    %vm1671 = vmor %vm1669, %vm1670
    %v1672 = vsel %vm1671, %v1664, %v1668
    %v1673 = vand.u32 2147483647, %v1662
    %vm1674 = vcmp.eq.f32.partialorder %v1673, 8.507059e+37
    %v1675 = vand.u32 %v1662, 2147483648
    %v1676 = vor.u32 1.1754944e-38, %v1675
    %v1677 = vsel %vm1674, %v1676, %v1672
    %v1678 = vmul.f32 1.0, %v1677
    %v1679 = vrcp.pop %v1663
    %v1680 = vmul.f32 %v1663, %v1679
    %v1681 = vsub.f32 1.0, %v1680
    %v1682 = vmul.f32 %v1679, %v1681
    %v1683 = vadd.f32 %v1679, %v1682
    %vm1684 = vweird.f32 %v1663
    %vm1685 = vweird.f32 %v1679
    %vm1686 = vmor %vm1684, %vm1685
    %v1687 = vsel %vm1686, %v1679, %v1683
    %v1688 = vand.u32 2147483647, %v1663
    %vm1689 = vcmp.eq.f32.partialorder %v1688, 8.507059e+37
    %v1690 = vand.u32 %v1663, 2147483648
    %v1691 = vor.u32 1.1754944e-38, %v1690
    %v1692 = vsel %vm1689, %v1691, %v1687
    %v1693 = vmul.f32 1.0, %v1692
    %v1694 = vadd.f32 %v1501, %v1626
    %v1695 = vadd.f32 %v1504, %v1629
    %v1696 = vxor.u32 %v1694, 2147483648
    %v1697 = vxor.u32 %v1695, 2147483648
    %v1698 = vmul.f32 %v1696, 1.442695
    %v1699 = vpow.pop %v1698
    %v1700 = vmul.f32 %v1697, 1.442695
    %v1701 = vpow.pop %v1700
    %v1702 = vadd.f32 %v1699, 1.0
    %v1703 = vadd.f32 %v1701, 1.0
    %v1704 = vrcp.pop %v1702
    %v1705 = vmul.f32 %v1702, %v1704
    %v1706 = vsub.f32 1.0, %v1705
    %v1707 = vmul.f32 %v1704, %v1706
    %v1708 = vadd.f32 %v1704, %v1707
    %vm1709 = vweird.f32 %v1702
    %vm1710 = vweird.f32 %v1704
    %vm1711 = vmor %vm1709, %vm1710
    %v1712 = vsel %vm1711, %v1704, %v1708
    %v1713 = vand.u32 2147483647, %v1702
    %vm1714 = vcmp.eq.f32.partialorder %v1713, 8.507059e+37
    %v1715 = vand.u32 %v1702, 2147483648
    %v1716 = vor.u32 1.1754944e-38, %v1715
    %v1717 = vsel %vm1714, %v1716, %v1712
    %v1718 = vmul.f32 1.0, %v1717
    %v1719 = vrcp.pop %v1703
    %v1720 = vmul.f32 %v1703, %v1719
    %v1721 = vsub.f32 1.0, %v1720
    %v1722 = vmul.f32 %v1719, %v1721
    %v1723 = vadd.f32 %v1719, %v1722
    %vm1724 = vweird.f32 %v1703
    %vm1725 = vweird.f32 %v1719
    %vm1726 = vmor %vm1724, %vm1725
    %v1727 = vsel %vm1726, %v1719, %v1723
    %v1728 = vand.u32 2147483647, %v1703
    %vm1729 = vcmp.eq.f32.partialorder %v1728, 8.507059e+37
    %v1730 = vand.u32 %v1703, 2147483648
    %v1731 = vor.u32 1.1754944e-38, %v1730
    %v1732 = vsel %vm1729, %v1731, %v1727
    %v1733 = vmul.f32 1.0, %v1732
    %v1734 = vmul.f32 %v1678, %v1649
    %v1735 = vmul.f32 %v1693, %v1652
    %v1736 = vadd.f32 %v1524, %v1734
    %v1737 = vadd.f32 %v1527, %v1735
    %v1738 = vtanh.pop %v1736
    %v1739 = vtanh.pop %v1737
    %v1740 = vsub.f32 1.0, %v1718
    %v1741 = vsub.f32 1.0, %v1733
    %v1742 = vmul.f32 %v1740, %v1738
    %v1743 = vmul.f32 %v1741, %v1739
    %v1744 = vmul.f32 %v1718, %v1398
    %v1745 = vmul.f32 %v1733, %v1401
    %v1746 = vadd.f32 %v1742, %v1744
    %v1747 = vadd.f32 %v1743, %v1745
    %v1748 = vld [vmem:[%s63] sm:$0xff]
    %v1749 = vld [vmem:[%s59] sm:$0xff]
    %v1750 = vld [vmem:[%s59 + $0x8] sm:$0xff]
    %v1751 = vld [vmem:[%s59 + $0x10] sm:$0xff]
    %v1752 = vld [vmem:[%s59 + $0x18] sm:$0xff]
    %v1753 = vld [vmem:[%s59 + $0x20] sm:$0xff]
    %v1754 = vld [vmem:[%s59 + $0x28] sm:$0xff]
    %v1755 = vld [vmem:[%s59 + $0x30] sm:$0xff]
    %v1756 = vld [vmem:[%s59 + $0x38] sm:$0xff]
    %v1757 = vld [vmem:[%s59 + $0x40] sm:$0xff]
    %v1758 = vld [vmem:[%s59 + $0x48] sm:$0xff]
    %v1759 = vld [vmem:[%s59 + $0x50] sm:$0xff]
    %v1760 = vld [vmem:[%s59 + $0x58] sm:$0xff]
    %v1761 = vld [vmem:[%s59 + $0x60] sm:$0xff]
    %v1762 = vld [vmem:[%s59 + $0x68] sm:$0xff]
    %v1763 = vld [vmem:[%s59 + $0x70] sm:$0xff]
    %v1764 = vld [vmem:[%s59 + $0x78] sm:$0xff]
    %v1765 = vld [vmem:[%s61] sm:$0x1]
    %v1767 = vperm.slane %v1765, 0
    %1769 = vmatpush.msra.mxu0 %v1764
    %1770 = vmatpush.msra.mxu0 %v1763
    %1771 = vmatpush.msra.mxu0 %v1762
    %1772 = vmatpush.msra.mxu0 %v1761
    %1773 = vmatpush.msra.mxu0 %v1760
    %1774 = vmatpush.msra.mxu0 %v1759
    %1775 = vmatpush.msra.mxu0 %v1758
    %1776 = vmatpush.msra.mxu0 %v1757
    %1777 = vmatpush.msra.mxu0 %v1756
    %1778 = vmatpush.msra.mxu0 %v1755
    %1779 = vmatpush.msra.mxu0 %v1754
    %1780 = vmatpush.msra.mxu0 %v1753
    %1781 = vmatpush.msra.mxu0 %v1752
    %1782 = vmatpush.msra.mxu0 %v1751
    %1783 = vmatpush.msra.mxu0 %v1750
    %1784 = vmatpush.msra.mxu0 %v1749
    %1785 = vmatmul.f32.gmra.mxu0 %v1746
    %v1786 = vpop.f32.mrf.mxu0
    %v1787 = vadd.f32 %v1767, %v1786
    %1788 = vmatmul.f32.gmra.mxu0 %v1747
    %v1789 = vpop.f32.mrf.mxu0
    %v1790 = vadd.f32 %v1767, %v1789
    %1791 = vdwg.mxu0
    %v1792 = vsel %vm413, %v1787, -inf
    %1793 = vmax.xlane.f32.xlu0 %v1792
    %v1794 = vpop.xlane.xlu0 %1793
    %v1795 = vsel %vm413, %v1790, -inf
    %1796 = vmax.xlane.f32.xlu0 %v1795
    %v1797 = vpop.xlane.xlu0 %1796
    %v1798 = vsub.f32 %v1787, %v1794
    %v1799 = vsub.f32 %v1790, %v1797
    %v1800 = vmul.f32 %v1798, 1.442695
    %v1801 = vpow.pop %v1800
    %v1802 = vmul.f32 %v1799, 1.442695
    %v1803 = vpow.pop %v1802
    %v1804 = vsel %vm413, %v1801, 0.0
    %1805 = vadd.xlane.f32.xlu0 %v1804
    %v1806 = vpop.xlane.xlu0 %1805
    %v1807 = vsel %vm413, %v1803, 0.0
    %1808 = vadd.xlane.f32.xlu0 %v1807
    %v1809 = vpop.xlane.xlu0 %1808
    %v1810 = vrcp.pop %v1806
    %v1811 = vmul.f32 %v1806, %v1810
    %v1812 = vsub.f32 1.0, %v1811
    %v1813 = vmul.f32 %v1810, %v1812
    %v1814 = vadd.f32 %v1810, %v1813
    %vm1815 = vweird.f32 %v1806
    %vm1816 = vweird.f32 %v1810
    %vm1817 = vmor %vm1815, %vm1816
    %v1818 = vsel %vm1817, %v1810, %v1814
    %v1819 = vand.u32 2147483647, %v1806
    %vm1820 = vcmp.eq.f32.partialorder %v1819, 8.507059e+37
    %v1821 = vand.u32 %v1806, 2147483648
    %v1822 = vor.u32 1.1754944e-38, %v1821
    %v1823 = vsel %vm1820, %v1822, %v1818
    %v1824 = vmul.f32 %v1801, %v1823
    %v1825 = vrcp.pop %v1809
    %v1826 = vmul.f32 %v1809, %v1825
    %v1827 = vsub.f32 1.0, %v1826
    %v1828 = vmul.f32 %v1825, %v1827
    %v1829 = vadd.f32 %v1825, %v1828
    %vm1830 = vweird.f32 %v1809
    %vm1831 = vweird.f32 %v1825
    %vm1832 = vmor %vm1830, %vm1831
    %v1833 = vsel %vm1832, %v1825, %v1829
    %v1834 = vand.u32 2147483647, %v1809
    %vm1835 = vcmp.eq.f32.partialorder %v1834, 8.507059e+37
    %v1836 = vand.u32 %v1809, 2147483648
    %v1837 = vor.u32 1.1754944e-38, %v1836
    %v1838 = vsel %vm1835, %v1837, %v1833
    %v1839 = vmul.f32 %v1803, %v1838
    %v1840 = vmul.f32 %v1824, 1.442695
    %v1841 = vpow.pop %v1840
    %v1842 = vmul.f32 %v1839, 1.442695
    %v1843 = vpow.pop %v1842
    %v1844 = vsel %vm413, %v1841, 0.0
    %1845 = vadd.xlane.f32.xlu0 %v1844
    %v1846 = vpop.xlane.xlu0 %1845
    %v1847 = vsel %vm413, %v1843, 0.0
    %1848 = vadd.xlane.f32.xlu0 %v1847
    %v1849 = vpop.xlane.xlu0 %1848
    %v1850 = vlog2.pop %v1846
    %v1851 = vmul.f32 %v1850, 0.6931472
    %v1852 = vlog2.pop %v1849
    %v1853 = vmul.f32 %v1852, 0.6931472
    %v1854 = vsub.f32 %v1824, %v1851
    %v1855 = vsub.f32 %v1839, %v1853
    %v1856 = vmul.f32 %v366, %v1854
    %v1857 = vmul.f32 %v367, %v1855
    %v1858 = vsel %vm413, %v1856, 0.0
    %v1859 = vsel %vm413, %v1857, 0.0
    %v1860 = vadd.f32 %v1858, %v1859
    %1861 = vadd.xlane.f32.xlu0 %v1860
    %v1862 = vpop.xlane.xlu0 %1861
    %v1863 = vrot.slane %v1862, 4
    %v1864 = vadd.f32 %v1862, %v1863
    %v1865 = vrot.slane %v1864, 2
    %v1866 = vadd.f32 %v1864, %v1865
    %v1867 = vrot.slane %v1866, 1
    %v1868 = vadd.f32 %v1866, %v1867
    %s1869 = vtos %v1868
    %s1870 = ssub.f32 0.0, %s1869
    %v1871 = vrcp.pop 16.0
    %v1872 = vmul.f32 16.0, %v1871
    %v1873 = vsub.f32 1.0, %v1872
    %v1874 = vmul.f32 %v1871, %v1873
    %v1875 = vadd.f32 %v1871, %v1874
    %vm1876 = vweird.f32 %v1871
    %v1877 = vsel %vm1876, %v1871, %v1875
    %s1878 = vtos %v1877
    %s1879 = smul.f32 %s1870, %s1878
    %v1880 = vmul.f32 %v1824, %v366
    %v1881 = vmul.f32 %v1839, %v367
    %v1882 = vsel %vm413, %v1880, 0.0
    %1883 = vadd.xlane.f32.xlu0 %v1882
    %v1884 = vpop.xlane.xlu0 %1883
    %v1885 = vsel %vm413, %v1881, 0.0
    %1886 = vadd.xlane.f32.xlu0 %v1885
    %v1887 = vpop.xlane.xlu0 %1886
    %v1888 = vmul.f32 %v1884, %v1746
    %v1889 = vmul.f32 %v1887, %v1747
    %v1891 = vsel %vm512, %v1748, 0
    %1893 = vmatpush.msra.mxu0 0.0
    %1894 = vmatpush.msra.mxu0 0.0
    %1895 = vmatpush.msra.mxu0 0.0
    %1896 = vmatpush.msra.mxu0 0.0
    %1897 = vmatpush.msra.mxu0 0.0
    %1898 = vmatpush.msra.mxu0 0.0
    %1899 = vmatpush.msra.mxu0 0.0
    %1900 = vmatpush.msra.mxu0 0.0
    %1901 = vmatpush.msra.mxu0 0.0
    %1902 = vmatpush.msra.mxu0 0.0
    %1903 = vmatpush.msra.mxu0 0.0
    %1904 = vmatpush.msra.mxu0 0.0
    %1905 = vmatpush.msra.mxu0 0.0
    %1906 = vmatpush.msra.mxu0 0.0
    %1907 = vmatpush.msra.mxu0 %v1889
    %1908 = vmatpush.msra.mxu0 %v1888
    %1909 = vmatmul.f32.gmra.mxu0 %v1891
    %v1910 = vpop.f32.mrf.mxu0
    %v1911 = vadd.f32 0.0, %v1910
    %1912 = vdwg.mxu0
    %s1913 = sadd.f32 %s1403, %s1879
    %1914 = vmatpush.msra.mxu0 %v1449
    %1915 = vmatpush.msra.mxu0 %v1446
    %1916 = vmatpush.msra.mxu0 %v1443
    %1917 = vmatpush.msra.mxu0 %v1440
    %1918 = vmatpush.msra.mxu0 %v1437
    %1919 = vmatpush.msra.mxu0 %v1434
    %1920 = vmatpush.msra.mxu0 %v1431
    %1921 = vmatpush.msra.mxu0 %v1428
    %1922 = vmatpush.msra.mxu0 %v1425
    %1923 = vmatpush.msra.mxu0 %v1422
    %1924 = vmatpush.msra.mxu0 %v1419
    %1925 = vmatpush.msra.mxu0 %v1416
    %1926 = vmatpush.msra.mxu0 %v1413
    %1927 = vmatpush.msra.mxu0 %v1410
    %1928 = vmatpush.msra.mxu0 %v1407
    %1929 = vmatpush.msra.mxu0 %v1404
    %1930 = vmatmul.f32.gmra.mxu0 %v256
    %v1931 = vpop.f32.mrf.mxu0
    %v1932 = vadd.f32 %v1454, %v1931
    %1933 = vdwg.mxu0
    %1934 = vmatpush.msra.mxu0 %v1450
    %1935 = vmatpush.msra.mxu0 %v1447
    %1936 = vmatpush.msra.mxu0 %v1444
    %1937 = vmatpush.msra.mxu0 %v1441
    %1938 = vmatpush.msra.mxu0 %v1438
    %1939 = vmatpush.msra.mxu0 %v1435
    %1940 = vmatpush.msra.mxu0 %v1432
    %1941 = vmatpush.msra.mxu0 %v1429
    %1942 = vmatpush.msra.mxu0 %v1426
    %1943 = vmatpush.msra.mxu0 %v1423
    %1944 = vmatpush.msra.mxu0 %v1420
    %1945 = vmatpush.msra.mxu0 %v1417
    %1946 = vmatpush.msra.mxu0 %v1414
    %1947 = vmatpush.msra.mxu0 %v1411
    %1948 = vmatpush.msra.mxu0 %v1408
    %1949 = vmatpush.msra.mxu0 %v1405
    %1950 = vmatmul.f32.gmra.mxu0 %v256
    %v1951 = vpop.f32.mrf.mxu0
    %v1952 = vadd.f32 %v1455, %v1951
    %1953 = vdwg.mxu0
    %1954 = vmatpush.msra.mxu0 %v1451
    %1955 = vmatpush.msra.mxu0 %v1448
    %1956 = vmatpush.msra.mxu0 %v1445
    %1957 = vmatpush.msra.mxu0 %v1442
    %1958 = vmatpush.msra.mxu0 %v1439
    %1959 = vmatpush.msra.mxu0 %v1436
    %1960 = vmatpush.msra.mxu0 %v1433
    %1961 = vmatpush.msra.mxu0 %v1430
    %1962 = vmatpush.msra.mxu0 %v1427
    %1963 = vmatpush.msra.mxu0 %v1424
    %1964 = vmatpush.msra.mxu0 %v1421
    %1965 = vmatpush.msra.mxu0 %v1418
    %1966 = vmatpush.msra.mxu0 %v1415
    %1967 = vmatpush.msra.mxu0 %v1412
    %1968 = vmatpush.msra.mxu0 %v1409
    %1969 = vmatpush.msra.mxu0 %v1406
    %1970 = vmatmul.f32.gmra.mxu0 %v256
    %v1971 = vpop.f32.mrf.mxu0
    %v1972 = vadd.f32 %v1456, %v1971
    %1973 = vdwg.mxu0
    %1974 = vmatpush.msra.mxu0 %v1574
    %1975 = vmatpush.msra.mxu0 %v1571
    %1976 = vmatpush.msra.mxu0 %v1568
    %1977 = vmatpush.msra.mxu0 %v1565
    %1978 = vmatpush.msra.mxu0 %v1562
    %1979 = vmatpush.msra.mxu0 %v1559
    %1980 = vmatpush.msra.mxu0 %v1556
    %1981 = vmatpush.msra.mxu0 %v1553
    %1982 = vmatpush.msra.mxu0 %v1550
    %1983 = vmatpush.msra.mxu0 %v1547
    %1984 = vmatpush.msra.mxu0 %v1544
    %1985 = vmatpush.msra.mxu0 %v1541
    %1986 = vmatpush.msra.mxu0 %v1538
    %1987 = vmatpush.msra.mxu0 %v1535
    %1988 = vmatpush.msra.mxu0 %v1532
    %1989 = vmatpush.msra.mxu0 %v1529
    %1990 = vmatmul.f32.gmra.mxu0 %v1911
    %v1991 = vpop.f32.mrf.mxu0
    %v1992 = vadd.f32 %v1579, %v1991
    %1993 = vdwg.mxu0
    %1994 = vmatpush.msra.mxu0 %v1575
    %1995 = vmatpush.msra.mxu0 %v1572
    %1996 = vmatpush.msra.mxu0 %v1569
    %1997 = vmatpush.msra.mxu0 %v1566
    %1998 = vmatpush.msra.mxu0 %v1563
    %1999 = vmatpush.msra.mxu0 %v1560
    %2000 = vmatpush.msra.mxu0 %v1557
    %2001 = vmatpush.msra.mxu0 %v1554
    %2002 = vmatpush.msra.mxu0 %v1551
    %2003 = vmatpush.msra.mxu0 %v1548
    %2004 = vmatpush.msra.mxu0 %v1545
    %2005 = vmatpush.msra.mxu0 %v1542
    %2006 = vmatpush.msra.mxu0 %v1539
    %2007 = vmatpush.msra.mxu0 %v1536
    %2008 = vmatpush.msra.mxu0 %v1533
    %2009 = vmatpush.msra.mxu0 %v1530
    %2010 = vmatmul.f32.gmra.mxu0 %v1911
    %v2011 = vpop.f32.mrf.mxu0
    %v2012 = vadd.f32 %v1580, %v2011
    %2013 = vdwg.mxu0
    %2014 = vmatpush.msra.mxu0 %v1576
    %2015 = vmatpush.msra.mxu0 %v1573
    %2016 = vmatpush.msra.mxu0 %v1570
    %2017 = vmatpush.msra.mxu0 %v1567
    %2018 = vmatpush.msra.mxu0 %v1564
    %2019 = vmatpush.msra.mxu0 %v1561
    %2020 = vmatpush.msra.mxu0 %v1558
    %2021 = vmatpush.msra.mxu0 %v1555
    %2022 = vmatpush.msra.mxu0 %v1552
    %2023 = vmatpush.msra.mxu0 %v1549
    %2024 = vmatpush.msra.mxu0 %v1546
    %2025 = vmatpush.msra.mxu0 %v1543
    %2026 = vmatpush.msra.mxu0 %v1540
    %2027 = vmatpush.msra.mxu0 %v1537
    %2028 = vmatpush.msra.mxu0 %v1534
    %2029 = vmatpush.msra.mxu0 %v1531
    %2030 = vmatmul.f32.gmra.mxu0 %v1911
    %v2031 = vpop.f32.mrf.mxu0
    %v2032 = vadd.f32 %v1581, %v2031
    %2033 = vdwg.mxu0
    %v2034 = vadd.f32 %v1932, %v1992
    %v2035 = vxor.u32 %v2034, 2147483648
    %v2036 = vmul.f32 %v2035, 1.442695
    %v2037 = vpow.pop %v2036
    %v2038 = vadd.f32 %v2037, 1.0
    %v2039 = vrcp.pop %v2038
    %v2040 = vmul.f32 %v2038, %v2039
    %v2041 = vsub.f32 1.0, %v2040
    %v2042 = vmul.f32 %v2039, %v2041
    %v2043 = vadd.f32 %v2039, %v2042
    %vm2044 = vweird.f32 %v2038
    %vm2045 = vweird.f32 %v2039
    %vm2046 = vmor %vm2044, %vm2045
    %v2047 = vsel %vm2046, %v2039, %v2043
    %v2048 = vand.u32 2147483647, %v2038
    %vm2049 = vcmp.eq.f32.partialorder %v2048, 8.507059e+37
    %v2050 = vand.u32 %v2038, 2147483648
    %v2051 = vor.u32 1.1754944e-38, %v2050
    %v2052 = vsel %vm2049, %v2051, %v2047
    %v2053 = vmul.f32 1.0, %v2052
    %v2054 = vadd.f32 %v1952, %v2012
    %v2055 = vxor.u32 %v2054, 2147483648
    %v2056 = vmul.f32 %v2055, 1.442695
    %v2057 = vpow.pop %v2056
    %v2058 = vadd.f32 %v2057, 1.0
    %v2059 = vrcp.pop %v2058
    %v2060 = vmul.f32 %v2058, %v2059
    %v2061 = vsub.f32 1.0, %v2060
    %v2062 = vmul.f32 %v2059, %v2061
    %v2063 = vadd.f32 %v2059, %v2062
    %vm2064 = vweird.f32 %v2058
    %vm2065 = vweird.f32 %v2059
    %vm2066 = vmor %vm2064, %vm2065
    %v2067 = vsel %vm2066, %v2059, %v2063
    %v2068 = vand.u32 2147483647, %v2058
    %vm2069 = vcmp.eq.f32.partialorder %v2068, 8.507059e+37
    %v2070 = vand.u32 %v2058, 2147483648
    %v2071 = vor.u32 1.1754944e-38, %v2070
    %v2072 = vsel %vm2069, %v2071, %v2067
    %v2073 = vmul.f32 1.0, %v2072
    %v2074 = vmul.f32 %v2053, %v2032
    %v2075 = vadd.f32 %v1972, %v2074
    %v2076 = vtanh.pop %v2075
    %v2077 = vsub.f32 1.0, %v2073
    %v2078 = vmul.f32 %v2077, %v2076
    %v2079 = vmul.f32 %v2073, %v1911
    %v2080 = vadd.f32 %v2078, %v2079
    %v2081 = vld [vmem:[%s71] sm:$0xff]
    %v2082 = vld [vmem:[%s65] sm:$0xff]
    %v2083 = vld [vmem:[%s65 + $0x8] sm:$0xff]
    %v2084 = vld [vmem:[%s65 + $0x10] sm:$0xff]
    %v2085 = vld [vmem:[%s65 + $0x18] sm:$0xff]
    %v2086 = vld [vmem:[%s65 + $0x20] sm:$0xff]
    %v2087 = vld [vmem:[%s65 + $0x28] sm:$0xff]
    %v2088 = vld [vmem:[%s65 + $0x30] sm:$0xff]
    %v2089 = vld [vmem:[%s65 + $0x38] sm:$0xff]
    %v2090 = vld [vmem:[%s65 + $0x40] sm:$0xff]
    %v2091 = vld [vmem:[%s65 + $0x48] sm:$0xff]
    %v2092 = vld [vmem:[%s65 + $0x50] sm:$0xff]
    %v2093 = vld [vmem:[%s65 + $0x58] sm:$0xff]
    %v2094 = vld [vmem:[%s65 + $0x60] sm:$0xff]
    %v2095 = vld [vmem:[%s65 + $0x68] sm:$0xff]
    %v2096 = vld [vmem:[%s65 + $0x70] sm:$0xff]
    %v2097 = vld [vmem:[%s65 + $0x78] sm:$0xff]
    %v2098 = vld [vmem:[%s67] sm:$0x1]
    %v2100 = vperm.slane %v2098, 0
    %2102 = vmatpush.msra.mxu0 %v2097
    %2103 = vmatpush.msra.mxu0 %v2096
    %2104 = vmatpush.msra.mxu0 %v2095
    %2105 = vmatpush.msra.mxu0 %v2094
    %2106 = vmatpush.msra.mxu0 %v2093
    %2107 = vmatpush.msra.mxu0 %v2092
    %2108 = vmatpush.msra.mxu0 %v2091
    %2109 = vmatpush.msra.mxu0 %v2090
    %2110 = vmatpush.msra.mxu0 %v2089
    %2111 = vmatpush.msra.mxu0 %v2088
    %2112 = vmatpush.msra.mxu0 %v2087
    %2113 = vmatpush.msra.mxu0 %v2086
    %2114 = vmatpush.msra.mxu0 %v2085
    %2115 = vmatpush.msra.mxu0 %v2084
    %2116 = vmatpush.msra.mxu0 %v2083
    %2117 = vmatpush.msra.mxu0 %v2082
    %2118 = vmatmul.f32.gmra.mxu0 %v2080
    %v2119 = vpop.f32.mrf.mxu0
    %v2120 = vadd.f32 %v2100, %v2119
    %2121 = vdwg.mxu0
    %v2122 = vsel %vm413, %v2120, -inf
    %2123 = vmax.xlane.f32.xlu0 %v2122
    %v2124 = vpop.xlane.xlu0 %2123
    %v2125 = vsub.f32 %v2120, %v2124
    %v2126 = vmul.f32 %v2125, 1.442695
    %v2127 = vpow.pop %v2126
    %v2128 = vsel %vm413, %v2127, 0.0
    %2129 = vadd.xlane.f32.xlu0 %v2128
    %v2130 = vpop.xlane.xlu0 %2129
    %v2131 = vrcp.pop %v2130
    %v2132 = vmul.f32 %v2130, %v2131
    %v2133 = vsub.f32 1.0, %v2132
    %v2134 = vmul.f32 %v2131, %v2133
    %v2135 = vadd.f32 %v2131, %v2134
    %vm2136 = vweird.f32 %v2130
    %vm2137 = vweird.f32 %v2131
    %vm2138 = vmor %vm2136, %vm2137
    %v2139 = vsel %vm2138, %v2131, %v2135
    %v2140 = vand.u32 2147483647, %v2130
    %vm2141 = vcmp.eq.f32.partialorder %v2140, 8.507059e+37
    %v2142 = vand.u32 %v2130, 2147483648
    %v2143 = vor.u32 1.1754944e-38, %v2142
    %v2144 = vsel %vm2141, %v2143, %v2139
    %v2145 = vmul.f32 %v2127, %v2144
    %v2146 = vmul.f32 %v2145, 1.442695
    %v2147 = vpow.pop %v2146
    %v2148 = vsel %vm413, %v2147, 0.0
    %2149 = vadd.xlane.f32.xlu0 %v2148
    %v2150 = vpop.xlane.xlu0 %2149
    %v2151 = vlog2.pop %v2150
    %v2152 = vmul.f32 %v2151, 0.6931472
    %v2153 = vsub.f32 %v2145, %v2152
    %v2154 = vmul.f32 %v2081, %v2153
    %v2155 = vsel %vm413, %v2154, 0.0
    %2156 = vadd.xlane.f32.xlu0 %v2155
    %v2157 = vpop.xlane.xlu0 %2156
    %v2158 = vrot.slane %v2157, 4
    %v2159 = vadd.f32 %v2157, %v2158
    %v2160 = vrot.slane %v2159, 2
    %v2161 = vadd.f32 %v2159, %v2160
    %v2162 = vrot.slane %v2161, 1
    %v2163 = vadd.f32 %v2161, %v2162
    %s2164 = vtos %v2163
    %s2165 = ssub.f32 0.0, %s2164
    %v2166 = vrcp.pop 8.0
    %v2167 = vmul.f32 8.0, %v2166
    %v2168 = vsub.f32 1.0, %v2167
    %v2169 = vmul.f32 %v2166, %v2168
    %v2170 = vadd.f32 %v2166, %v2169
    %vm2171 = vweird.f32 %v2166
    %v2172 = vsel %vm2171, %v2166, %v2170
    %s2173 = vtos %v2172
    %s2174 = smul.f32 %s2165, %s2173
    %s2175 = sadd.f32 %s1913, %s2174
    %v2176 = vld [vmem:[%s13] sm:$0x1]
    %v2177 = vld [vmem:[#allocation2] sm:$0x1]
    %v2178 = vld [vmem:[%s17] sm:$0x1]
    %v2179 = vld [vmem:[#allocation3] sm:$0x1]
    %v2181 = vperm.slane %v2176, 0
    %v2183 = vmul.f32 %v298, %v2181
    %v2184 = vmul.f32 %v301, %v2181
    %2185 = vadd.xlane.f32.xlu0 %v2183
    %v2186 = vpop.xlane.xlu0 %2185
    %2187 = vadd.xlane.f32.xlu0 %v2184
    %v2188 = vpop.xlane.xlu0 %2187
    %v2190 = vperm.slane %v2177, 0
    %v2192 = vadd.f32 %v2186, %v2190
    %v2193 = vadd.f32 %v2188, %v2190
    %v2194 = vmax.f32 %v2192, 0.0
    %v2195 = vmax.f32 %v2193, 0.0
    %v2197 = vperm.slane %v2178, 0
    %v2199 = vmul.f32 %v1746, %v2197
    %v2200 = vmul.f32 %v1747, %v2197
    %2201 = vadd.xlane.f32.xlu0 %v2199
    %v2202 = vpop.xlane.xlu0 %2201
    %2203 = vadd.xlane.f32.xlu0 %v2200
    %v2204 = vpop.xlane.xlu0 %2203
    %v2206 = vperm.slane %v2179, 0
    %v2208 = vadd.f32 %v2202, %v2206
    %v2209 = vadd.f32 %v2204, %v2206
    %v2210 = vmax.f32 %v2208, 0.0
    %v2211 = vmax.f32 %v2209, 0.0
    %vm2212 = vcmask 7168
    %v2213 = vsel %vm2212, %v2194, -inf
    %v2214 = vsel %vm2212, %v2195, -inf
    %v2215 = vmax.f32 %v2213, %v2214
    %v2216 = vrot.slane %v2215, 4
    %v2217 = vmax.f32 %v2215, %v2216
    %v2218 = vrot.slane %v2217, 2
    %v2219 = vmax.f32 %v2217, %v2218
    %v2220 = vrot.slane %v2219, 1
    %v2221 = vmax.f32 %v2219, %v2220
    %v2222 = vsub.f32 %v2194, %v2221
    %v2223 = vsub.f32 %v2195, %v2221
    %v2224 = vmul.f32 %v2222, 1.442695
    %v2225 = vpow.pop %v2224
    %v2226 = vmul.f32 %v2223, 1.442695
    %v2227 = vpow.pop %v2226
    %v2228 = vsel %vm2212, %v2225, 0.0
    %v2229 = vsel %vm2212, %v2227, 0.0
    %v2230 = vadd.f32 %v2228, %v2229
    %v2231 = vrot.slane %v2230, 4
    %v2232 = vadd.f32 %v2230, %v2231
    %v2233 = vrot.slane %v2232, 2
    %v2234 = vadd.f32 %v2232, %v2233
    %v2235 = vrot.slane %v2234, 1
    %v2236 = vadd.f32 %v2234, %v2235
    %v2237 = vrcp.pop %v2236
    %v2238 = vmul.f32 %v2236, %v2237
    %v2239 = vsub.f32 1.0, %v2238
    %v2240 = vmul.f32 %v2237, %v2239
    %v2241 = vadd.f32 %v2237, %v2240
    %vm2242 = vweird.f32 %v2236
    %vm2243 = vweird.f32 %v2237
    %vm2244 = vmor %vm2242, %vm2243
    %v2245 = vsel %vm2244, %v2237, %v2241
    %v2246 = vand.u32 2147483647, %v2236
    %vm2247 = vcmp.eq.f32.partialorder %v2246, 8.507059e+37
    %v2248 = vand.u32 %v2236, 2147483648
    %v2249 = vor.u32 1.1754944e-38, %v2248
    %v2250 = vsel %vm2247, %v2249, %v2245
    %v2251 = vmul.f32 %v2225, %v2250
    %v2252 = vmul.f32 %v2227, %v2250
    %v2253 = vsel %vm2212, %v2210, -inf
    %v2254 = vsel %vm2212, %v2211, -inf
    %v2255 = vmax.f32 %v2253, %v2254
    %v2256 = vrot.slane %v2255, 4
    %v2257 = vmax.f32 %v2255, %v2256
    %v2258 = vrot.slane %v2257, 2
    %v2259 = vmax.f32 %v2257, %v2258
    %v2260 = vrot.slane %v2259, 1
    %v2261 = vmax.f32 %v2259, %v2260
    %v2262 = vsub.f32 %v2210, %v2261
    %v2263 = vsub.f32 %v2211, %v2261
    %v2264 = vmul.f32 %v2262, 1.442695
    %v2265 = vpow.pop %v2264
    %v2266 = vmul.f32 %v2263, 1.442695
    %v2267 = vpow.pop %v2266
    %v2268 = vsel %vm2212, %v2265, 0.0
    %v2269 = vsel %vm2212, %v2267, 0.0
    %v2270 = vadd.f32 %v2268, %v2269
    %v2271 = vrot.slane %v2270, 4
    %v2272 = vadd.f32 %v2270, %v2271
    %v2273 = vrot.slane %v2272, 2
    %v2274 = vadd.f32 %v2272, %v2273
    %v2275 = vrot.slane %v2274, 1
    %v2276 = vadd.f32 %v2274, %v2275
    %v2277 = vrcp.pop %v2276
    %v2278 = vmul.f32 %v2276, %v2277
    %v2279 = vsub.f32 1.0, %v2278
    %v2280 = vmul.f32 %v2277, %v2279
    %v2281 = vadd.f32 %v2277, %v2280
    %vm2282 = vweird.f32 %v2276
    %vm2283 = vweird.f32 %v2277
    %vm2284 = vmor %vm2282, %vm2283
    %v2285 = vsel %vm2284, %v2277, %v2281
    %v2286 = vand.u32 2147483647, %v2276
    %vm2287 = vcmp.eq.f32.partialorder %v2286, 8.507059e+37
    %v2288 = vand.u32 %v2276, 2147483648
    %v2289 = vor.u32 1.1754944e-38, %v2288
    %v2290 = vsel %vm2287, %v2289, %v2285
    %v2291 = vmul.f32 %v2265, %v2290
    %v2292 = vmul.f32 %v2267, %v2290
    %2294 = vset.pattern.permute.xlu0 0
    %2295 = vperm.xlu0 %2294, %v2251
    %v2296 = vpop.permute.xlu0 %2295
    %2299 = vset.pattern.permute.xlu0 0
    %2300 = vperm.xlu0 %2299, %v2252
    %v2301 = vpop.permute.xlu0 %2300
    %v2303 = vmul.f32 %v2296, %v298
    %v2304 = vmul.f32 %v2301, %v301
    %2306 = vset.pattern.permute.xlu0 0
    %2307 = vperm.xlu0 %2306, %v2291
    %v2308 = vpop.permute.xlu0 %2307
    %2311 = vset.pattern.permute.xlu0 0
    %2312 = vperm.xlu0 %2311, %v2292
    %v2313 = vpop.permute.xlu0 %2312
    %v2315 = vmul.f32 %v2308, %v1746
    %v2316 = vmul.f32 %v2313, %v1747
    %v2317 = vadd.f32 %v2303, %v2315
    %v2318 = vadd.f32 %v2304, %v2316
    %v2319 = vmax.f32 %v2317, 0.0
    %v2320 = vmax.f32 %v2318, 0.0
    %v2321 = vmul.f32 %v321, %v2181
    %2322 = vadd.xlane.f32.xlu0 %v2321
    %v2323 = vpop.xlane.xlu0 %2322
    %v2324 = vadd.f32 %v2323, %v2190
    %v2325 = vmax.f32 %v2324, 0.0
    %v2326 = vmul.f32 %v2080, %v2197
    %2327 = vadd.xlane.f32.xlu0 %v2326
    %v2328 = vpop.xlane.xlu0 %2327
    %v2329 = vadd.f32 %v2328, %v2206
    %v2330 = vmax.f32 %v2329, 0.0
    %v2331 = vsel %vm2212, %v2325, -inf
    %v2332 = vrot.slane %v2331, 4
    %v2333 = vmax.f32 %v2331, %v2332
    %v2334 = vrot.slane %v2333, 2
    %v2335 = vmax.f32 %v2333, %v2334
    %v2336 = vrot.slane %v2335, 1
    %v2337 = vmax.f32 %v2335, %v2336
    %v2338 = vsub.f32 %v2325, %v2337
    %v2339 = vmul.f32 %v2338, 1.442695
    %v2340 = vpow.pop %v2339
    %v2341 = vsel %vm2212, %v2340, 0.0
    %v2342 = vrot.slane %v2341, 4
    %v2343 = vadd.f32 %v2341, %v2342
    %v2344 = vrot.slane %v2343, 2
    %v2345 = vadd.f32 %v2343, %v2344
    %v2346 = vrot.slane %v2345, 1
    %v2347 = vadd.f32 %v2345, %v2346
    %v2348 = vrcp.pop %v2347
    %v2349 = vmul.f32 %v2347, %v2348
    %v2350 = vsub.f32 1.0, %v2349
    %v2351 = vmul.f32 %v2348, %v2350
    %v2352 = vadd.f32 %v2348, %v2351
    %vm2353 = vweird.f32 %v2347
    %vm2354 = vweird.f32 %v2348
    %vm2355 = vmor %vm2353, %vm2354
    %v2356 = vsel %vm2355, %v2348, %v2352
    %v2357 = vand.u32 2147483647, %v2347
    %vm2358 = vcmp.eq.f32.partialorder %v2357, 8.507059e+37
    %v2359 = vand.u32 %v2347, 2147483648
    %v2360 = vor.u32 1.1754944e-38, %v2359
    %v2361 = vsel %vm2358, %v2360, %v2356
    %v2362 = vmul.f32 %v2340, %v2361
    %v2363 = vsel %vm2212, %v2330, -inf
    %v2364 = vrot.slane %v2363, 4
    %v2365 = vmax.f32 %v2363, %v2364
    %v2366 = vrot.slane %v2365, 2
    %v2367 = vmax.f32 %v2365, %v2366
    %v2368 = vrot.slane %v2367, 1
    %v2369 = vmax.f32 %v2367, %v2368
    %v2370 = vsub.f32 %v2330, %v2369
    %v2371 = vmul.f32 %v2370, 1.442695
    %v2372 = vpow.pop %v2371
    %v2373 = vsel %vm2212, %v2372, 0.0
    %v2374 = vrot.slane %v2373, 4
    %v2375 = vadd.f32 %v2373, %v2374
    %v2376 = vrot.slane %v2375, 2
    %v2377 = vadd.f32 %v2375, %v2376
    %v2378 = vrot.slane %v2377, 1
    %v2379 = vadd.f32 %v2377, %v2378
    %v2380 = vrcp.pop %v2379
    %v2381 = vmul.f32 %v2379, %v2380
    %v2382 = vsub.f32 1.0, %v2381
    %v2383 = vmul.f32 %v2380, %v2382
    %v2384 = vadd.f32 %v2380, %v2383
    %vm2385 = vweird.f32 %v2379
    %vm2386 = vweird.f32 %v2380
    %vm2387 = vmor %vm2385, %vm2386
    %v2388 = vsel %vm2387, %v2380, %v2384
    %v2389 = vand.u32 2147483647, %v2379
    %vm2390 = vcmp.eq.f32.partialorder %v2389, 8.507059e+37
    %v2391 = vand.u32 %v2379, 2147483648
    %v2392 = vor.u32 1.1754944e-38, %v2391
    %v2393 = vsel %vm2390, %v2392, %v2388
    %v2394 = vmul.f32 %v2372, %v2393
    %2396 = vset.pattern.permute.xlu0 0
    %2397 = vperm.xlu0 %2396, %v2362
    %v2398 = vpop.permute.xlu0 %2397
    %v2400 = vmul.f32 %v2398, %v321
    %2402 = vset.pattern.permute.xlu0 0
    %2403 = vperm.xlu0 %2402, %v2394
    %v2404 = vpop.permute.xlu0 %2403
    %v2406 = vmul.f32 %v2404, %v2080
    %v2407 = vadd.f32 %v2400, %v2406
    %v2408 = vmax.f32 %v2407, 0.0
    %v2409 = vmul.f32 %v341, %v2181
    %vm2410 = vcmask 1044480
    %v2411 = vsel %vm2410, %v2409, 0.0
    %2412 = vadd.xlane.f32.xlu0 %v2411
    %v2413 = vpop.xlane.xlu0 %2412
    %v2414 = vadd.f32 %v2413, %v2190
    %v2415 = vmax.f32 %v2414, 0.0
    %v2416 = vmul.f32 %v1227, %v2197
    %v2417 = vsel %vm2410, %v2416, 0.0
    %2418 = vadd.xlane.f32.xlu0 %v2417
    %v2419 = vpop.xlane.xlu0 %2418
    %v2420 = vadd.f32 %v2419, %v2206
    %v2421 = vmax.f32 %v2420, 0.0
    %vm2422 = vcmask 4096
    %v2423 = vsel %vm2422, %v2415, -inf
    %v2424 = vrot.slane %v2423, 4
    %v2425 = vmax.f32 %v2423, %v2424
    %v2426 = vrot.slane %v2425, 2
    %v2427 = vmax.f32 %v2425, %v2426
    %v2428 = vrot.slane %v2427, 1
    %v2429 = vmax.f32 %v2427, %v2428
    %v2430 = vsub.f32 %v2415, %v2429
    %v2431 = vmul.f32 %v2430, 1.442695
    %v2432 = vpow.pop %v2431
    %v2433 = vsel %vm2422, %v2432, 0.0
    %v2434 = vrot.slane %v2433, 4
    %v2435 = vadd.f32 %v2433, %v2434
    %v2436 = vrot.slane %v2435, 2
    %v2437 = vadd.f32 %v2435, %v2436
    %v2438 = vrot.slane %v2437, 1
    %v2439 = vadd.f32 %v2437, %v2438
    %v2440 = vrcp.pop %v2439
    %v2441 = vmul.f32 %v2439, %v2440
    %v2442 = vsub.f32 1.0, %v2441
    %v2443 = vmul.f32 %v2440, %v2442
    %v2444 = vadd.f32 %v2440, %v2443
    %vm2445 = vweird.f32 %v2439
    %vm2446 = vweird.f32 %v2440
    %vm2447 = vmor %vm2445, %vm2446
    %v2448 = vsel %vm2447, %v2440, %v2444
    %v2449 = vand.u32 2147483647, %v2439
    %vm2450 = vcmp.eq.f32.partialorder %v2449, 8.507059e+37
    %v2451 = vand.u32 %v2439, 2147483648
    %v2452 = vor.u32 1.1754944e-38, %v2451
    %v2453 = vsel %vm2450, %v2452, %v2448
    %v2454 = vmul.f32 %v2432, %v2453
    %v2455 = vsel %vm2422, %v2421, -inf
    %v2456 = vrot.slane %v2455, 4
    %v2457 = vmax.f32 %v2455, %v2456
    %v2458 = vrot.slane %v2457, 2
    %v2459 = vmax.f32 %v2457, %v2458
    %v2460 = vrot.slane %v2459, 1
    %v2461 = vmax.f32 %v2459, %v2460
    %v2462 = vsub.f32 %v2421, %v2461
    %v2463 = vmul.f32 %v2462, 1.442695
    %v2464 = vpow.pop %v2463
    %v2465 = vsel %vm2422, %v2464, 0.0
    %v2466 = vrot.slane %v2465, 4
    %v2467 = vadd.f32 %v2465, %v2466
    %v2468 = vrot.slane %v2467, 2
    %v2469 = vadd.f32 %v2467, %v2468
    %v2470 = vrot.slane %v2469, 1
    %v2471 = vadd.f32 %v2469, %v2470
    %v2472 = vrcp.pop %v2471
    %v2473 = vmul.f32 %v2471, %v2472
    %v2474 = vsub.f32 1.0, %v2473
    %v2475 = vmul.f32 %v2472, %v2474
    %v2476 = vadd.f32 %v2472, %v2475
    %vm2477 = vweird.f32 %v2471
    %vm2478 = vweird.f32 %v2472
    %vm2479 = vmor %vm2477, %vm2478
    %v2480 = vsel %vm2479, %v2472, %v2476
    %v2481 = vand.u32 2147483647, %v2471
    %vm2482 = vcmp.eq.f32.partialorder %v2481, 8.507059e+37
    %v2483 = vand.u32 %v2471, 2147483648
    %v2484 = vor.u32 1.1754944e-38, %v2483
    %v2485 = vsel %vm2482, %v2484, %v2480
    %v2486 = vmul.f32 %v2464, %v2485
    %2488 = vset.pattern.permute.xlu0 0
    %2489 = vperm.xlu0 %2488, %v2454
    %v2490 = vpop.permute.xlu0 %2489
    %v2492 = vmul.f32 %v2490, %v341
    %2494 = vset.pattern.permute.xlu0 0
    %2495 = vperm.xlu0 %2494, %v2486
    %v2496 = vpop.permute.xlu0 %2495
    %v2498 = vmul.f32 %v2496, %v1227
    %v2499 = vadd.f32 %v2492, %v2498
    %v2500 = vmax.f32 %v2499, 0.0
    %v2501 = vmul.f32 %v361, %v2181
    %v2502 = vmul.f32 %v364, %v2181
    %2503 = vadd.xlane.f32.xlu0 %v2501
    %v2504 = vpop.xlane.xlu0 %2503
    %v2505 = vsel %vm1036, %v2502, 0.0
    %2506 = vadd.xlane.f32.xlu0 %v2505
    %v2507 = vpop.xlane.xlu0 %2506
    %v2508 = vadd.f32 %v2504, %v2190
    %v2509 = vadd.f32 %v2507, %v2190
    %v2510 = vmax.f32 %v2508, 0.0
    %v2511 = vmax.f32 %v2509, 0.0
    %v2512 = vmul.f32 %v885, %v2197
    %v2513 = vmul.f32 %v886, %v2197
    %2514 = vadd.xlane.f32.xlu0 %v2512
    %v2515 = vpop.xlane.xlu0 %2514
    %v2516 = vsel %vm1036, %v2513, 0.0
    %2517 = vadd.xlane.f32.xlu0 %v2516
    %v2518 = vpop.xlane.xlu0 %2517
    %v2519 = vadd.f32 %v2515, %v2206
    %v2520 = vadd.f32 %v2518, %v2206
    %v2521 = vmax.f32 %v2519, 0.0
    %v2522 = vmax.f32 %v2520, 0.0
    %v2523 = vsel %vm2212, %v2510, -inf
    %vm2524 = vcmask 3072
    %v2525 = vsel %vm2524, %v2511, -inf
    %v2526 = vmax.f32 %v2523, %v2525
    %v2527 = vrot.slane %v2526, 4
    %v2528 = vmax.f32 %v2526, %v2527
    %v2529 = vrot.slane %v2528, 2
    %v2530 = vmax.f32 %v2528, %v2529
    %v2531 = vrot.slane %v2530, 1
    %v2532 = vmax.f32 %v2530, %v2531
    %v2533 = vsub.f32 %v2510, %v2532
    %v2534 = vsub.f32 %v2511, %v2532
    %v2535 = vmul.f32 %v2533, 1.442695
    %v2536 = vpow.pop %v2535
    %v2537 = vmul.f32 %v2534, 1.442695
    %v2538 = vpow.pop %v2537
    %v2539 = vsel %vm2212, %v2536, 0.0
    %v2540 = vsel %vm2524, %v2538, 0.0
    %v2541 = vadd.f32 %v2539, %v2540
    %v2542 = vrot.slane %v2541, 4
    %v2543 = vadd.f32 %v2541, %v2542
    %v2544 = vrot.slane %v2543, 2
    %v2545 = vadd.f32 %v2543, %v2544
    %v2546 = vrot.slane %v2545, 1
    %v2547 = vadd.f32 %v2545, %v2546
    %v2548 = vrcp.pop %v2547
    %v2549 = vmul.f32 %v2547, %v2548
    %v2550 = vsub.f32 1.0, %v2549
    %v2551 = vmul.f32 %v2548, %v2550
    %v2552 = vadd.f32 %v2548, %v2551
    %vm2553 = vweird.f32 %v2547
    %vm2554 = vweird.f32 %v2548
    %vm2555 = vmor %vm2553, %vm2554
    %v2556 = vsel %vm2555, %v2548, %v2552
    %v2557 = vand.u32 2147483647, %v2547
    %vm2558 = vcmp.eq.f32.partialorder %v2557, 8.507059e+37
    %v2559 = vand.u32 %v2547, 2147483648
    %v2560 = vor.u32 1.1754944e-38, %v2559
    %v2561 = vsel %vm2558, %v2560, %v2556
    %v2562 = vmul.f32 %v2536, %v2561
    %v2563 = vmul.f32 %v2538, %v2561
    %v2564 = vsel %vm2212, %v2521, -inf
    %v2565 = vsel %vm2524, %v2522, -inf
    %v2566 = vmax.f32 %v2564, %v2565
    %v2567 = vrot.slane %v2566, 4
    %v2568 = vmax.f32 %v2566, %v2567
    %v2569 = vrot.slane %v2568, 2
    %v2570 = vmax.f32 %v2568, %v2569
    %v2571 = vrot.slane %v2570, 1
    %v2572 = vmax.f32 %v2570, %v2571
    %v2573 = vsub.f32 %v2521, %v2572
    %v2574 = vsub.f32 %v2522, %v2572
    %v2575 = vmul.f32 %v2573, 1.442695
    %v2576 = vpow.pop %v2575
    %v2577 = vmul.f32 %v2574, 1.442695
    %v2578 = vpow.pop %v2577
    %v2579 = vsel %vm2212, %v2576, 0.0
    %v2580 = vsel %vm2524, %v2578, 0.0
    %v2581 = vadd.f32 %v2579, %v2580
    %v2582 = vrot.slane %v2581, 4
    %v2583 = vadd.f32 %v2581, %v2582
    %v2584 = vrot.slane %v2583, 2
    %v2585 = vadd.f32 %v2583, %v2584
    %v2586 = vrot.slane %v2585, 1
    %v2587 = vadd.f32 %v2585, %v2586
    %v2588 = vrcp.pop %v2587
    %v2589 = vmul.f32 %v2587, %v2588
    %v2590 = vsub.f32 1.0, %v2589
    %v2591 = vmul.f32 %v2588, %v2590
    %v2592 = vadd.f32 %v2588, %v2591
    %vm2593 = vweird.f32 %v2587
    %vm2594 = vweird.f32 %v2588
    %vm2595 = vmor %vm2593, %vm2594
    %v2596 = vsel %vm2595, %v2588, %v2592
    %v2597 = vand.u32 2147483647, %v2587
    %vm2598 = vcmp.eq.f32.partialorder %v2597, 8.507059e+37
    %v2599 = vand.u32 %v2587, 2147483648
    %v2600 = vor.u32 1.1754944e-38, %v2599
    %v2601 = vsel %vm2598, %v2600, %v2596
    %v2602 = vmul.f32 %v2576, %v2601
    %v2603 = vmul.f32 %v2578, %v2601
    %2605 = vset.pattern.permute.xlu0 0
    %2606 = vperm.xlu0 %2605, %v2562
    %v2607 = vpop.permute.xlu0 %2606
    %2610 = vset.pattern.permute.xlu0 0
    %2611 = vperm.xlu0 %2610, %v2563
    %v2612 = vpop.permute.xlu0 %2611
    %v2614 = vmul.f32 %v2607, %v361
    %v2615 = vmul.f32 %v2612, %v364
    %2617 = vset.pattern.permute.xlu0 0
    %2618 = vperm.xlu0 %2617, %v2602
    %v2619 = vpop.permute.xlu0 %2618
    %2622 = vset.pattern.permute.xlu0 0
    %2623 = vperm.xlu0 %2622, %v2603
    %v2624 = vpop.permute.xlu0 %2623
    %v2626 = vmul.f32 %v2619, %v885
    %v2627 = vmul.f32 %v2624, %v886
    %v2628 = vadd.f32 %v2614, %v2626
    %v2629 = vadd.f32 %v2615, %v2627
    %v2630 = vmax.f32 %v2628, 0.0
    %v2631 = vmax.f32 %v2629, 0.0
    %v2632 = vlaneseq
    %v2633 = vshrl.u32 %v2632, 7
    %v2634 = vadd.s32 %v2633, 8
    %v2635 = vadd.s32 %v2633, 16
    %v2636 = vadd.s32 %v2633, 24
    %v2637 = vadd.s32 %v2633, 32
    %v2638 = vadd.s32 %v2633, 40
    %v2639 = vlaneseq
    %v2640 = vand.u32 %v2639, 127
    %vm2641 = vcmp.eq.s32.totalorder %v2633, %v2640
    %vm2642 = vcmp.eq.s32.totalorder %v2634, %v2640
    %vm2643 = vcmp.eq.s32.totalorder %v2635, %v2640
    %vm2644 = vcmp.eq.s32.totalorder %v2636, %v2640
    %vm2645 = vcmp.eq.s32.totalorder %v2637, %v2640
    %vm2646 = vcmp.eq.s32.totalorder %v2638, %v2640
    %v2647 = vsel %vm2641, 1, 0
    %v2648 = vsel %vm2642, 1, 0
    %v2649 = vsel %vm2643, 1, 0
    %v2650 = vsel %vm2644, 1, 0
    %v2651 = vsel %vm2645, 1, 0
    %v2652 = vsel %vm2646, 1, 0
    %v2653 = vcvt.s32.f32 %v2647
    %v2654 = vcvt.s32.f32 %v2648
    %v2655 = vcvt.s32.f32 %v2649
    %v2656 = vcvt.s32.f32 %v2650
    %v2657 = vcvt.s32.f32 %v2651
    %v2658 = vcvt.s32.f32 %v2652
    %v2659 = vadd.s32 %v2640, 16
    %vm2660 = vcmp.eq.s32.totalorder %v2633, %v2659
    %vm2661 = vcmp.eq.s32.totalorder %v2634, %v2659
    %vm2662 = vcmp.eq.s32.totalorder %v2635, %v2659
    %vm2663 = vcmp.eq.s32.totalorder %v2636, %v2659
    %vm2664 = vcmp.eq.s32.totalorder %v2637, %v2659
    %vm2665 = vcmp.eq.s32.totalorder %v2638, %v2659
    %v2666 = vsel %vm2660, 1, 0
    %v2667 = vsel %vm2661, 1, 0
    %v2668 = vsel %vm2662, 1, 0
    %v2669 = vsel %vm2663, 1, 0
    %v2670 = vsel %vm2664, 1, 0
    %v2671 = vsel %vm2665, 1, 0
    %v2672 = vcvt.s32.f32 %v2666
    %v2673 = vcvt.s32.f32 %v2667
    %v2674 = vcvt.s32.f32 %v2668
    %v2675 = vcvt.s32.f32 %v2669
    %v2676 = vcvt.s32.f32 %v2670
    %v2677 = vcvt.s32.f32 %v2671
    %vm2678 = vcmask 64512
    %v2680 = vsel %vm2678, %v2672, 0
    %v2683 = vsel %vm2678, %v2673, 0
    %v2686 = vsel %vm2678, %v2674, 0
    %v2689 = vsel %vm2678, %v2675, 0
    %v2692 = vsel %vm2678, %v2676, 0
    %v2695 = vsel %vm2678, %v2677, 0
    %2697 = vmatpush.msra.mxu0 0.0
    %2698 = vmatpush.msra.mxu0 0.0
    %2699 = vmatpush.msra.mxu0 0.0
    %2700 = vmatpush.msra.mxu0 0.0
    %2701 = vmatpush.msra.mxu0 0.0
    %2702 = vmatpush.msra.mxu0 0.0
    %2703 = vmatpush.msra.mxu0 0.0
    %2704 = vmatpush.msra.mxu0 0.0
    %2705 = vmatpush.msra.mxu0 0.0
    %2706 = vmatpush.msra.mxu0 0.0
    %2707 = vmatpush.msra.mxu0 0.0
    %2708 = vmatpush.msra.mxu0 0.0
    %2709 = vmatpush.msra.mxu0 0.0
    %2710 = vmatpush.msra.mxu0 0.0
    %2711 = vmatpush.msra.mxu0 0.0
    %2712 = vmatpush.msra.mxu0 %v2408
    %2713 = vmatmul.f32.gmra.mxu0 %v2680
    %v2714 = vpop.f32.mrf.mxu0
    %v2715 = vadd.f32 0.0, %v2714
    %2716 = vmatmul.f32.gmra.mxu0 %v2683
    %v2717 = vpop.f32.mrf.mxu0
    %v2718 = vadd.f32 0.0, %v2717
    %2719 = vmatmul.f32.gmra.mxu0 %v2686
    %v2720 = vpop.f32.mrf.mxu0
    %v2721 = vadd.f32 0.0, %v2720
    %2722 = vmatmul.f32.gmra.mxu0 %v2689
    %v2723 = vpop.f32.mrf.mxu0
    %v2724 = vadd.f32 0.0, %v2723
    %2725 = vmatmul.f32.gmra.mxu0 %v2692
    %v2726 = vpop.f32.mrf.mxu0
    %v2727 = vadd.f32 0.0, %v2726
    %2728 = vmatmul.f32.gmra.mxu0 %v2695
    %v2729 = vpop.f32.mrf.mxu0
    %v2730 = vadd.f32 0.0, %v2729
    %2731 = vdwg.mxu0
    %v2733 = vsel %vm512, %v2653, 0
    %v2736 = vsel %vm512, %v2654, 0
    %v2739 = vsel %vm512, %v2655, 0
    %v2742 = vsel %vm512, %v2656, 0
    %v2745 = vsel %vm512, %v2657, 0
    %v2748 = vsel %vm512, %v2658, 0
    %2750 = vmatpush.msra.mxu0 0.0
    %2751 = vmatpush.msra.mxu0 0.0
    %2752 = vmatpush.msra.mxu0 0.0
    %2753 = vmatpush.msra.mxu0 0.0
    %2754 = vmatpush.msra.mxu0 0.0
    %2755 = vmatpush.msra.mxu0 0.0
    %2756 = vmatpush.msra.mxu0 0.0
    %2757 = vmatpush.msra.mxu0 0.0
    %2758 = vmatpush.msra.mxu0 0.0
    %2759 = vmatpush.msra.mxu0 0.0
    %2760 = vmatpush.msra.mxu0 0.0
    %2761 = vmatpush.msra.mxu0 0.0
    %2762 = vmatpush.msra.mxu0 0.0
    %2763 = vmatpush.msra.mxu0 0.0
    %2764 = vmatpush.msra.mxu0 %v2320
    %2765 = vmatpush.msra.mxu0 %v2319
    %2766 = vmatmul.f32.gmra.mxu0 %v2733
    %v2767 = vpop.f32.mrf.mxu0
    %v2768 = vadd.f32 %v2715, %v2767
    %2769 = vmatmul.f32.gmra.mxu0 %v2736
    %v2770 = vpop.f32.mrf.mxu0
    %v2771 = vadd.f32 %v2718, %v2770
    %2772 = vmatmul.f32.gmra.mxu0 %v2739
    %v2773 = vpop.f32.mrf.mxu0
    %v2774 = vadd.f32 %v2721, %v2773
    %2775 = vmatmul.f32.gmra.mxu0 %v2742
    %v2776 = vpop.f32.mrf.mxu0
    %v2777 = vadd.f32 %v2724, %v2776
    %2778 = vmatmul.f32.gmra.mxu0 %v2745
    %v2779 = vpop.f32.mrf.mxu0
    %v2780 = vadd.f32 %v2727, %v2779
    %2781 = vmatmul.f32.gmra.mxu0 %v2748
    %v2782 = vpop.f32.mrf.mxu0
    %v2783 = vadd.f32 %v2730, %v2782
    %2784 = vdwg.mxu0
    %v2785 = vadd.s32 %v2640, 24
    %vm2786 = vcmp.eq.s32.totalorder %v2633, %v2785
    %vm2787 = vcmp.eq.s32.totalorder %v2634, %v2785
    %vm2788 = vcmp.eq.s32.totalorder %v2635, %v2785
    %vm2789 = vcmp.eq.s32.totalorder %v2636, %v2785
    %vm2790 = vcmp.eq.s32.totalorder %v2637, %v2785
    %vm2791 = vcmp.eq.s32.totalorder %v2638, %v2785
    %v2792 = vsel %vm2786, 1, 0
    %v2793 = vsel %vm2787, 1, 0
    %v2794 = vsel %vm2788, 1, 0
    %v2795 = vsel %vm2789, 1, 0
    %v2796 = vsel %vm2790, 1, 0
    %v2797 = vsel %vm2791, 1, 0
    %v2798 = vcvt.s32.f32 %v2792
    %v2799 = vcvt.s32.f32 %v2793
    %v2800 = vcvt.s32.f32 %v2794
    %v2801 = vcvt.s32.f32 %v2795
    %v2802 = vcvt.s32.f32 %v2796
    %v2803 = vcvt.s32.f32 %v2797
    %v2805 = vsel %vm413, %v2798, 0
    %v2808 = vsel %vm413, %v2799, 0
    %v2811 = vsel %vm413, %v2800, 0
    %v2814 = vsel %vm413, %v2801, 0
    %v2817 = vsel %vm413, %v2802, 0
    %v2820 = vsel %vm413, %v2803, 0
    %v2823 = vsel %vm2410, %v2500, 0
    %2825 = vmatpush.msra.mxu0 0.0
    %2826 = vmatpush.msra.mxu0 0.0
    %2827 = vmatpush.msra.mxu0 0.0
    %2828 = vmatpush.msra.mxu0 0.0
    %2829 = vmatpush.msra.mxu0 0.0
    %2830 = vmatpush.msra.mxu0 0.0
    %2831 = vmatpush.msra.mxu0 0.0
    %2832 = vmatpush.msra.mxu0 0.0
    %2833 = vmatpush.msra.mxu0 0.0
    %2834 = vmatpush.msra.mxu0 0.0
    %2835 = vmatpush.msra.mxu0 0.0
    %2836 = vmatpush.msra.mxu0 0.0
    %2837 = vmatpush.msra.mxu0 0.0
    %2838 = vmatpush.msra.mxu0 0.0
    %2839 = vmatpush.msra.mxu0 0.0
    %2840 = vmatpush.msra.mxu0 %v2823
    %2841 = vmatmul.f32.gmra.mxu0 %v2805
    %v2842 = vpop.f32.mrf.mxu0
    %v2843 = vadd.f32 0.0, %v2842
    %2844 = vmatmul.f32.gmra.mxu0 %v2808
    %v2845 = vpop.f32.mrf.mxu0
    %v2846 = vadd.f32 0.0, %v2845
    %2847 = vmatmul.f32.gmra.mxu0 %v2811
    %v2848 = vpop.f32.mrf.mxu0
    %v2849 = vadd.f32 0.0, %v2848
    %2850 = vmatmul.f32.gmra.mxu0 %v2814
    %v2851 = vpop.f32.mrf.mxu0
    %v2852 = vadd.f32 0.0, %v2851
    %2853 = vmatmul.f32.gmra.mxu0 %v2817
    %v2854 = vpop.f32.mrf.mxu0
    %v2855 = vadd.f32 0.0, %v2854
    %2856 = vmatmul.f32.gmra.mxu0 %v2820
    %v2857 = vpop.f32.mrf.mxu0
    %v2858 = vadd.f32 0.0, %v2857
    %2859 = vdwg.mxu0
    %v2860 = vadd.f32 %v2768, %v2843
    %v2861 = vadd.f32 %v2771, %v2846
    %v2862 = vadd.f32 %v2774, %v2849
    %v2863 = vadd.f32 %v2777, %v2852
    %v2864 = vadd.f32 %v2780, %v2855
    %v2865 = vadd.f32 %v2783, %v2858
    %v2866 = vadd.s32 %v2640, 29
    %vm2867 = vcmp.eq.s32.totalorder %v2633, %v2866
    %vm2868 = vcmp.eq.s32.totalorder %v2634, %v2866
    %vm2869 = vcmp.eq.s32.totalorder %v2635, %v2866
    %vm2870 = vcmp.eq.s32.totalorder %v2636, %v2866
    %vm2871 = vcmp.eq.s32.totalorder %v2637, %v2866
    %vm2872 = vcmp.eq.s32.totalorder %v2638, %v2866
    %v2873 = vsel %vm2867, 1, 0
    %v2874 = vsel %vm2868, 1, 0
    %v2875 = vsel %vm2869, 1, 0
    %v2876 = vsel %vm2870, 1, 0
    %v2877 = vsel %vm2871, 1, 0
    %v2878 = vsel %vm2872, 1, 0
    %v2879 = vcvt.s32.f32 %v2873
    %v2880 = vcvt.s32.f32 %v2874
    %v2881 = vcvt.s32.f32 %v2875
    %v2882 = vcvt.s32.f32 %v2876
    %v2883 = vcvt.s32.f32 %v2877
    %v2884 = vcvt.s32.f32 %v2878
    %v2886 = vsel %vm1032, %v2879, 0
    %v2889 = vsel %vm1032, %v2880, 0
    %v2892 = vsel %vm1032, %v2881, 0
    %v2895 = vsel %vm1032, %v2882, 0
    %v2898 = vsel %vm1032, %v2883, 0
    %v2901 = vsel %vm1032, %v2884, 0
    %v2904 = vsel %vm1036, %v2631, 0
    %2906 = vmatpush.msra.mxu0 0.0
    %2907 = vmatpush.msra.mxu0 0.0
    %2908 = vmatpush.msra.mxu0 0.0
    %2909 = vmatpush.msra.mxu0 0.0
    %2910 = vmatpush.msra.mxu0 0.0
    %2911 = vmatpush.msra.mxu0 0.0
    %2912 = vmatpush.msra.mxu0 0.0
    %2913 = vmatpush.msra.mxu0 0.0
    %2914 = vmatpush.msra.mxu0 0.0
    %2915 = vmatpush.msra.mxu0 0.0
    %2916 = vmatpush.msra.mxu0 0.0
    %2917 = vmatpush.msra.mxu0 0.0
    %2918 = vmatpush.msra.mxu0 0.0
    %2919 = vmatpush.msra.mxu0 0.0
    %2920 = vmatpush.msra.mxu0 %v2904
    %2921 = vmatpush.msra.mxu0 %v2630
    %2922 = vmatmul.f32.gmra.mxu0 %v2886
    %v2923 = vpop.f32.mrf.mxu0
    %v2924 = vadd.f32 0.0, %v2923
    %2925 = vmatmul.f32.gmra.mxu0 %v2889
    %v2926 = vpop.f32.mrf.mxu0
    %v2927 = vadd.f32 0.0, %v2926
    %2928 = vmatmul.f32.gmra.mxu0 %v2892
    %v2929 = vpop.f32.mrf.mxu0
    %v2930 = vadd.f32 0.0, %v2929
    %2931 = vmatmul.f32.gmra.mxu0 %v2895
    %v2932 = vpop.f32.mrf.mxu0
    %v2933 = vadd.f32 0.0, %v2932
    %2934 = vmatmul.f32.gmra.mxu0 %v2898
    %v2935 = vpop.f32.mrf.mxu0
    %v2936 = vadd.f32 0.0, %v2935
    %2937 = vmatmul.f32.gmra.mxu0 %v2901
    %v2938 = vpop.f32.mrf.mxu0
    %v2939 = vadd.f32 0.0, %v2938
    %2940 = vdwg.mxu0
    %v2941 = vadd.f32 %v2860, %v2924
    %v2942 = vadd.f32 %v2861, %v2927
    %v2943 = vadd.f32 %v2862, %v2930
    %v2944 = vadd.f32 %v2863, %v2933
    %v2945 = vadd.f32 %v2864, %v2936
    %v2946 = vadd.f32 %v2865, %v2939
    %2947 = vst [vmem:[#allocation13] sm:$0xff] %v2941
    %2948 = vst [vmem:[#allocation13 + $0x8] sm:$0xff] %v2942
    %2949 = vst [vmem:[#allocation13 + $0x10] sm:$0xff] %v2943
    %2950 = vst [vmem:[#allocation13 + $0x18] sm:$0xff] %v2944
    %2951 = vst [vmem:[#allocation13 + $0x20] sm:$0xff] %v2945
    %2952 = vst [vmem:[#allocation13 + $0x28] sm:$0x1] %v2946
    %v2953 = vld [vmem:[%s75] sm:$0xff]
    %v2954 = vld [vmem:[%s75 + $0x8] sm:$0x3]
    %2955 = vset.pattern.permute.xlu0 0
    %2956 = vperm.xlu0 %2955, %v2953
    %v2957 = vpop.permute.xlu0 %2956
    %2958 = vset.pattern.permute.xlu0 0
    %2959 = vperm.xlu0 %2958, %v2954
    %v2960 = vpop.permute.xlu0 %2959
    %vm2961 = vcmp.eq.s32.totalorder %v2640, %v2957
    %vm2962 = vcmp.eq.s32.totalorder %v2640, %v2960
    %v2963 = vsel %vm2961, 1, 0
    %v2964 = vsel %vm2962, 1, 0
    %v2965 = vcvt.s32.f32 %v2963
    %v2966 = vcvt.s32.f32 %v2964
    %v2967 = vld [vmem:[%s77] sm:$0xff]
    %v2968 = vld [vmem:[%s77 + $0x8] sm:$0x3]
    %2969 = vset.pattern.permute.xlu0 0
    %2970 = vperm.xlu0 %2969, %v2967
    %v2971 = vpop.permute.xlu0 %2970
    %2972 = vset.pattern.permute.xlu0 0
    %2973 = vperm.xlu0 %2972, %v2968
    %v2974 = vpop.permute.xlu0 %2973
    %vm2975 = vcmp.eq.s32.totalorder %v2640, %v2971
    %vm2976 = vcmp.eq.s32.totalorder %v2640, %v2974
    %v2977 = vsel %vm2975, 1, 0
    %v2978 = vsel %vm2976, 1, 0
    %v2979 = vcvt.s32.f32 %v2977
    %v2980 = vcvt.s32.f32 %v2978
    %v2981 = vadd.f32 %v2965, %v2979
    %v2982 = vadd.f32 %v2966, %v2980
    %vm2983 = vcmask 334848
    %v2985 = vsel %vm2983, %v2981, 0
    %v2988 = vsel %vm2983, %v2982, 0
    %vm2990 = vcmask 1040384
    %v2992 = vsel %vm2990, %v2946, 0
    %2994 = vmatpush.msra.mxu0 0.0
    %2995 = vmatpush.msra.mxu0 0.0
    %2996 = vmatpush.msra.mxu0 0.0
    %2997 = vmatpush.msra.mxu0 0.0
    %2998 = vmatpush.msra.mxu0 0.0
    %2999 = vmatpush.msra.mxu0 0.0
    %3000 = vmatpush.msra.mxu0 0.0
    %3001 = vmatpush.msra.mxu0 0.0
    %3002 = vmatpush.msra.mxu0 0.0
    %3003 = vmatpush.msra.mxu0 0.0
    %3004 = vmatpush.msra.mxu0 %v2992
    %3005 = vmatpush.msra.mxu0 %v2945
    %3006 = vmatpush.msra.mxu0 %v2944
    %3007 = vmatpush.msra.mxu0 %v2943
    %3008 = vmatpush.msra.mxu0 %v2942
    %3009 = vmatpush.msra.mxu0 %v2941
    %3010 = vmatmul.f32.gmra.mxu0 %v2985
    %v3011 = vpop.f32.mrf.mxu0
    %v3012 = vadd.f32 0.0, %v3011
    %3013 = vmatmul.f32.gmra.mxu0 %v2988
    %v3014 = vpop.f32.mrf.mxu0
    %v3015 = vadd.f32 0.0, %v3014
    %3016 = vdwg.mxu0
    %v3017 = vld [vmem:[%s83] sm:$0xff]
    %v3018 = vld [vmem:[%s83 + $0x8] sm:$0x3]
    %3019 = vset.pattern.permute.xlu0 0
    %3020 = vperm.xlu0 %3019, %v3017
    %v3021 = vpop.permute.xlu0 %3020
    %3022 = vset.pattern.permute.xlu0 0
    %3023 = vperm.xlu0 %3022, %v3018
    %v3024 = vpop.permute.xlu0 %3023
    %vm3025 = vcmp.eq.s32.totalorder %v2640, %v3021
    %vm3026 = vcmp.eq.s32.totalorder %v2640, %v3024
    %v3027 = vsel %vm3025, 1, 0
    %v3028 = vsel %vm3026, 1, 0
    %v3029 = vcvt.s32.f32 %v3027
    %v3030 = vcvt.s32.f32 %v3028
    %v3032 = vsel %vm2983, %v3029, 0
    %v3035 = vsel %vm2983, %v3030, 0
    %3037 = vmatpush.msra.mxu0 0.0
    %3038 = vmatpush.msra.mxu0 0.0
    %3039 = vmatpush.msra.mxu0 0.0
    %3040 = vmatpush.msra.mxu0 0.0
    %3041 = vmatpush.msra.mxu0 0.0
    %3042 = vmatpush.msra.mxu0 0.0
    %3043 = vmatpush.msra.mxu0 0.0
    %3044 = vmatpush.msra.mxu0 0.0
    %3045 = vmatpush.msra.mxu0 0.0
    %3046 = vmatpush.msra.mxu0 0.0
    %3047 = vmatpush.msra.mxu0 %v2992
    %3048 = vmatpush.msra.mxu0 %v2945
    %3049 = vmatpush.msra.mxu0 %v2944
    %3050 = vmatpush.msra.mxu0 %v2943
    %3051 = vmatpush.msra.mxu0 %v2942
    %3052 = vmatpush.msra.mxu0 %v2941
    %3053 = vmatmul.f32.gmra.mxu0 %v3032
    %v3054 = vpop.f32.mrf.mxu0
    %v3055 = vadd.f32 0.0, %v3054
    %3056 = vmatmul.f32.gmra.mxu0 %v3035
    %v3057 = vpop.f32.mrf.mxu0
    %v3058 = vadd.f32 0.0, %v3057
    %3059 = vdwg.mxu0
    %v3060 = vld [vmem:[%s85] sm:$0xff]
    %v3061 = vld [vmem:[%s85 + $0x8] sm:$0x3]
    %3062 = vset.pattern.permute.xlu0 0
    %3063 = vperm.xlu0 %3062, %v3060
    %v3064 = vpop.permute.xlu0 %3063
    %3065 = vset.pattern.permute.xlu0 0
    %3066 = vperm.xlu0 %3065, %v3061
    %v3067 = vpop.permute.xlu0 %3066
    %vm3068 = vcmp.eq.s32.totalorder %v2640, %v3064
    %vm3069 = vcmp.eq.s32.totalorder %v2640, %v3067
    %v3070 = vsel %vm3068, 1, 0
    %v3071 = vsel %vm3069, 1, 0
    %v3072 = vcvt.s32.f32 %v3070
    %v3073 = vcvt.s32.f32 %v3071
    %v3075 = vsel %vm2983, %v3072, 0
    %v3078 = vsel %vm2983, %v3073, 0
    %3080 = vmatpush.msra.mxu0 0.0
    %3081 = vmatpush.msra.mxu0 0.0
    %3082 = vmatpush.msra.mxu0 0.0
    %3083 = vmatpush.msra.mxu0 0.0
    %3084 = vmatpush.msra.mxu0 0.0
    %3085 = vmatpush.msra.mxu0 0.0
    %3086 = vmatpush.msra.mxu0 0.0
    %3087 = vmatpush.msra.mxu0 0.0
    %3088 = vmatpush.msra.mxu0 0.0
    %3089 = vmatpush.msra.mxu0 0.0
    %3090 = vmatpush.msra.mxu0 %v2992
    %3091 = vmatpush.msra.mxu0 %v2945
    %3092 = vmatpush.msra.mxu0 %v2944
    %3093 = vmatpush.msra.mxu0 %v2943
    %3094 = vmatpush.msra.mxu0 %v2942
    %3095 = vmatpush.msra.mxu0 %v2941
    %3096 = vmatmul.f32.gmra.mxu0 %v3075
    %v3097 = vpop.f32.mrf.mxu0
    %v3098 = vadd.f32 0.0, %v3097
    %3099 = vmatmul.f32.gmra.mxu0 %v3078
    %v3100 = vpop.f32.mrf.mxu0
    %v3101 = vadd.f32 0.0, %v3100
    %3102 = vdwg.mxu0
    %v3103 = vld [vmem:[%s73] sm:$0xff]
    %v3104 = vld [vmem:[%s73 + $0x8] sm:$0xf]
    %v3105 = vld [vmem:[%s81] sm:$0xff]
    %v3106 = vld [vmem:[%s81 + $0x8] sm:$0x3]
    %3107 = vset.pattern.permute.xlu0 0
    %3108 = vperm.xlu0 %3107, %v3105
    %v3109 = vpop.permute.xlu0 %3108
    %3110 = vset.pattern.permute.xlu0 0
    %3111 = vperm.xlu0 %3110, %v3106
    %v3112 = vpop.permute.xlu0 %3111
    %vm3113 = vcmp.eq.s32.totalorder %v2640, %v3109
    %vm3114 = vcmp.eq.s32.totalorder %v2640, %v3112
    %v3115 = vsel %vm3113, 1, 0
    %v3116 = vsel %vm3114, 1, 0
    %v3117 = vcvt.s32.f32 %v3115
    %v3118 = vcvt.s32.f32 %v3116
    %v3120 = vsel %vm1032, %v3117, 0
    %v3123 = vsel %vm1032, %v3118, 0
    %v3126 = vsel %vm1036, %v3104, 0
    %3128 = vmatpush.msra.mxu0 0.0
    %3129 = vmatpush.msra.mxu0 0.0
    %3130 = vmatpush.msra.mxu0 0.0
    %3131 = vmatpush.msra.mxu0 0.0
    %3132 = vmatpush.msra.mxu0 0.0
    %3133 = vmatpush.msra.mxu0 0.0
    %3134 = vmatpush.msra.mxu0 0.0
    %3135 = vmatpush.msra.mxu0 0.0
    %3136 = vmatpush.msra.mxu0 0.0
    %3137 = vmatpush.msra.mxu0 0.0
    %3138 = vmatpush.msra.mxu0 0.0
    %3139 = vmatpush.msra.mxu0 0.0
    %3140 = vmatpush.msra.mxu0 0.0
    %3141 = vmatpush.msra.mxu0 0.0
    %3142 = vmatpush.msra.mxu0 %v3126
    %3143 = vmatpush.msra.mxu0 %v3103
    %3144 = vmatmul.f32.gmra.mxu0 %v3120
    %v3145 = vpop.f32.mrf.mxu0
    %v3146 = vadd.f32 0.0, %v3145
    %3147 = vmatmul.f32.gmra.mxu0 %v3123
    %v3148 = vpop.f32.mrf.mxu0
    %v3149 = vadd.f32 0.0, %v3148
    %3150 = vdwg.mxu0
    %v3151 = vtanh.pop %v3012
    %v3152 = vtanh.pop %v3015
    %v3153 = vmul.f32 %v3146, %v3151
    %v3154 = vmul.f32 %v3149, %v3152
    %3155 = vadd.xlane.f32.xlu0 %v3153
    %v3156 = vpop.xlane.xlu0 %3155
    %vm3157 = vcmask 1041408
    %v3158 = vsel %vm3157, %v3154, 0.0
    %3159 = vadd.xlane.f32.xlu0 %v3158
    %v3160 = vpop.xlane.xlu0 %3159
    %v3161 = vmul.f32 %v3055, %v3098
    %v3162 = vmul.f32 %v3058, %v3101
    %3163 = vadd.xlane.f32.xlu0 %v3161
    %v3164 = vpop.xlane.xlu0 %3163
    %v3165 = vsel %vm3157, %v3162, 0.0
    %3166 = vadd.xlane.f32.xlu0 %v3165
    %v3167 = vpop.xlane.xlu0 %3166
    %v3168 = vld [vmem:[%s79] sm:$0xff]
    %v3169 = vld [vmem:[%s79 + $0x8] sm:$0x3]
    %v3170 = vmul.f32 %v3168, %v3156
    %v3171 = vmul.f32 %v3169, %v3160
    %v3172 = vmin.f32 %v3170, 0.0
    %v3173 = vmin.f32 %v3171, 0.0
    %v3174 = vand.u32 2147483647, %v3170
    %v3175 = vand.u32 2147483647, %v3171
    %v3176 = vsub.f32 0.0, %v3174
    %v3177 = vsub.f32 0.0, %v3175
    %v3178 = vmul.f32 %v3176, 1.442695
    %v3179 = vpow.pop %v3178
    %v3180 = vmul.f32 %v3177, 1.442695
    %v3181 = vpow.pop %v3180
    %v3182 = vadd.f32 %v3179, 1.0
    %v3183 = vlog2.pop %v3182
    %v3184 = vmul.f32 %v3183, 0.6931472
    %v3185 = vmul.f32 -0.5, %v3179
    %v3186 = vadd.f32 %v3185, 1.0
    %v3187 = vmul.f32 %v3186, %v3179
    %v3188 = vand.u32 2147483647, %v3179
    %vm3189 = vcmp.lt.f32.partialorder %v3188, 0.0004427343
    %v3190 = vsel %vm3189, %v3187, %v3184
    %v3191 = vadd.f32 %v3181, 1.0
    %v3192 = vlog2.pop %v3191
    %v3193 = vmul.f32 %v3192, 0.6931472
    %v3194 = vmul.f32 -0.5, %v3181
    %v3195 = vadd.f32 %v3194, 1.0
    %v3196 = vmul.f32 %v3195, %v3181
    %v3197 = vand.u32 2147483647, %v3181
    %vm3198 = vcmp.lt.f32.partialorder %v3197, 0.0004427343
    %v3199 = vsel %vm3198, %v3196, %v3193
    %v3200 = vsub.f32 %v3172, %v3190
    %v3201 = vsub.f32 %v3173, %v3199
    %v3202 = vsel %vm2212, %v3200, 0.0
    %vm3203 = vcmask 1024
    %v3204 = vsel %vm3203, %v3201, 0.0
    %v3205 = vadd.f32 %v3202, %v3204
    %3206 = vadd.xlane.f32.xlu0 %v3205
    %v3207 = vpop.xlane.xlu0 %3206
    %v3208 = vrot.slane %v3207, 4
    %v3209 = vadd.f32 %v3207, %v3208
    %v3210 = vrot.slane %v3209, 2
    %v3211 = vadd.f32 %v3209, %v3210
    %v3212 = vrot.slane %v3211, 1
    %v3213 = vadd.f32 %v3211, %v3212
    %s3214 = vtos %v3213
    %s3215 = ssub.f32 0.0, %s3214
    %v3216 = vld [vmem:[%s87] sm:$0xff]
    %v3217 = vld [vmem:[%s87 + $0x8] sm:$0x3]
    %v3218 = vmul.f32 %v3216, %v3164
    %v3219 = vmul.f32 %v3217, %v3167
    %v3220 = vmin.f32 %v3218, 0.0
    %v3221 = vmin.f32 %v3219, 0.0
    %v3222 = vand.u32 2147483647, %v3218
    %v3223 = vand.u32 2147483647, %v3219
    %v3224 = vsub.f32 0.0, %v3222
    %v3225 = vsub.f32 0.0, %v3223
    %v3226 = vmul.f32 %v3224, 1.442695
    %v3227 = vpow.pop %v3226
    %v3228 = vmul.f32 %v3225, 1.442695
    %v3229 = vpow.pop %v3228
    %v3230 = vadd.f32 %v3227, 1.0
    %v3231 = vlog2.pop %v3230
    %v3232 = vmul.f32 %v3231, 0.6931472
    %v3233 = vmul.f32 -0.5, %v3227
    %v3234 = vadd.f32 %v3233, 1.0
    %v3235 = vmul.f32 %v3234, %v3227
    %v3236 = vand.u32 2147483647, %v3227
    %vm3237 = vcmp.lt.f32.partialorder %v3236, 0.0004427343
    %v3238 = vsel %vm3237, %v3235, %v3232
    %v3239 = vadd.f32 %v3229, 1.0
    %v3240 = vlog2.pop %v3239
    %v3241 = vmul.f32 %v3240, 0.6931472
    %v3242 = vmul.f32 -0.5, %v3229
    %v3243 = vadd.f32 %v3242, 1.0
    %v3244 = vmul.f32 %v3243, %v3229
    %v3245 = vand.u32 2147483647, %v3229
    %vm3246 = vcmp.lt.f32.partialorder %v3245, 0.0004427343
    %v3247 = vsel %vm3246, %v3244, %v3241
    %v3248 = vsub.f32 %v3220, %v3238
    %v3249 = vsub.f32 %v3221, %v3247
    %v3250 = vsel %vm2212, %v3248, 0.0
    %v3251 = vsel %vm3203, %v3249, 0.0
    %v3252 = vadd.f32 %v3250, %v3251
    %3253 = vadd.xlane.f32.xlu0 %v3252
    %v3254 = vpop.xlane.xlu0 %3253
    %v3255 = vrot.slane %v3254, 4
    %v3256 = vadd.f32 %v3254, %v3255
    %v3257 = vrot.slane %v3256, 2
    %v3258 = vadd.f32 %v3256, %v3257
    %v3259 = vrot.slane %v3258, 1
    %v3260 = vadd.f32 %v3258, %v3259
    %s3261 = vtos %v3260
    %s3262 = ssub.f32 %s3215, %s3261
    %s3263 = smul.f32 %s2175, 0.5
    %s3264 = sadd.f32 %s3262, %s3263
    %s3265 = scalar_lea.smem [#allocation14], 0
    %3266 = sst [smem:[%s3265]] %s3264
    // Predicated region
    $region194: #{tpu_custom_call.1} parent=1 // pred_check
      _
    $region195: #{tpu_custom_call.1} parent=1 // pred_check_branch
      %3268 = sbr.rel (0) target = $region197
    $region196: #{tpu_custom_call.1} parent=1 // pred_region
      %3270 = vsyncadd [#allocation6], 0
      %s3271 = sshll.u32 [#allocation13], 4
      %s3272 = int_to_ptr.vmem [resolvable:$true] %s3271
      %s3273 = sshll.u32 %s89, 4
      %s3274 = int_to_ptr.hbm [resolvable:$true] %s3273
      %3279 = dma.vmem_to_hbm [thread:$0]  %s3272, 768, %s3274, [#allocation6], 128, 128, 8
    $region197: #{tpu_custom_call.1} parent=1 // pred_fallthru
      _
    // Predicated region
    $region198: #{tpu_custom_call.1} parent=1 // pred_check
      _
    $region199: #{tpu_custom_call.1} parent=1 // pred_check_branch
      %3281 = sbr.rel (0) target = $region201
    $region200: #{tpu_custom_call.1} parent=1 // pred_region
      %3283 = vsyncadd [#allocation7], 0
      %s3285 = sshll.u32 %s91, 4
      %s3286 = int_to_ptr.hbm [resolvable:$true] %s3285
      %3288 = dma.smem_to_hbm [#allocation14], 16, %s3286, [#allocation7]
    $region201: #{tpu_custom_call.1} parent=1 // pred_fallthru
      _
    // Predicated region
    $region202: #{tpu_custom_call.1} parent=1 // pred_check
      _
    $region203: #{tpu_custom_call.1} parent=1 // pred_check_branch
      %3290 = sbr.rel (0) target = $region205
    $region204: #{tpu_custom_call.1} parent=1 // pred_region
      %3292 = dma.done [#allocation6], 768
    $region205: #{tpu_custom_call.1} parent=1 // pred_fallthru
      _
    // Predicated region
    $region206: #{tpu_custom_call.1} parent=1 // pred_check
      _
    $region207: #{tpu_custom_call.1} parent=1 // pred_check_branch
      %3294 = sbr.rel (0) target = $region209
    $region208: #{tpu_custom_call.1} parent=1 // pred_region
      %3296 = dma.done [#allocation7], 16
    $region209: #{tpu_custom_call.1} parent=1 // pred_fallthru
      _
    %3297 = sfence
    %3298 = vsyncpa [#allocation5], 1
    %3299 = vsyncpa [#allocation9], 1
    %3300 = vsyncpa [#allocation12], 1
    %3301 = vsyncpa [#allocation6], 1
    %3302 = vsyncpa [#allocation7], 1

</llo_original>
